<compile_context>
chip_gen: v7x
topology: tpu7x:2x2x1
jax: 0.10.0
libtpu: 0.0.40
codegen_flags: <defaults>
</compile_context>

<pallas_src>
import jax
import jax.numpy as jnp
from jax import lax
from jax.experimental import pallas as pl
from jax.experimental.pallas import tpu as pltpu

# ----------------------------- configuration --------------------------------
ATT_LAYER_NUM = 2
EMBED_DIM     = 128            # TransformerBlock hard-codes embedding_dim=128
NUM_Q_HEADS   = 4
GROUP_SIZE    = 2
NUM_KV_HEADS  = NUM_Q_HEADS // GROUP_SIZE
HEAD_DIM      = EMBED_DIM // NUM_Q_HEADS
MAX_SEQ_LEN   = 8
MLP_HIDDEN    = 256
BEAT_DIM      = 256            # raw per-beat feature size seen by BeatTokenizer
RMS_EPS       = 1e-6

Q_WIDTH   = NUM_Q_HEADS * HEAD_DIM       # 128
KV_WIDTH  = NUM_KV_HEADS * HEAD_DIM      # 64
QKV_WIDTH = Q_WIDTH + 2 * KV_WIDTH       # 256 (lane-dense fused projection)

# MXU operand dtype: bf16 operands, f32 accumulation (preferred_element_type).
# Softmax / RMSNorm / residuals remain f32 regardless.
MXU_IN_DTYPE = jnp.bfloat16

NEG_INF = -1e30


# ----------------------------- fused kernel ----------------------------------
def _make_fused_kernel(batch: int):
    """Build the whole-model kernel for a static batch size."""
    S = MAX_SEQ_LEN
    GS_S = GROUP_SIZE * S                       # rows per (batch, kv-head) block
    n_blocks = batch * NUM_KV_HEADS             # score blocks per layer
    slab_rows = n_blocks * GS_S                 # rows of the stacked score slab

    def mm(a, b):
        # MXU matmul: bf16 operands, f32 accumulation.
        return jnp.dot(a.astype(MXU_IN_DTYPE), b.astype(MXU_IN_DTYPE),
                       preferred_element_type=jnp.float32)

    def rms(v, w):
        ms = jnp.mean(v * v, axis=-1, keepdims=True)
        return v * lax.rsqrt(ms + RMS_EPS) * w

    def kernel(x_ref, tok_w_ref, untok_w_ref, fnorm_ref,
               norm1_ref, wqkv_ref, wo_ref, norm2_ref, w1_ref, w2_ref,
               o_ref, att_ref):
        # Additive causal mask for the stacked score slab, built ONCE.
        # Every S-row chunk of the slab is one causal (S,S) pattern.
        r_in_s = lax.broadcasted_iota(jnp.int32, (slab_rows, S), 0) % S
        c_idx  = lax.broadcasted_iota(jnp.int32, (slab_rows, S), 1)
        mask_add = jnp.where(c_idx <= r_in_s, 0.0, NEG_INF).astype(jnp.float32)

        # ---- BeatTokenizer: (B*S, 256) -> (B*S, 128)
        h = mm(x_ref[...], tok_w_ref[...])                     # f32

        # ---- N x TransformerBlock (static unroll, weights indexed by layer)
        for l in range(ATT_LAYER_NUM):
            # --- attention sub-block (pre-norm, residual); dropout=0 -> identity
            n1 = rms(h, norm1_ref[l].astype(jnp.float32))
            qkv = mm(n1, wqkv_ref[l])                          # (B*S, 256) f32
            # 1/sqrt(head_dim) is already folded into the Q columns of wqkv.
            q = qkv[:, :Q_WIDTH]
            k = qkv[:, Q_WIDTH:Q_WIDTH + KV_WIDTH]
            v = qkv[:, Q_WIDTH + KV_WIDTH:]

            # scores for all (batch, kv-head) blocks, row-stacked into one slab
            score_blocks = []
            pv_inputs = []                      # (row0, kvh, vb) per block
            for b in range(batch):              # static loops (fully unrolled)
                r0, r1 = b * S, (b + 1) * S
                for kvh in range(NUM_KV_HEADS):
                    # GROUP_SIZE Q heads sharing this KV head, stacked on rows
                    qg = jnp.concatenate(
                        [q[r0:r1,
                           (kvh * GROUP_SIZE + g) * HEAD_DIM:
                           (kvh * GROUP_SIZE + g + 1) * HEAD_DIM]
                         for g in range(GROUP_SIZE)],
                        axis=0).astype(MXU_IN_DTYPE)           # (GS_S, HD)
                    kb = k[r0:r1, kvh * HEAD_DIM:(kvh + 1) * HEAD_DIM
                           ].astype(MXU_IN_DTYPE)              # (S, HD)
                    vb = v[r0:r1, kvh * HEAD_DIM:(kvh + 1) * HEAD_DIM
                           ].astype(MXU_IN_DTYPE)              # (S, HD)
                    # contract last dims directly -> no kb.T / vxpose
                    s = lax.dot_general(
                        qg, kb, (((1,), (1,)), ((), ())),
                        preferred_element_type=jnp.float32)    # (GS_S, S)
                    score_blocks.append(s)
                    pv_inputs.append((r0, kvh, vb))
            scores = jnp.concatenate(score_blocks, axis=0)     # (slab_rows, S)

            # one fused softmax over the whole slab (f32, EUP reciprocal)
            scores = scores + mask_add
            mx = jnp.max(scores, axis=-1, keepdims=True)
            p = jnp.exp(scores - mx)
            p = p * pl.reciprocal(jnp.sum(p, axis=-1, keepdims=True),
                                  approx=True)
            p = p.astype(MXU_IN_DTYPE)

            # PV per block, written straight into the lane-dense att scratch
            for blk, (r0, kvh, vb) in enumerate(pv_inputs):
                pv = jnp.dot(p[blk * GS_S:(blk + 1) * GS_S], vb,
                             preferred_element_type=jnp.float32)  # (GS_S, HD)
                for g in range(GROUP_SIZE):
                    hq = kvh * GROUP_SIZE + g
                    att_ref[r0:r0 + S,
                            hq * HEAD_DIM:(hq + 1) * HEAD_DIM] = pv[g * S:(g + 1) * S]

            # one dense (B*S,128)x(128,128) WO matmul + residual
            h = h + mm(att_ref[...], wo_ref[l])

            # --- MLP sub-block (pre-norm, SiLU, residual)
            n2 = rms(h, norm2_ref[l].astype(jnp.float32))
            hid = mm(n2, w1_ref[l])                            # (B*S, 256) f32
            hid = hid * jax.nn.sigmoid(hid)                    # SiLU (VPU/EUP)
            h = h + mm(hid, w2_ref[l])

        # ---- final RMSNorm + BeatTokenizer.backward: (B*S,128) -> (B*S,256)
        h = rms(h, fnorm_ref[...].astype(jnp.float32))
        o_ref[...] = mm(h, untok_w_ref[...]).astype(o_ref.dtype)

    return kernel


# ----------------------------- parameters ------------------------------------
def init_params(key):
    def w(k, shape, scale=0.02):
        return scale * jax.random.normal(k, shape, dtype=jnp.float32)

    keys = jax.random.split(key, 2 + ATT_LAYER_NUM * 6)
    attn_scale = 1.0 / (HEAD_DIM ** 0.5)

    wqkv, wo, w1, w2 = [], [], [], []
    for l in range(ATT_LAYER_NUM):
        k0 = 2 + l * 6
        # fold the 1/sqrt(head_dim) attention scale into the Q weight columns
        wq = w(keys[k0 + 0], (EMBED_DIM, Q_WIDTH)) * attn_scale
        wk = w(keys[k0 + 1], (EMBED_DIM, KV_WIDTH))
        wv = w(keys[k0 + 2], (EMBED_DIM, KV_WIDTH))
        wqkv.append(jnp.concatenate([wq, wk, wv], axis=1))     # (128, 256)
        wo.append(w(keys[k0 + 3], (Q_WIDTH, EMBED_DIM)))
        w1.append(w(keys[k0 + 4], (EMBED_DIM, MLP_HIDDEN)))
        w2.append(w(keys[k0 + 5], (MLP_HIDDEN, EMBED_DIM)))

    bf = MXU_IN_DTYPE
    return {
        # matmul weights stored as bf16 (halves weight DMA, bf16-native MXU)
        "tok_w":   w(keys[0], (BEAT_DIM, EMBED_DIM)).astype(bf),   # BeatTokenizer
        "untok_w": w(keys[1], (EMBED_DIM, BEAT_DIM)).astype(bf),   # .backward
        "wqkv": jnp.stack(wqkv).astype(bf),                        # (L, 128, 256)
        "wo":   jnp.stack(wo).astype(bf),                          # (L, 128, 128)
        "w1":   jnp.stack(w1).astype(bf),                          # (L, 128, 256)
        "w2":   jnp.stack(w2).astype(bf),                          # (L, 256, 128)
        # norm scales stay f32 (VPU path)
        "final_norm_w": jnp.ones((1, EMBED_DIM), jnp.float32),
        "norm1_w": jnp.ones((ATT_LAYER_NUM, 1, EMBED_DIM), jnp.float32),
        "norm2_w": jnp.ones((ATT_LAYER_NUM, 1, EMBED_DIM), jnp.float32),
    }


# ----------------------------- forward pass -----------------------------------
def transformer_forward(x, params):
    """x: (B, S, BEAT_DIM) float32  ->  (B, S, BEAT_DIM) float32."""
    B, S, F = x.shape
    assert S == MAX_SEQ_LEN and F == BEAT_DIM
    M = B * S

    kernel = _make_fused_kernel(B)
    out2d = pl.pallas_call(
        kernel,
        out_shape=jax.ShapeDtypeStruct((M, BEAT_DIM), jnp.float32),
        # No grid: whole problem (activations + ~0.6 MiB bf16 weights) is a
        # single resident VMEM tile on v5e/v6e/v7x.  For large B*S, add a
        # leading row grid axis with dimension_semantics=("parallel",).
        scratch_shapes=[pltpu.VMEM((M, EMBED_DIM), jnp.float32)],  # att buffer
    )(
        x.reshape(M, BEAT_DIM),
        params["tok_w"], params["untok_w"], params["final_norm_w"],
        params["norm1_w"], params["wqkv"], params["wo"],
        params["norm2_w"], params["w1"], params["w2"],
    )
    return out2d.reshape(B, S, BEAT_DIM)


# ----------------------------- main -------------------------------------------
if __name__ == "__main__":
    key = jax.random.PRNGKey(0)
    k_param, k_input = jax.random.split(key)
    params = init_params(k_param)

    B, S = 2, MAX_SEQ_LEN
    x = jax.random.normal(k_input, (B, S, BEAT_DIM), dtype=jnp.float32)

    fwd = jax.jit(transformer_forward)
    out = jax.block_until_ready(fwd(x, params))

    assert out.shape == (B, S, BEAT_DIM)
    assert bool(jnp.all(jnp.isfinite(out)))
    print("KERNEL_OK")
</pallas_src>

<mosaic_0001>
module attributes {stable_mosaic.version = 11 : i64} {
  func.func @kernel(%arg0: memref<16x256xf32, #tpu.memory_space<vmem>>, %arg1: memref<256x128xbf16, #tpu.memory_space<vmem>>, %arg2: memref<128x256xbf16, #tpu.memory_space<vmem>>, %arg3: memref<1x128xf32, #tpu.memory_space<vmem>>, %arg4: memref<2x1x128xf32, #tpu.memory_space<vmem>>, %arg5: memref<2x128x256xbf16, #tpu.memory_space<vmem>>, %arg6: memref<2x128x128xbf16, #tpu.memory_space<vmem>>, %arg7: memref<2x1x128xf32, #tpu.memory_space<vmem>>, %arg8: memref<2x128x256xbf16, #tpu.memory_space<vmem>>, %arg9: memref<2x256x128xbf16, #tpu.memory_space<vmem>>, %arg10: memref<16x256xf32, #tpu.memory_space<vmem>>, %arg11: memref<16x128xf32, #tpu.memory_space<vmem>>) attributes {dimension_semantics = [], scalar_prefetch = 0 : i64, scratch_operands = 1 : i64, tpu.core_type = #tpu.core_type<tc>} {
    %0 = tpu.iota {dimensions = array<i32: 0>} : vector<64x8xi32>
    %c8_i32 = arith.constant 8 : i32
    %c0_i32 = arith.constant 0 : i32
    %1 = arith.cmpi eq, %c8_i32, %c0_i32 : i32
    %c1_i32 = arith.constant 1 : i32
    %2 = arith.select %1, %c1_i32, %c8_i32 : i32
    %3 = vector.broadcast %2 : i32 to vector<64x8xi32>
    %4 = arith.remsi %0, %3 : vector<64x8xi32>
    %c0_i32_0 = arith.constant 0 : i32
    %5 = vector.broadcast %c0_i32_0 : i32 to vector<64x8xi32>
    %6 = arith.cmpi ne, %4, %5 : vector<64x8xi32>
    %c0_i32_1 = arith.constant 0 : i32
    %7 = vector.broadcast %c0_i32_1 : i32 to vector<64x8xi32>
    %8 = arith.cmpi slt, %4, %7 : vector<64x8xi32>
    %c0_i32_2 = arith.constant 0 : i32
    %9 = arith.cmpi slt, %2, %c0_i32_2 : i32
    %10 = vector.broadcast %9 : i1 to vector<64x8xi1>
    %11 = vector.broadcast %10 : vector<64x8xi1> to vector<64x8xi1>
    %12 = arith.xori %8, %11 : vector<64x8xi1>
    %13 = arith.andi %12, %6 : vector<64x8xi1>
    %14 = vector.broadcast %2 : i32 to vector<64x8xi32>
    %15 = arith.addi %4, %14 : vector<64x8xi32>
    %16 = arith.select %13, %15, %4 : vector<64x8xi1>, vector<64x8xi32>
    %17 = tpu.iota {dimensions = array<i32: 1>} : vector<64x8xi32>
    %18 = arith.cmpi sle, %17, %16 : vector<64x8xi32>
    %cst = arith.constant 0.000000e+00 : f32
    %cst_3 = arith.constant -1.000000e+30 : f32
    %19 = vector.broadcast %cst : f32 to vector<64x8xf32>
    %20 = vector.broadcast %cst_3 : f32 to vector<64x8xf32>
    %21 = arith.select %18, %19, %20 : vector<64x8xi1>, vector<64x8xf32>
    %c0 = arith.constant 0 : index
    %c0_4 = arith.constant 0 : index
    %22 = vector.load %arg0[%c0, %c0_4] : memref<16x256xf32, #tpu.memory_space<vmem>>, vector<16x256xf32>
    %c0_5 = arith.constant 0 : index
    %c0_6 = arith.constant 0 : index
    %23 = vector.load %arg1[%c0_5, %c0_6] : memref<256x128xbf16, #tpu.memory_space<vmem>>, vector<256x128xbf16>
    %24 = arith.truncf %22 : vector<16x256xf32> to vector<16x256xbf16>
    %cst_7 = arith.constant dense<0.000000e+00> : vector<16x128xf32>
    %25 = tpu.matmul %24, %23, %cst_7 {dimension_numbers = #tpu.dot_dimension_numbers<[1], [0], [0], [1], [0, 0, 1, 1], [], []>} : vector<16x256xbf16>, vector<256x128xbf16>, vector<16x128xf32> -> vector<16x128xf32>
    %c0_8 = arith.constant 0 : index
    %c0_9 = arith.constant 0 : index
    %c0_10 = arith.constant 0 : index
    %26 = vector.load %arg4[%c0_8, %c0_9, %c0_10] : memref<2x1x128xf32, #tpu.memory_space<vmem>>, vector<1x1x128xf32>
    %27 = vector.shape_cast %26 : vector<1x1x128xf32> to vector<1x128xf32>
    %28 = arith.mulf %25, %25 : vector<16x128xf32>
    %cst_11 = arith.constant dense<0.000000e+00> : vector<16xf32>
    %29 = vector.multi_reduction <add>, %28, %cst_11 [1] : vector<16x128xf32> to vector<16xf32>
    %30 = vector.shape_cast %29 : vector<16xf32> to vector<16x1xf32>
    %cst_12 = arith.constant 1.280000e+02 : f32
    %31 = vector.broadcast %cst_12 : f32 to vector<16x1xf32>
    %32 = arith.divf %30, %31 : vector<16x1xf32>
    %cst_13 = arith.constant 9.99999997E-7 : f32
    %33 = vector.broadcast %cst_13 : f32 to vector<16x1xf32>
    %34 = arith.addf %32, %33 : vector<16x1xf32>
    %35 = math.rsqrt %34 : vector<16x1xf32>
    %36 = vector.broadcast %35 : vector<16x1xf32> to vector<16x128xf32>
    %37 = arith.mulf %25, %36 : vector<16x128xf32>
    %38 = vector.broadcast %27 : vector<1x128xf32> to vector<16x128xf32>
    %39 = arith.mulf %37, %38 : vector<16x128xf32>
    %c0_14 = arith.constant 0 : index
    %c0_15 = arith.constant 0 : index
    %c0_16 = arith.constant 0 : index
    %40 = vector.load %arg5[%c0_14, %c0_15, %c0_16] : memref<2x128x256xbf16, #tpu.memory_space<vmem>>, vector<1x128x256xbf16>
    %41 = vector.shape_cast %40 : vector<1x128x256xbf16> to vector<128x256xbf16>
    %42 = arith.truncf %39 : vector<16x128xf32> to vector<16x128xbf16>
    %cst_17 = arith.constant dense<0.000000e+00> : vector<16x256xf32>
    %43 = tpu.matmul %42, %41, %cst_17 {dimension_numbers = #tpu.dot_dimension_numbers<[1], [0], [0], [1], [0, 0, 1, 1], [], []>} : vector<16x128xbf16>, vector<128x256xbf16>, vector<16x256xf32> -> vector<16x256xf32>
    %44 = vector.extract_strided_slice %43 {offsets = [0, 0], sizes = [16, 128], strides = [1, 1]} : vector<16x256xf32> to vector<16x128xf32>
    %45 = vector.extract_strided_slice %43 {offsets = [0, 128], sizes = [16, 64], strides = [1, 1]} : vector<16x256xf32> to vector<16x64xf32>
    %46 = vector.extract_strided_slice %43 {offsets = [0, 192], sizes = [16, 64], strides = [1, 1]} : vector<16x256xf32> to vector<16x64xf32>
    %47 = vector.extract_strided_slice %44 {offsets = [0, 0], sizes = [8, 32], strides = [1, 1]} : vector<16x128xf32> to vector<8x32xf32>
    %48 = vector.extract_strided_slice %44 {offsets = [0, 32], sizes = [8, 32], strides = [1, 1]} : vector<16x128xf32> to vector<8x32xf32>
    %49 = tpu.concatenate %47, %48 in 0 : vector<8x32xf32>, vector<8x32xf32> -> vector<16x32xf32>
    %50 = arith.truncf %49 : vector<16x32xf32> to vector<16x32xbf16>
    %51 = vector.extract_strided_slice %45 {offsets = [0, 0], sizes = [8, 32], strides = [1, 1]} : vector<16x64xf32> to vector<8x32xf32>
    %52 = arith.truncf %51 : vector<8x32xf32> to vector<8x32xbf16>
    %53 = vector.extract_strided_slice %46 {offsets = [0, 0], sizes = [8, 32], strides = [1, 1]} : vector<16x64xf32> to vector<8x32xf32>
    %54 = arith.truncf %53 : vector<8x32xf32> to vector<8x32xbf16>
    %cst_18 = arith.constant dense<0.000000e+00> : vector<16x8xf32>
    %55 = tpu.matmul %50, %52, %cst_18 {dimension_numbers = #tpu.dot_dimension_numbers<[1], [1], [0], [0], [0, 0, 1, 0], [], []>} : vector<16x32xbf16>, vector<8x32xbf16>, vector<16x8xf32> -> vector<16x8xf32>
    %56 = vector.extract_strided_slice %44 {offsets = [0, 64], sizes = [8, 32], strides = [1, 1]} : vector<16x128xf32> to vector<8x32xf32>
    %57 = vector.extract_strided_slice %44 {offsets = [0, 96], sizes = [8, 32], strides = [1, 1]} : vector<16x128xf32> to vector<8x32xf32>
    %58 = tpu.concatenate %56, %57 in 0 : vector<8x32xf32>, vector<8x32xf32> -> vector<16x32xf32>
    %59 = arith.truncf %58 : vector<16x32xf32> to vector<16x32xbf16>
    %60 = vector.extract_strided_slice %45 {offsets = [0, 32], sizes = [8, 32], strides = [1, 1]} : vector<16x64xf32> to vector<8x32xf32>
    %61 = arith.truncf %60 : vector<8x32xf32> to vector<8x32xbf16>
    %62 = vector.extract_strided_slice %46 {offsets = [0, 32], sizes = [8, 32], strides = [1, 1]} : vector<16x64xf32> to vector<8x32xf32>
    %63 = arith.truncf %62 : vector<8x32xf32> to vector<8x32xbf16>
    %cst_19 = arith.constant dense<0.000000e+00> : vector<16x8xf32>
    %64 = tpu.matmul %59, %61, %cst_19 {dimension_numbers = #tpu.dot_dimension_numbers<[1], [1], [0], [0], [0, 0, 1, 0], [], []>} : vector<16x32xbf16>, vector<8x32xbf16>, vector<16x8xf32> -> vector<16x8xf32>
    %65 = vector.extract_strided_slice %44 {offsets = [8, 0], sizes = [8, 32], strides = [1, 1]} : vector<16x128xf32> to vector<8x32xf32>
    %66 = vector.extract_strided_slice %44 {offsets = [8, 32], sizes = [8, 32], strides = [1, 1]} : vector<16x128xf32> to vector<8x32xf32>
    %67 = tpu.concatenate %65, %66 in 0 : vector<8x32xf32>, vector<8x32xf32> -> vector<16x32xf32>
    %68 = arith.truncf %67 : vector<16x32xf32> to vector<16x32xbf16>
    %69 = vector.extract_strided_slice %45 {offsets = [8, 0], sizes = [8, 32], strides = [1, 1]} : vector<16x64xf32> to vector<8x32xf32>
    %70 = arith.truncf %69 : vector<8x32xf32> to vector<8x32xbf16>
    %71 = vector.extract_strided_slice %46 {offsets = [8, 0], sizes = [8, 32], strides = [1, 1]} : vector<16x64xf32> to vector<8x32xf32>
    %72 = arith.truncf %71 : vector<8x32xf32> to vector<8x32xbf16>
    %cst_20 = arith.constant dense<0.000000e+00> : vector<16x8xf32>
    %73 = tpu.matmul %68, %70, %cst_20 {dimension_numbers = #tpu.dot_dimension_numbers<[1], [1], [0], [0], [0, 0, 1, 0], [], []>} : vector<16x32xbf16>, vector<8x32xbf16>, vector<16x8xf32> -> vector<16x8xf32>
    %74 = vector.extract_strided_slice %44 {offsets = [8, 64], sizes = [8, 32], strides = [1, 1]} : vector<16x128xf32> to vector<8x32xf32>
    %75 = vector.extract_strided_slice %44 {offsets = [8, 96], sizes = [8, 32], strides = [1, 1]} : vector<16x128xf32> to vector<8x32xf32>
    %76 = tpu.concatenate %74, %75 in 0 : vector<8x32xf32>, vector<8x32xf32> -> vector<16x32xf32>
    %77 = arith.truncf %76 : vector<16x32xf32> to vector<16x32xbf16>
    %78 = vector.extract_strided_slice %45 {offsets = [8, 32], sizes = [8, 32], strides = [1, 1]} : vector<16x64xf32> to vector<8x32xf32>
    %79 = arith.truncf %78 : vector<8x32xf32> to vector<8x32xbf16>
    %80 = vector.extract_strided_slice %46 {offsets = [8, 32], sizes = [8, 32], strides = [1, 1]} : vector<16x64xf32> to vector<8x32xf32>
    %81 = arith.truncf %80 : vector<8x32xf32> to vector<8x32xbf16>
    %cst_21 = arith.constant dense<0.000000e+00> : vector<16x8xf32>
    %82 = tpu.matmul %77, %79, %cst_21 {dimension_numbers = #tpu.dot_dimension_numbers<[1], [1], [0], [0], [0, 0, 1, 0], [], []>} : vector<16x32xbf16>, vector<8x32xbf16>, vector<16x8xf32> -> vector<16x8xf32>
    %83 = tpu.concatenate %55, %64, %73, %82 in 0 : vector<16x8xf32>, vector<16x8xf32>, vector<16x8xf32>, vector<16x8xf32> -> vector<64x8xf32>
    %84 = arith.addf %83, %21 : vector<64x8xf32>
    %cst_22 = arith.constant dense<0xFF800000> : vector<64xf32>
    %85 = vector.multi_reduction <maximumf>, %84, %cst_22 [1] : vector<64x8xf32> to vector<64xf32>
    %86 = vector.shape_cast %85 : vector<64xf32> to vector<64x1xf32>
    %87 = vector.broadcast %86 : vector<64x1xf32> to vector<64x8xf32>
    %88 = arith.subf %84, %87 : vector<64x8xf32>
    %89 = math.exp %88 : vector<64x8xf32>
    %cst_23 = arith.constant dense<0.000000e+00> : vector<64xf32>
    %90 = vector.multi_reduction <add>, %89, %cst_23 [1] : vector<64x8xf32> to vector<64xf32>
    %91 = vector.shape_cast %90 : vector<64xf32> to vector<64x1xf32>
    %92 = tpu.reciprocal %91 {approx = true} : vector<64x1xf32> -> vector<64x1xf32>
    %93 = vector.broadcast %92 : vector<64x1xf32> to vector<64x8xf32>
    %94 = arith.mulf %89, %93 : vector<64x8xf32>
    %95 = arith.truncf %94 : vector<64x8xf32> to vector<64x8xbf16>
    %96 = vector.extract_strided_slice %95 {offsets = [0, 0], sizes = [16, 8], strides = [1, 1]} : vector<64x8xbf16> to vector<16x8xbf16>
    %cst_24 = arith.constant dense<0.000000e+00> : vector<16x32xf32>
    %97 = tpu.matmul %96, %54, %cst_24 {dimension_numbers = #tpu.dot_dimension_numbers<[1], [0], [0], [1], [0, 0, 1, 1], [], []>} : vector<16x8xbf16>, vector<8x32xbf16>, vector<16x32xf32> -> vector<16x32xf32>
    %98 = vector.extract_strided_slice %97 {offsets = [0, 0], sizes = [8, 32], strides = [1, 1]} : vector<16x32xf32> to vector<8x32xf32>
    %c0_25 = arith.constant 0 : index
    %c0_26 = arith.constant 0 : index
    %99 = vector.load %arg11[%c0_25, %c0_26] : memref<16x128xf32, #tpu.memory_space<vmem>>, vector<8x32xf32>
    tpu.vector_store %arg11[%c0_25, %c0_26], %98 {strides = array<i32>} : memref<16x128xf32, #tpu.memory_space<vmem>>, vector<8x32xf32>,
    %100 = vector.extract_strided_slice %97 {offsets = [8, 0], sizes = [8, 32], strides = [1, 1]} : vector<16x32xf32> to vector<8x32xf32>
    %c0_27 = arith.constant 0 : index
    %c32 = arith.constant 32 : index
    %101 = vector.load %arg11[%c0_27, %c32] : memref<16x128xf32, #tpu.memory_space<vmem>>, vector<8x32xf32>
    tpu.vector_store %arg11[%c0_27, %c32], %100 {strides = array<i32>} : memref<16x128xf32, #tpu.memory_space<vmem>>, vector<8x32xf32>,
    %102 = vector.extract_strided_slice %95 {offsets = [16, 0], sizes = [16, 8], strides = [1, 1]} : vector<64x8xbf16> to vector<16x8xbf16>
    %cst_28 = arith.constant dense<0.000000e+00> : vector<16x32xf32>
    %103 = tpu.matmul %102, %63, %cst_28 {dimension_numbers = #tpu.dot_dimension_numbers<[1], [0], [0], [1], [0, 0, 1, 1], [], []>} : vector<16x8xbf16>, vector<8x32xbf16>, vector<16x32xf32> -> vector<16x32xf32>
    %104 = vector.extract_strided_slice %103 {offsets = [0, 0], sizes = [8, 32], strides = [1, 1]} : vector<16x32xf32> to vector<8x32xf32>
    %c0_29 = arith.constant 0 : index
    %c64 = arith.constant 64 : index
    %105 = vector.load %arg11[%c0_29, %c64] : memref<16x128xf32, #tpu.memory_space<vmem>>, vector<8x32xf32>
    tpu.vector_store %arg11[%c0_29, %c64], %104 {strides = array<i32>} : memref<16x128xf32, #tpu.memory_space<vmem>>, vector<8x32xf32>,
    %106 = vector.extract_strided_slice %103 {offsets = [8, 0], sizes = [8, 32], strides = [1, 1]} : vector<16x32xf32> to vector<8x32xf32>
    %c0_30 = arith.constant 0 : index
    %c96 = arith.constant 96 : index
    %107 = vector.load %arg11[%c0_30, %c96] : memref<16x128xf32, #tpu.memory_space<vmem>>, vector<8x32xf32>
    tpu.vector_store %arg11[%c0_30, %c96], %106 {strides = array<i32>} : memref<16x128xf32, #tpu.memory_space<vmem>>, vector<8x32xf32>,
    %108 = vector.extract_strided_slice %95 {offsets = [32, 0], sizes = [16, 8], strides = [1, 1]} : vector<64x8xbf16> to vector<16x8xbf16>
    %cst_31 = arith.constant dense<0.000000e+00> : vector<16x32xf32>
    %109 = tpu.matmul %108, %72, %cst_31 {dimension_numbers = #tpu.dot_dimension_numbers<[1], [0], [0], [1], [0, 0, 1, 1], [], []>} : vector<16x8xbf16>, vector<8x32xbf16>, vector<16x32xf32> -> vector<16x32xf32>
    %110 = vector.extract_strided_slice %109 {offsets = [0, 0], sizes = [8, 32], strides = [1, 1]} : vector<16x32xf32> to vector<8x32xf32>
    %c8 = arith.constant 8 : index
    %c0_32 = arith.constant 0 : index
    %111 = vector.load %arg11[%c8, %c0_32] : memref<16x128xf32, #tpu.memory_space<vmem>>, vector<8x32xf32>
    tpu.vector_store %arg11[%c8, %c0_32], %110 {strides = array<i32>} : memref<16x128xf32, #tpu.memory_space<vmem>>, vector<8x32xf32>,
    %112 = vector.extract_strided_slice %109 {offsets = [8, 0], sizes = [8, 32], strides = [1, 1]} : vector<16x32xf32> to vector<8x32xf32>
    %c8_33 = arith.constant 8 : index
    %c32_34 = arith.constant 32 : index
    %113 = vector.load %arg11[%c8_33, %c32_34] : memref<16x128xf32, #tpu.memory_space<vmem>>, vector<8x32xf32>
    tpu.vector_store %arg11[%c8_33, %c32_34], %112 {strides = array<i32>} : memref<16x128xf32, #tpu.memory_space<vmem>>, vector<8x32xf32>,
    %114 = vector.extract_strided_slice %95 {offsets = [48, 0], sizes = [16, 8], strides = [1, 1]} : vector<64x8xbf16> to vector<16x8xbf16>
    %cst_35 = arith.constant dense<0.000000e+00> : vector<16x32xf32>
    %115 = tpu.matmul %114, %81, %cst_35 {dimension_numbers = #tpu.dot_dimension_numbers<[1], [0], [0], [1], [0, 0, 1, 1], [], []>} : vector<16x8xbf16>, vector<8x32xbf16>, vector<16x32xf32> -> vector<16x32xf32>
    %116 = vector.extract_strided_slice %115 {offsets = [0, 0], sizes = [8, 32], strides = [1, 1]} : vector<16x32xf32> to vector<8x32xf32>
    %c8_36 = arith.constant 8 : index
    %c64_37 = arith.constant 64 : index
    %117 = vector.load %arg11[%c8_36, %c64_37] : memref<16x128xf32, #tpu.memory_space<vmem>>, vector<8x32xf32>
    tpu.vector_store %arg11[%c8_36, %c64_37], %116 {strides = array<i32>} : memref<16x128xf32, #tpu.memory_space<vmem>>, vector<8x32xf32>,
    %118 = vector.extract_strided_slice %115 {offsets = [8, 0], sizes = [8, 32], strides = [1, 1]} : vector<16x32xf32> to vector<8x32xf32>
    %c8_38 = arith.constant 8 : index
    %c96_39 = arith.constant 96 : index
    %119 = vector.load %arg11[%c8_38, %c96_39] : memref<16x128xf32, #tpu.memory_space<vmem>>, vector<8x32xf32>
    tpu.vector_store %arg11[%c8_38, %c96_39], %118 {strides = array<i32>} : memref<16x128xf32, #tpu.memory_space<vmem>>, vector<8x32xf32>,
    %c0_40 = arith.constant 0 : index
    %c0_41 = arith.constant 0 : index
    %120 = vector.load %arg11[%c0_40, %c0_41] : memref<16x128xf32, #tpu.memory_space<vmem>>, vector<16x128xf32>
    %c0_42 = arith.constant 0 : index
    %c0_43 = arith.constant 0 : index
    %c0_44 = arith.constant 0 : index
    %121 = vector.load %arg6[%c0_42, %c0_43, %c0_44] : memref<2x128x128xbf16, #tpu.memory_space<vmem>>, vector<1x128x128xbf16>
    %122 = vector.shape_cast %121 : vector<1x128x128xbf16> to vector<128x128xbf16>
    %123 = arith.truncf %120 : vector<16x128xf32> to vector<16x128xbf16>
    %cst_45 = arith.constant dense<0.000000e+00> : vector<16x128xf32>
    %124 = tpu.matmul %123, %122, %cst_45 {dimension_numbers = #tpu.dot_dimension_numbers<[1], [0], [0], [1], [0, 0, 1, 1], [], []>} : vector<16x128xbf16>, vector<128x128xbf16>, vector<16x128xf32> -> vector<16x128xf32>
    %125 = arith.addf %25, %124 : vector<16x128xf32>
    %c0_46 = arith.constant 0 : index
    %c0_47 = arith.constant 0 : index
    %c0_48 = arith.constant 0 : index
    %126 = vector.load %arg7[%c0_46, %c0_47, %c0_48] : memref<2x1x128xf32, #tpu.memory_space<vmem>>, vector<1x1x128xf32>
    %127 = vector.shape_cast %126 : vector<1x1x128xf32> to vector<1x128xf32>
    %128 = arith.mulf %125, %125 : vector<16x128xf32>
    %cst_49 = arith.constant dense<0.000000e+00> : vector<16xf32>
    %129 = vector.multi_reduction <add>, %128, %cst_49 [1] : vector<16x128xf32> to vector<16xf32>
    %130 = vector.shape_cast %129 : vector<16xf32> to vector<16x1xf32>
    %cst_50 = arith.constant 1.280000e+02 : f32
    %131 = vector.broadcast %cst_50 : f32 to vector<16x1xf32>
    %132 = arith.divf %130, %131 : vector<16x1xf32>
    %cst_51 = arith.constant 9.99999997E-7 : f32
    %133 = vector.broadcast %cst_51 : f32 to vector<16x1xf32>
    %134 = arith.addf %132, %133 : vector<16x1xf32>
    %135 = math.rsqrt %134 : vector<16x1xf32>
    %136 = vector.broadcast %135 : vector<16x1xf32> to vector<16x128xf32>
    %137 = arith.mulf %125, %136 : vector<16x128xf32>
    %138 = vector.broadcast %127 : vector<1x128xf32> to vector<16x128xf32>
    %139 = arith.mulf %137, %138 : vector<16x128xf32>
    %c0_52 = arith.constant 0 : index
    %c0_53 = arith.constant 0 : index
    %c0_54 = arith.constant 0 : index
    %140 = vector.load %arg8[%c0_52, %c0_53, %c0_54] : memref<2x128x256xbf16, #tpu.memory_space<vmem>>, vector<1x128x256xbf16>
    %141 = vector.shape_cast %140 : vector<1x128x256xbf16> to vector<128x256xbf16>
    %142 = arith.truncf %139 : vector<16x128xf32> to vector<16x128xbf16>
    %cst_55 = arith.constant dense<0.000000e+00> : vector<16x256xf32>
    %143 = tpu.matmul %142, %141, %cst_55 {dimension_numbers = #tpu.dot_dimension_numbers<[1], [0], [0], [1], [0, 0, 1, 1], [], []>} : vector<16x128xbf16>, vector<128x256xbf16>, vector<16x256xf32> -> vector<16x256xf32>
    %144 = arith.negf %143 : vector<16x256xf32>
    %145 = math.exp %144 : vector<16x256xf32>
    %cst_56 = arith.constant 1.000000e+00 : f32
    %146 = vector.broadcast %cst_56 : f32 to vector<16x256xf32>
    %147 = arith.addf %146, %145 : vector<16x256xf32>
    %148 = arith.divf %146, %147 : vector<16x256xf32>
    %149 = arith.mulf %143, %148 : vector<16x256xf32>
    %c0_57 = arith.constant 0 : index
    %c0_58 = arith.constant 0 : index
    %c0_59 = arith.constant 0 : index
    %150 = vector.load %arg9[%c0_57, %c0_58, %c0_59] : memref<2x256x128xbf16, #tpu.memory_space<vmem>>, vector<1x256x128xbf16>
    %151 = vector.shape_cast %150 : vector<1x256x128xbf16> to vector<256x128xbf16>
    %152 = arith.truncf %149 : vector<16x256xf32> to vector<16x256xbf16>
    %cst_60 = arith.constant dense<0.000000e+00> : vector<16x128xf32>
    %153 = tpu.matmul %152, %151, %cst_60 {dimension_numbers = #tpu.dot_dimension_numbers<[1], [0], [0], [1], [0, 0, 1, 1], [], []>} : vector<16x256xbf16>, vector<256x128xbf16>, vector<16x128xf32> -> vector<16x128xf32>
    %154 = arith.addf %125, %153 : vector<16x128xf32>
    %c1 = arith.constant 1 : index
    %c0_61 = arith.constant 0 : index
    %c0_62 = arith.constant 0 : index
    %155 = vector.load %arg4[%c1, %c0_61, %c0_62] : memref<2x1x128xf32, #tpu.memory_space<vmem>>, vector<1x1x128xf32>
    %156 = vector.shape_cast %155 : vector<1x1x128xf32> to vector<1x128xf32>
    %157 = arith.mulf %154, %154 : vector<16x128xf32>
    %cst_63 = arith.constant dense<0.000000e+00> : vector<16xf32>
    %158 = vector.multi_reduction <add>, %157, %cst_63 [1] : vector<16x128xf32> to vector<16xf32>
    %159 = vector.shape_cast %158 : vector<16xf32> to vector<16x1xf32>
    %cst_64 = arith.constant 1.280000e+02 : f32
    %160 = vector.broadcast %cst_64 : f32 to vector<16x1xf32>
    %161 = arith.divf %159, %160 : vector<16x1xf32>
    %cst_65 = arith.constant 9.99999997E-7 : f32
    %162 = vector.broadcast %cst_65 : f32 to vector<16x1xf32>
    %163 = arith.addf %161, %162 : vector<16x1xf32>
    %164 = math.rsqrt %163 : vector<16x1xf32>
    %165 = vector.broadcast %164 : vector<16x1xf32> to vector<16x128xf32>
    %166 = arith.mulf %154, %165 : vector<16x128xf32>
    %167 = vector.broadcast %156 : vector<1x128xf32> to vector<16x128xf32>
    %168 = arith.mulf %166, %167 : vector<16x128xf32>
    %c1_66 = arith.constant 1 : index
    %c0_67 = arith.constant 0 : index
    %c0_68 = arith.constant 0 : index
    %169 = vector.load %arg5[%c1_66, %c0_67, %c0_68] : memref<2x128x256xbf16, #tpu.memory_space<vmem>>, vector<1x128x256xbf16>
    %170 = vector.shape_cast %169 : vector<1x128x256xbf16> to vector<128x256xbf16>
    %171 = arith.truncf %168 : vector<16x128xf32> to vector<16x128xbf16>
    %cst_69 = arith.constant dense<0.000000e+00> : vector<16x256xf32>
    %172 = tpu.matmul %171, %170, %cst_69 {dimension_numbers = #tpu.dot_dimension_numbers<[1], [0], [0], [1], [0, 0, 1, 1], [], []>} : vector<16x128xbf16>, vector<128x256xbf16>, vector<16x256xf32> -> vector<16x256xf32>
    %173 = vector.extract_strided_slice %172 {offsets = [0, 0], sizes = [16, 128], strides = [1, 1]} : vector<16x256xf32> to vector<16x128xf32>
    %174 = vector.extract_strided_slice %172 {offsets = [0, 128], sizes = [16, 64], strides = [1, 1]} : vector<16x256xf32> to vector<16x64xf32>
    %175 = vector.extract_strided_slice %172 {offsets = [0, 192], sizes = [16, 64], strides = [1, 1]} : vector<16x256xf32> to vector<16x64xf32>
    %176 = vector.extract_strided_slice %173 {offsets = [0, 0], sizes = [8, 32], strides = [1, 1]} : vector<16x128xf32> to vector<8x32xf32>
    %177 = vector.extract_strided_slice %173 {offsets = [0, 32], sizes = [8, 32], strides = [1, 1]} : vector<16x128xf32> to vector<8x32xf32>
    %178 = tpu.concatenate %176, %177 in 0 : vector<8x32xf32>, vector<8x32xf32> -> vector<16x32xf32>
    %179 = arith.truncf %178 : vector<16x32xf32> to vector<16x32xbf16>
    %180 = vector.extract_strided_slice %174 {offsets = [0, 0], sizes = [8, 32], strides = [1, 1]} : vector<16x64xf32> to vector<8x32xf32>
    %181 = arith.truncf %180 : vector<8x32xf32> to vector<8x32xbf16>
    %182 = vector.extract_strided_slice %175 {offsets = [0, 0], sizes = [8, 32], strides = [1, 1]} : vector<16x64xf32> to vector<8x32xf32>
    %183 = arith.truncf %182 : vector<8x32xf32> to vector<8x32xbf16>
    %cst_70 = arith.constant dense<0.000000e+00> : vector<16x8xf32>
    %184 = tpu.matmul %179, %181, %cst_70 {dimension_numbers = #tpu.dot_dimension_numbers<[1], [1], [0], [0], [0, 0, 1, 0], [], []>} : vector<16x32xbf16>, vector<8x32xbf16>, vector<16x8xf32> -> vector<16x8xf32>
    %185 = vector.extract_strided_slice %173 {offsets = [0, 64], sizes = [8, 32], strides = [1, 1]} : vector<16x128xf32> to vector<8x32xf32>
    %186 = vector.extract_strided_slice %173 {offsets = [0, 96], sizes = [8, 32], strides = [1, 1]} : vector<16x128xf32> to vector<8x32xf32>
    %187 = tpu.concatenate %185, %186 in 0 : vector<8x32xf32>, vector<8x32xf32> -> vector<16x32xf32>
    %188 = arith.truncf %187 : vector<16x32xf32> to vector<16x32xbf16>
    %189 = vector.extract_strided_slice %174 {offsets = [0, 32], sizes = [8, 32], strides = [1, 1]} : vector<16x64xf32> to vector<8x32xf32>
    %190 = arith.truncf %189 : vector<8x32xf32> to vector<8x32xbf16>
    %191 = vector.extract_strided_slice %175 {offsets = [0, 32], sizes = [8, 32], strides = [1, 1]} : vector<16x64xf32> to vector<8x32xf32>
    %192 = arith.truncf %191 : vector<8x32xf32> to vector<8x32xbf16>
    %cst_71 = arith.constant dense<0.000000e+00> : vector<16x8xf32>
    %193 = tpu.matmul %188, %190, %cst_71 {dimension_numbers = #tpu.dot_dimension_numbers<[1], [1], [0], [0], [0, 0, 1, 0], [], []>} : vector<16x32xbf16>, vector<8x32xbf16>, vector<16x8xf32> -> vector<16x8xf32>
    %194 = vector.extract_strided_slice %173 {offsets = [8, 0], sizes = [8, 32], strides = [1, 1]} : vector<16x128xf32> to vector<8x32xf32>
    %195 = vector.extract_strided_slice %173 {offsets = [8, 32], sizes = [8, 32], strides = [1, 1]} : vector<16x128xf32> to vector<8x32xf32>
    %196 = tpu.concatenate %194, %195 in 0 : vector<8x32xf32>, vector<8x32xf32> -> vector<16x32xf32>
    %197 = arith.truncf %196 : vector<16x32xf32> to vector<16x32xbf16>
    %198 = vector.extract_strided_slice %174 {offsets = [8, 0], sizes = [8, 32], strides = [1, 1]} : vector<16x64xf32> to vector<8x32xf32>
    %199 = arith.truncf %198 : vector<8x32xf32> to vector<8x32xbf16>
    %200 = vector.extract_strided_slice %175 {offsets = [8, 0], sizes = [8, 32], strides = [1, 1]} : vector<16x64xf32> to vector<8x32xf32>
    %201 = arith.truncf %200 : vector<8x32xf32> to vector<8x32xbf16>
    %cst_72 = arith.constant dense<0.000000e+00> : vector<16x8xf32>
    %202 = tpu.matmul %197, %199, %cst_72 {dimension_numbers = #tpu.dot_dimension_numbers<[1], [1], [0], [0], [0, 0, 1, 0], [], []>} : vector<16x32xbf16>, vector<8x32xbf16>, vector<16x8xf32> -> vector<16x8xf32>
    %203 = vector.extract_strided_slice %173 {offsets = [8, 64], sizes = [8, 32], strides = [1, 1]} : vector<16x128xf32> to vector<8x32xf32>
    %204 = vector.extract_strided_slice %173 {offsets = [8, 96], sizes = [8, 32], strides = [1, 1]} : vector<16x128xf32> to vector<8x32xf32>
    %205 = tpu.concatenate %203, %204 in 0 : vector<8x32xf32>, vector<8x32xf32> -> vector<16x32xf32>
    %206 = arith.truncf %205 : vector<16x32xf32> to vector<16x32xbf16>
    %207 = vector.extract_strided_slice %174 {offsets = [8, 32], sizes = [8, 32], strides = [1, 1]} : vector<16x64xf32> to vector<8x32xf32>
    %208 = arith.truncf %207 : vector<8x32xf32> to vector<8x32xbf16>
    %209 = vector.extract_strided_slice %175 {offsets = [8, 32], sizes = [8, 32], strides = [1, 1]} : vector<16x64xf32> to vector<8x32xf32>
    %210 = arith.truncf %209 : vector<8x32xf32> to vector<8x32xbf16>
    %cst_73 = arith.constant dense<0.000000e+00> : vector<16x8xf32>
    %211 = tpu.matmul %206, %208, %cst_73 {dimension_numbers = #tpu.dot_dimension_numbers<[1], [1], [0], [0], [0, 0, 1, 0], [], []>} : vector<16x32xbf16>, vector<8x32xbf16>, vector<16x8xf32> -> vector<16x8xf32>
    %212 = tpu.concatenate %184, %193, %202, %211 in 0 : vector<16x8xf32>, vector<16x8xf32>, vector<16x8xf32>, vector<16x8xf32> -> vector<64x8xf32>
    %213 = arith.addf %212, %21 : vector<64x8xf32>
    %cst_74 = arith.constant dense<0xFF800000> : vector<64xf32>
    %214 = vector.multi_reduction <maximumf>, %213, %cst_74 [1] : vector<64x8xf32> to vector<64xf32>
    %215 = vector.shape_cast %214 : vector<64xf32> to vector<64x1xf32>
    %216 = vector.broadcast %215 : vector<64x1xf32> to vector<64x8xf32>
    %217 = arith.subf %213, %216 : vector<64x8xf32>
    %218 = math.exp %217 : vector<64x8xf32>
    %cst_75 = arith.constant dense<0.000000e+00> : vector<64xf32>
    %219 = vector.multi_reduction <add>, %218, %cst_75 [1] : vector<64x8xf32> to vector<64xf32>
    %220 = vector.shape_cast %219 : vector<64xf32> to vector<64x1xf32>
    %221 = tpu.reciprocal %220 {approx = true} : vector<64x1xf32> -> vector<64x1xf32>
    %222 = vector.broadcast %221 : vector<64x1xf32> to vector<64x8xf32>
    %223 = arith.mulf %218, %222 : vector<64x8xf32>
    %224 = arith.truncf %223 : vector<64x8xf32> to vector<64x8xbf16>
    %225 = vector.extract_strided_slice %224 {offsets = [0, 0], sizes = [16, 8], strides = [1, 1]} : vector<64x8xbf16> to vector<16x8xbf16>
    %cst_76 = arith.constant dense<0.000000e+00> : vector<16x32xf32>
    %226 = tpu.matmul %225, %183, %cst_76 {dimension_numbers = #tpu.dot_dimension_numbers<[1], [0], [0], [1], [0, 0, 1, 1], [], []>} : vector<16x8xbf16>, vector<8x32xbf16>, vector<16x32xf32> -> vector<16x32xf32>
    %227 = vector.extract_strided_slice %226 {offsets = [0, 0], sizes = [8, 32], strides = [1, 1]} : vector<16x32xf32> to vector<8x32xf32>
    %c0_77 = arith.constant 0 : index
    %c0_78 = arith.constant 0 : index
    %228 = vector.load %arg11[%c0_77, %c0_78] : memref<16x128xf32, #tpu.memory_space<vmem>>, vector<8x32xf32>
    tpu.vector_store %arg11[%c0_77, %c0_78], %227 {strides = array<i32>} : memref<16x128xf32, #tpu.memory_space<vmem>>, vector<8x32xf32>,
    %229 = vector.extract_strided_slice %226 {offsets = [8, 0], sizes = [8, 32], strides = [1, 1]} : vector<16x32xf32> to vector<8x32xf32>
    %c0_79 = arith.constant 0 : index
    %c32_80 = arith.constant 32 : index
    %230 = vector.load %arg11[%c0_79, %c32_80] : memref<16x128xf32, #tpu.memory_space<vmem>>, vector<8x32xf32>
    tpu.vector_store %arg11[%c0_79, %c32_80], %229 {strides = array<i32>} : memref<16x128xf32, #tpu.memory_space<vmem>>, vector<8x32xf32>,
    %231 = vector.extract_strided_slice %224 {offsets = [16, 0], sizes = [16, 8], strides = [1, 1]} : vector<64x8xbf16> to vector<16x8xbf16>
    %cst_81 = arith.constant dense<0.000000e+00> : vector<16x32xf32>
    %232 = tpu.matmul %231, %192, %cst_81 {dimension_numbers = #tpu.dot_dimension_numbers<[1], [0], [0], [1], [0, 0, 1, 1], [], []>} : vector<16x8xbf16>, vector<8x32xbf16>, vector<16x32xf32> -> vector<16x32xf32>
    %233 = vector.extract_strided_slice %232 {offsets = [0, 0], sizes = [8, 32], strides = [1, 1]} : vector<16x32xf32> to vector<8x32xf32>
    %c0_82 = arith.constant 0 : index
    %c64_83 = arith.constant 64 : index
    %234 = vector.load %arg11[%c0_82, %c64_83] : memref<16x128xf32, #tpu.memory_space<vmem>>, vector<8x32xf32>
    tpu.vector_store %arg11[%c0_82, %c64_83], %233 {strides = array<i32>} : memref<16x128xf32, #tpu.memory_space<vmem>>, vector<8x32xf32>,
    %235 = vector.extract_strided_slice %232 {offsets = [8, 0], sizes = [8, 32], strides = [1, 1]} : vector<16x32xf32> to vector<8x32xf32>
    %c0_84 = arith.constant 0 : index
    %c96_85 = arith.constant 96 : index
    %236 = vector.load %arg11[%c0_84, %c96_85] : memref<16x128xf32, #tpu.memory_space<vmem>>, vector<8x32xf32>
    tpu.vector_store %arg11[%c0_84, %c96_85], %235 {strides = array<i32>} : memref<16x128xf32, #tpu.memory_space<vmem>>, vector<8x32xf32>,
    %237 = vector.extract_strided_slice %224 {offsets = [32, 0], sizes = [16, 8], strides = [1, 1]} : vector<64x8xbf16> to vector<16x8xbf16>
    %cst_86 = arith.constant dense<0.000000e+00> : vector<16x32xf32>
    %238 = tpu.matmul %237, %201, %cst_86 {dimension_numbers = #tpu.dot_dimension_numbers<[1], [0], [0], [1], [0, 0, 1, 1], [], []>} : vector<16x8xbf16>, vector<8x32xbf16>, vector<16x32xf32> -> vector<16x32xf32>
    %239 = vector.extract_strided_slice %238 {offsets = [0, 0], sizes = [8, 32], strides = [1, 1]} : vector<16x32xf32> to vector<8x32xf32>
    %c8_87 = arith.constant 8 : index
    %c0_88 = arith.constant 0 : index
    %240 = vector.load %arg11[%c8_87, %c0_88] : memref<16x128xf32, #tpu.memory_space<vmem>>, vector<8x32xf32>
    tpu.vector_store %arg11[%c8_87, %c0_88], %239 {strides = array<i32>} : memref<16x128xf32, #tpu.memory_space<vmem>>, vector<8x32xf32>,
    %241 = vector.extract_strided_slice %238 {offsets = [8, 0], sizes = [8, 32], strides = [1, 1]} : vector<16x32xf32> to vector<8x32xf32>
    %c8_89 = arith.constant 8 : index
    %c32_90 = arith.constant 32 : index
    %242 = vector.load %arg11[%c8_89, %c32_90] : memref<16x128xf32, #tpu.memory_space<vmem>>, vector<8x32xf32>
    tpu.vector_store %arg11[%c8_89, %c32_90], %241 {strides = array<i32>} : memref<16x128xf32, #tpu.memory_space<vmem>>, vector<8x32xf32>,
    %243 = vector.extract_strided_slice %224 {offsets = [48, 0], sizes = [16, 8], strides = [1, 1]} : vector<64x8xbf16> to vector<16x8xbf16>
    %cst_91 = arith.constant dense<0.000000e+00> : vector<16x32xf32>
    %244 = tpu.matmul %243, %210, %cst_91 {dimension_numbers = #tpu.dot_dimension_numbers<[1], [0], [0], [1], [0, 0, 1, 1], [], []>} : vector<16x8xbf16>, vector<8x32xbf16>, vector<16x32xf32> -> vector<16x32xf32>
    %245 = vector.extract_strided_slice %244 {offsets = [0, 0], sizes = [8, 32], strides = [1, 1]} : vector<16x32xf32> to vector<8x32xf32>
    %c8_92 = arith.constant 8 : index
    %c64_93 = arith.constant 64 : index
    %246 = vector.load %arg11[%c8_92, %c64_93] : memref<16x128xf32, #tpu.memory_space<vmem>>, vector<8x32xf32>
    tpu.vector_store %arg11[%c8_92, %c64_93], %245 {strides = array<i32>} : memref<16x128xf32, #tpu.memory_space<vmem>>, vector<8x32xf32>,
    %247 = vector.extract_strided_slice %244 {offsets = [8, 0], sizes = [8, 32], strides = [1, 1]} : vector<16x32xf32> to vector<8x32xf32>
    %c8_94 = arith.constant 8 : index
    %c96_95 = arith.constant 96 : index
    %248 = vector.load %arg11[%c8_94, %c96_95] : memref<16x128xf32, #tpu.memory_space<vmem>>, vector<8x32xf32>
    tpu.vector_store %arg11[%c8_94, %c96_95], %247 {strides = array<i32>} : memref<16x128xf32, #tpu.memory_space<vmem>>, vector<8x32xf32>,
    %c0_96 = arith.constant 0 : index
    %c0_97 = arith.constant 0 : index
    %249 = vector.load %arg11[%c0_96, %c0_97] : memref<16x128xf32, #tpu.memory_space<vmem>>, vector<16x128xf32>
    %c1_98 = arith.constant 1 : index
    %c0_99 = arith.constant 0 : index
    %c0_100 = arith.constant 0 : index
    %250 = vector.load %arg6[%c1_98, %c0_99, %c0_100] : memref<2x128x128xbf16, #tpu.memory_space<vmem>>, vector<1x128x128xbf16>
    %251 = vector.shape_cast %250 : vector<1x128x128xbf16> to vector<128x128xbf16>
    %252 = arith.truncf %249 : vector<16x128xf32> to vector<16x128xbf16>
    %cst_101 = arith.constant dense<0.000000e+00> : vector<16x128xf32>
    %253 = tpu.matmul %252, %251, %cst_101 {dimension_numbers = #tpu.dot_dimension_numbers<[1], [0], [0], [1], [0, 0, 1, 1], [], []>} : vector<16x128xbf16>, vector<128x128xbf16>, vector<16x128xf32> -> vector<16x128xf32>
    %254 = arith.addf %154, %253 : vector<16x128xf32>
    %c1_102 = arith.constant 1 : index
    %c0_103 = arith.constant 0 : index
    %c0_104 = arith.constant 0 : index
    %255 = vector.load %arg7[%c1_102, %c0_103, %c0_104] : memref<2x1x128xf32, #tpu.memory_space<vmem>>, vector<1x1x128xf32>
    %256 = vector.shape_cast %255 : vector<1x1x128xf32> to vector<1x128xf32>
    %257 = arith.mulf %254, %254 : vector<16x128xf32>
    %cst_105 = arith.constant dense<0.000000e+00> : vector<16xf32>
    %258 = vector.multi_reduction <add>, %257, %cst_105 [1] : vector<16x128xf32> to vector<16xf32>
    %259 = vector.shape_cast %258 : vector<16xf32> to vector<16x1xf32>
    %cst_106 = arith.constant 1.280000e+02 : f32
    %260 = vector.broadcast %cst_106 : f32 to vector<16x1xf32>
    %261 = arith.divf %259, %260 : vector<16x1xf32>
    %cst_107 = arith.constant 9.99999997E-7 : f32
    %262 = vector.broadcast %cst_107 : f32 to vector<16x1xf32>
    %263 = arith.addf %261, %262 : vector<16x1xf32>
    %264 = math.rsqrt %263 : vector<16x1xf32>
    %265 = vector.broadcast %264 : vector<16x1xf32> to vector<16x128xf32>
    %266 = arith.mulf %254, %265 : vector<16x128xf32>
    %267 = vector.broadcast %256 : vector<1x128xf32> to vector<16x128xf32>
    %268 = arith.mulf %266, %267 : vector<16x128xf32>
    %c1_108 = arith.constant 1 : index
    %c0_109 = arith.constant 0 : index
    %c0_110 = arith.constant 0 : index
    %269 = vector.load %arg8[%c1_108, %c0_109, %c0_110] : memref<2x128x256xbf16, #tpu.memory_space<vmem>>, vector<1x128x256xbf16>
    %270 = vector.shape_cast %269 : vector<1x128x256xbf16> to vector<128x256xbf16>
    %271 = arith.truncf %268 : vector<16x128xf32> to vector<16x128xbf16>
    %cst_111 = arith.constant dense<0.000000e+00> : vector<16x256xf32>
    %272 = tpu.matmul %271, %270, %cst_111 {dimension_numbers = #tpu.dot_dimension_numbers<[1], [0], [0], [1], [0, 0, 1, 1], [], []>} : vector<16x128xbf16>, vector<128x256xbf16>, vector<16x256xf32> -> vector<16x256xf32>
    %273 = arith.negf %272 : vector<16x256xf32>
    %274 = math.exp %273 : vector<16x256xf32>
    %cst_112 = arith.constant 1.000000e+00 : f32
    %275 = vector.broadcast %cst_112 : f32 to vector<16x256xf32>
    %276 = arith.addf %275, %274 : vector<16x256xf32>
    %277 = arith.divf %275, %276 : vector<16x256xf32>
    %278 = arith.mulf %272, %277 : vector<16x256xf32>
    %c1_113 = arith.constant 1 : index
    %c0_114 = arith.constant 0 : index
    %c0_115 = arith.constant 0 : index
    %279 = vector.load %arg9[%c1_113, %c0_114, %c0_115] : memref<2x256x128xbf16, #tpu.memory_space<vmem>>, vector<1x256x128xbf16>
    %280 = vector.shape_cast %279 : vector<1x256x128xbf16> to vector<256x128xbf16>
    %281 = arith.truncf %278 : vector<16x256xf32> to vector<16x256xbf16>
    %cst_116 = arith.constant dense<0.000000e+00> : vector<16x128xf32>
    %282 = tpu.matmul %281, %280, %cst_116 {dimension_numbers = #tpu.dot_dimension_numbers<[1], [0], [0], [1], [0, 0, 1, 1], [], []>} : vector<16x256xbf16>, vector<256x128xbf16>, vector<16x128xf32> -> vector<16x128xf32>
    %283 = arith.addf %254, %282 : vector<16x128xf32>
    %c0_117 = arith.constant 0 : index
    %c0_118 = arith.constant 0 : index
    %284 = vector.load %arg3[%c0_117, %c0_118] : memref<1x128xf32, #tpu.memory_space<vmem>>, vector<1x128xf32>
    %285 = arith.mulf %283, %283 : vector<16x128xf32>
    %cst_119 = arith.constant dense<0.000000e+00> : vector<16xf32>
    %286 = vector.multi_reduction <add>, %285, %cst_119 [1] : vector<16x128xf32> to vector<16xf32>
    %287 = vector.shape_cast %286 : vector<16xf32> to vector<16x1xf32>
    %cst_120 = arith.constant 1.280000e+02 : f32
    %288 = vector.broadcast %cst_120 : f32 to vector<16x1xf32>
    %289 = arith.divf %287, %288 : vector<16x1xf32>
    %cst_121 = arith.constant 9.99999997E-7 : f32
    %290 = vector.broadcast %cst_121 : f32 to vector<16x1xf32>
    %291 = arith.addf %289, %290 : vector<16x1xf32>
    %292 = math.rsqrt %291 : vector<16x1xf32>
    %293 = vector.broadcast %292 : vector<16x1xf32> to vector<16x128xf32>
    %294 = arith.mulf %283, %293 : vector<16x128xf32>
    %295 = vector.broadcast %284 : vector<1x128xf32> to vector<16x128xf32>
    %296 = arith.mulf %294, %295 : vector<16x128xf32>
    %c0_122 = arith.constant 0 : index
    %c0_123 = arith.constant 0 : index
    %297 = vector.load %arg2[%c0_122, %c0_123] : memref<128x256xbf16, #tpu.memory_space<vmem>>, vector<128x256xbf16>
    %298 = arith.truncf %296 : vector<16x128xf32> to vector<16x128xbf16>
    %cst_124 = arith.constant dense<0.000000e+00> : vector<16x256xf32>
    %299 = tpu.matmul %298, %297, %cst_124 {dimension_numbers = #tpu.dot_dimension_numbers<[1], [0], [0], [1], [0, 0, 1, 1], [], []>} : vector<16x128xbf16>, vector<128x256xbf16>, vector<16x256xf32> -> vector<16x256xf32>
    %c0_125 = arith.constant 0 : index
    %c0_126 = arith.constant 0 : index
    %300 = vector.load %arg10[%c0_125, %c0_126] : memref<16x256xf32, #tpu.memory_space<vmem>>, vector<16x256xf32>
    tpu.vector_store %arg10[%c0_125, %c0_126], %299 {strides = array<i32>} : memref<16x256xf32, #tpu.memory_space<vmem>>, vector<16x256xf32>,
    return
  }
}

</mosaic_0001>

<llo_original>
// kernel: transformer_forward.1
$region0: #{transformer_forward.1}
  #allocation0 [shape = 'u32[]', space=smem, size = 0x4, offset = 0x4, fixed_abs, tag = 'smem constant byte address 0x4 - core index']
  #allocation1 [shape = 'u32[144,128]{1,0:T(1,128)}', space=vmem, size = 0x12000, scoped, tag = 'internal scratch']
  #allocation2 [shape = 'f32[16,128]{1,0:T(8,128)}', space=vmem, size = 0x2000, scoped, tag = 'scratch operand']
  %s0 = inlined_call_operand.hbm [shape: f32[16,256], index: 0, kind: input, shape index: {}]
  %s1 = inlined_call_operand.hbm [shape: bf16[256,128], index: 1, kind: input, shape index: {}]
  %s2 = inlined_call_operand.hbm [shape: bf16[128,256], index: 2, kind: input, shape index: {}]
  %s3 = inlined_call_operand.vmem [shape: f32[1,128], index: 3, kind: input, shape index: {}]
  %s4 = inlined_call_operand.vmem [shape: f32[2,1,128], index: 4, kind: input, shape index: {}]
  %s5 = inlined_call_operand.hbm [shape: bf16[2,128,256], index: 5, kind: input, shape index: {}]
  %s6 = inlined_call_operand.hbm [shape: bf16[2,128,128], index: 6, kind: input, shape index: {}]
  %s7 = inlined_call_operand.vmem [shape: f32[2,1,128], index: 7, kind: input, shape index: {}]
  %s8 = inlined_call_operand.hbm [shape: bf16[2,128,256], index: 8, kind: input, shape index: {}]
  %s9 = inlined_call_operand.hbm [shape: bf16[2,256,128], index: 9, kind: input, shape index: {}]
  %s10 = inlined_call_operand.hbm [shape: f32[16,256], index: 10, kind: output, shape index: {}]
  %s11 = sld [smem:[#allocation0]]
  $region78: #{transformer_forward.1} parent=0
    _
  %s13 = ssub.s32 1, %s11
  %s14 = scalar_select 0, %s13, %s11
  $region1: #{transformer_forward.1} parent=0
    #allocation3 [shape = 'u8[16384]{0}', space=vmem, size = 0x4000, scoped, tag = 'input window, operand 0, single buffered']
    #allocation4 [shape = 's32[1]{0}', space=sflag, size = 0x4, scoped, tag = 'scoped memory for transformer_forward.1']
    #allocation5 [shape = 's32[1]{0}', space=sflag, size = 0x4, scoped, tag = 'scoped memory for transformer_forward.1']
    #allocation6 [shape = 'u8[65536]{0}', space=vmem, size = 0x10000, scoped, tag = 'input window, operand 1, single buffered']
    #allocation7 [shape = 's32[1]{0}', space=sflag, size = 0x4, scoped, tag = 'scoped memory for transformer_forward.1']
    #allocation8 [shape = 'u8[65536]{0}', space=vmem, size = 0x10000, scoped, tag = 'input window, operand 2, single buffered']
    #allocation9 [shape = 'u8[131072]{0}', space=vmem, size = 0x20000, scoped, tag = 'input window, operand 5, single buffered']
    #allocation10 [shape = 's32[1]{0}', space=sflag, size = 0x4, scoped, tag = 'scoped memory for transformer_forward.1']
    #allocation11 [shape = 'u8[65536]{0}', space=vmem, size = 0x10000, scoped, tag = 'input window, operand 6, single buffered']
    #allocation12 [shape = 'u8[131072]{0}', space=vmem, size = 0x20000, scoped, tag = 'input window, operand 8, single buffered']
    #allocation13 [shape = 's32[1]{0}', space=sflag, size = 0x4, scoped, tag = 'scoped memory for transformer_forward.1']
    #allocation14 [shape = 'u8[131072]{0}', space=vmem, size = 0x20000, scoped, tag = 'input window, operand 9, single buffered']
    #allocation15 [shape = 'u8[16384]{0}', space=vmem, size = 0x4000, scoped, tag = 'output window, operand 0, single buffered']
    %15 = vsyncpa [#allocation4], 0
    %16 = vsyncpa [#allocation7], 0
    %17 = vsyncpa [#allocation10], 0
    %18 = vsyncpa [#allocation13], 0
    %19 = vsyncpa [#allocation5], 0
    // Predicated region
    $region2: #{transformer_forward.1} parent=1 // pred_check
      _
    $region3: #{transformer_forward.1} parent=1 // pred_check_branch
      %21 = sbr.rel (0) target = $region5
    $region4: #{transformer_forward.1} parent=1 // pred_region
      %s23 = ssub.s32 512, 512
      %24 = vsyncadd [#allocation4], %s23
      %s25 = sshll.u32 [#allocation3], 4
      %s26 = int_to_ptr.vmem [resolvable:$true] %s25
      %31 = dma.hbm_to_vmem [thread:$0]  %s0, 512, %s26, [#allocation4], 256, 256, 16
    $region5: #{transformer_forward.1} parent=1 // pred_fallthru
      _
    // Predicated region
    $region6: #{transformer_forward.1} parent=1 // pred_check
      _
    $region7: #{transformer_forward.1} parent=1 // pred_check_branch
      %33 = sbr.rel (0) target = $region9
    $region8: #{transformer_forward.1} parent=1 // pred_region
      %s35 = ssub.s32 2048, 2048
      %36 = vsyncadd [#allocation7], %s35
      %s37 = sshll.u32 [#allocation6], 4
      %s38 = int_to_ptr.vmem [resolvable:$true] %s37
      %43 = dma.hbm_to_vmem [thread:$0]  %s1, 2048, %s38, [#allocation7], 64, 64, 4
    $region9: #{transformer_forward.1} parent=1 // pred_fallthru
      _
    // Predicated region
    $region10: #{transformer_forward.1} parent=1 // pred_check
      _
    $region11: #{transformer_forward.1} parent=1 // pred_check_branch
      %45 = sbr.rel (0) target = $region13
    $region12: #{transformer_forward.1} parent=1 // pred_region
      %s47 = ssub.s32 2048, 2048
      %48 = vsyncadd [#allocation7], %s47
      %s49 = sshll.u32 [#allocation8], 4
      %s50 = int_to_ptr.vmem [resolvable:$true] %s49
      %55 = dma.hbm_to_vmem [thread:$0]  %s2, 2048, %s50, [#allocation7], 128, 128, 8
    $region13: #{transformer_forward.1} parent=1 // pred_fallthru
      _
    // Predicated region
    $region14: #{transformer_forward.1} parent=1 // pred_check
      _
    $region15: #{transformer_forward.1} parent=1 // pred_check_branch
      %57 = sbr.rel (0) target = $region17
    $region16: #{transformer_forward.1} parent=1 // pred_region
      _
    $region17: #{transformer_forward.1} parent=1 // pred_fallthru
      _
    // Predicated region
    $region18: #{transformer_forward.1} parent=1 // pred_check
      _
    $region19: #{transformer_forward.1} parent=1 // pred_check_branch
      %59 = sbr.rel (0) target = $region21
    $region20: #{transformer_forward.1} parent=1 // pred_region
      _
    $region21: #{transformer_forward.1} parent=1 // pred_fallthru
      _
    // Predicated region
    $region22: #{transformer_forward.1} parent=1 // pred_check
      _
    $region23: #{transformer_forward.1} parent=1 // pred_check_branch
      %61 = sbr.rel (0) target = $region25
    $region24: #{transformer_forward.1} parent=1 // pred_region
      %s63 = ssub.s32 4096, 4096
      %64 = vsyncadd [#allocation10], %s63
      %s65 = sshll.u32 [#allocation9], 4
      %s66 = int_to_ptr.vmem [resolvable:$true] %s65
      %71 = dma.hbm_to_vmem [thread:$0]  %s5, 4096, %s66, [#allocation10], 128, 128, 8
    $region25: #{transformer_forward.1} parent=1 // pred_fallthru
      _
    // Predicated region
    $region26: #{transformer_forward.1} parent=1 // pred_check
      _
    $region27: #{transformer_forward.1} parent=1 // pred_check_branch
      %73 = sbr.rel (0) target = $region29
    $region28: #{transformer_forward.1} parent=1 // pred_region
      %s75 = ssub.s32 2048, 2048
      %76 = vsyncadd [#allocation10], %s75
      %s77 = sshll.u32 [#allocation11], 4
      %s78 = int_to_ptr.vmem [resolvable:$true] %s77
      %83 = dma.hbm_to_vmem [thread:$0]  %s6, 2048, %s78, [#allocation10], 64, 64, 4
    $region29: #{transformer_forward.1} parent=1 // pred_fallthru
      _
    // Predicated region
    $region30: #{transformer_forward.1} parent=1 // pred_check
      _
    $region31: #{transformer_forward.1} parent=1 // pred_check_branch
      %85 = sbr.rel (0) target = $region33
    $region32: #{transformer_forward.1} parent=1 // pred_region
      _
    $region33: #{transformer_forward.1} parent=1 // pred_fallthru
      _
    // Predicated region
    $region34: #{transformer_forward.1} parent=1 // pred_check
      _
    $region35: #{transformer_forward.1} parent=1 // pred_check_branch
      %87 = sbr.rel (0) target = $region37
    $region36: #{transformer_forward.1} parent=1 // pred_region
      %s89 = ssub.s32 4096, 4096
      %90 = vsyncadd [#allocation13], %s89
      %s91 = sshll.u32 [#allocation12], 4
      %s92 = int_to_ptr.vmem [resolvable:$true] %s91
      %97 = dma.hbm_to_vmem [thread:$0]  %s8, 4096, %s92, [#allocation13], 128, 128, 8
    $region37: #{transformer_forward.1} parent=1 // pred_fallthru
      _
    // Predicated region
    $region38: #{transformer_forward.1} parent=1 // pred_check
      _
    $region39: #{transformer_forward.1} parent=1 // pred_check_branch
      %99 = sbr.rel (0) target = $region41
    $region40: #{transformer_forward.1} parent=1 // pred_region
      %s101 = ssub.s32 4096, 4096
      %102 = vsyncadd [#allocation13], %s101
      %s103 = sshll.u32 [#allocation14], 4
      %s104 = int_to_ptr.vmem [resolvable:$true] %s103
      %109 = dma.hbm_to_vmem [thread:$0]  %s9, 4096, %s104, [#allocation13], 64, 64, 4
    $region41: #{transformer_forward.1} parent=1 // pred_fallthru
      _
    // Predicated region
    $region42: #{transformer_forward.1} parent=1 // pred_check
      _
    $region43: #{transformer_forward.1} parent=1 // pred_check_branch
      %111 = sbr.rel (0) target = $region45
    $region44: #{transformer_forward.1} parent=1 // pred_region
      %112 = dma.done [#allocation4], 512
    $region45: #{transformer_forward.1} parent=1 // pred_fallthru
      _
    // Predicated region
    $region46: #{transformer_forward.1} parent=1 // pred_check
      _
    $region47: #{transformer_forward.1} parent=1 // pred_check_branch
      %114 = sbr.rel (0) target = $region49
    $region48: #{transformer_forward.1} parent=1 // pred_region
      %115 = dma.done [#allocation7], 2048
    $region49: #{transformer_forward.1} parent=1 // pred_fallthru
      _
    // Predicated region
    $region50: #{transformer_forward.1} parent=1 // pred_check
      _
    $region51: #{transformer_forward.1} parent=1 // pred_check_branch
      %117 = sbr.rel (0) target = $region53
    $region52: #{transformer_forward.1} parent=1 // pred_region
      %118 = dma.done [#allocation7], 2048
    $region53: #{transformer_forward.1} parent=1 // pred_fallthru
      _
    // Predicated region
    $region54: #{transformer_forward.1} parent=1 // pred_check
      _
    $region55: #{transformer_forward.1} parent=1 // pred_check_branch
      %120 = sbr.rel (0) target = $region57
    $region56: #{transformer_forward.1} parent=1 // pred_region
      %121 = dma.done [#allocation10], 4096
    $region57: #{transformer_forward.1} parent=1 // pred_fallthru
      _
    // Predicated region
    $region58: #{transformer_forward.1} parent=1 // pred_check
      _
    $region59: #{transformer_forward.1} parent=1 // pred_check_branch
      %123 = sbr.rel (0) target = $region61
    $region60: #{transformer_forward.1} parent=1 // pred_region
      %124 = dma.done [#allocation10], 2048
    $region61: #{transformer_forward.1} parent=1 // pred_fallthru
      _
    // Predicated region
    $region62: #{transformer_forward.1} parent=1 // pred_check
      _
    $region63: #{transformer_forward.1} parent=1 // pred_check_branch
      %126 = sbr.rel (0) target = $region65
    $region64: #{transformer_forward.1} parent=1 // pred_region
      %127 = dma.done [#allocation13], 4096
    $region65: #{transformer_forward.1} parent=1 // pred_fallthru
      _
    // Predicated region
    $region66: #{transformer_forward.1} parent=1 // pred_check
      _
    $region67: #{transformer_forward.1} parent=1 // pred_check_branch
      %129 = sbr.rel (0) target = $region69
    $region68: #{transformer_forward.1} parent=1 // pred_region
      %130 = dma.done [#allocation13], 4096
    $region69: #{transformer_forward.1} parent=1 // pred_fallthru
      _
    %v132 = vlaneseq
    %v133 = vshrl.u32 %v132, 7
    %v134 = vadd.s32 %v133, 8
    %v135 = vadd.s32 %v133, 16
    %v136 = vadd.s32 %v133, 24
    %v137 = vadd.s32 %v133, 32
    %v138 = vadd.s32 %v133, 40
    %v139 = vadd.s32 %v133, 48
    %v140 = vadd.s32 %v133, 56
    %vm141 = vcmp.lt.s32.totalorder %v133, 0
    %v142 = vsub.s32 0, %v133
    %v143 = vsel %vm141, %v142, %v133
    %v144 = vshrl.u32 %v143, 3
    %v145 = vand.u32 %v143, 7
    %v146 = vsub.s32 0, %v145
    %v147 = vsel %vm141, %v146, %v145
    %vm148 = vcmp.lt.s32.totalorder %v134, 0
    %v149 = vsub.s32 0, %v134
    %v150 = vsel %vm148, %v149, %v134
    %v151 = vshrl.u32 %v150, 3
    %v152 = vand.u32 %v150, 7
    %v153 = vsub.s32 0, %v152
    %v154 = vsel %vm148, %v153, %v152
    %vm155 = vcmp.lt.s32.totalorder %v135, 0
    %v156 = vsub.s32 0, %v135
    %v157 = vsel %vm155, %v156, %v135
    %v158 = vshrl.u32 %v157, 3
    %v159 = vand.u32 %v157, 7
    %v160 = vsub.s32 0, %v159
    %v161 = vsel %vm155, %v160, %v159
    %vm162 = vcmp.lt.s32.totalorder %v136, 0
    %v163 = vsub.s32 0, %v136
    %v164 = vsel %vm162, %v163, %v136
    %v165 = vshrl.u32 %v164, 3
    %v166 = vand.u32 %v164, 7
    %v167 = vsub.s32 0, %v166
    %v168 = vsel %vm162, %v167, %v166
    %vm169 = vcmp.lt.s32.totalorder %v137, 0
    %v170 = vsub.s32 0, %v137
    %v171 = vsel %vm169, %v170, %v137
    %v172 = vshrl.u32 %v171, 3
    %v173 = vand.u32 %v171, 7
    %v174 = vsub.s32 0, %v173
    %v175 = vsel %vm169, %v174, %v173
    %vm176 = vcmp.lt.s32.totalorder %v138, 0
    %v177 = vsub.s32 0, %v138
    %v178 = vsel %vm176, %v177, %v138
    %v179 = vshrl.u32 %v178, 3
    %v180 = vand.u32 %v178, 7
    %v181 = vsub.s32 0, %v180
    %v182 = vsel %vm176, %v181, %v180
    %vm183 = vcmp.lt.s32.totalorder %v139, 0
    %v184 = vsub.s32 0, %v139
    %v185 = vsel %vm183, %v184, %v139
    %v186 = vshrl.u32 %v185, 3
    %v187 = vand.u32 %v185, 7
    %v188 = vsub.s32 0, %v187
    %v189 = vsel %vm183, %v188, %v187
    %vm190 = vcmp.lt.s32.totalorder %v140, 0
    %v191 = vsub.s32 0, %v140
    %v192 = vsel %vm190, %v191, %v140
    %v193 = vshrl.u32 %v192, 3
    %v194 = vand.u32 %v192, 7
    %v195 = vsub.s32 0, %v194
    %v196 = vsel %vm190, %v195, %v194
    %vm197 = vcmp.ne.s32.totalorder %v147, 0
    %vm198 = vcmp.ne.s32.totalorder %v154, 0
    %vm199 = vcmp.ne.s32.totalorder %v161, 0
    %vm200 = vcmp.ne.s32.totalorder %v168, 0
    %vm201 = vcmp.ne.s32.totalorder %v175, 0
    %vm202 = vcmp.ne.s32.totalorder %v182, 0
    %vm203 = vcmp.ne.s32.totalorder %v189, 0
    %vm204 = vcmp.ne.s32.totalorder %v196, 0
    %vm205 = vcmp.lt.s32.totalorder %v147, 0
    %vm206 = vcmp.lt.s32.totalorder %v154, 0
    %vm207 = vcmp.lt.s32.totalorder %v161, 0
    %vm208 = vcmp.lt.s32.totalorder %v168, 0
    %vm209 = vcmp.lt.s32.totalorder %v175, 0
    %vm210 = vcmp.lt.s32.totalorder %v182, 0
    %vm211 = vcmp.lt.s32.totalorder %v189, 0
    %vm212 = vcmp.lt.s32.totalorder %v196, 0
    %vm213 = vmand %vm205, %vm197
    %vm214 = vmand %vm206, %vm198
    %vm215 = vmand %vm207, %vm199
    %vm216 = vmand %vm208, %vm200
    %vm217 = vmand %vm209, %vm201
    %vm218 = vmand %vm210, %vm202
    %vm219 = vmand %vm211, %vm203
    %vm220 = vmand %vm212, %vm204
    %v221 = vadd.s32 %v147, 8
    %v222 = vadd.s32 %v154, 8
    %v223 = vadd.s32 %v161, 8
    %v224 = vadd.s32 %v168, 8
    %v225 = vadd.s32 %v175, 8
    %v226 = vadd.s32 %v182, 8
    %v227 = vadd.s32 %v189, 8
    %v228 = vadd.s32 %v196, 8
    %v229 = vsel %vm213, %v221, %v147
    %v230 = vsel %vm214, %v222, %v154
    %v231 = vsel %vm215, %v223, %v161
    %v232 = vsel %vm216, %v224, %v168
    %v233 = vsel %vm217, %v225, %v175
    %v234 = vsel %vm218, %v226, %v182
    %v235 = vsel %vm219, %v227, %v189
    %v236 = vsel %vm220, %v228, %v196
    %v237 = vlaneseq
    %v238 = vand.u32 %v237, 127
    %vm239 = vcmp.le.s32.totalorder %v238, %v229
    %vm240 = vcmp.le.s32.totalorder %v238, %v230
    %vm241 = vcmp.le.s32.totalorder %v238, %v231
    %vm242 = vcmp.le.s32.totalorder %v238, %v232
    %vm243 = vcmp.le.s32.totalorder %v238, %v233
    %vm244 = vcmp.le.s32.totalorder %v238, %v234
    %vm245 = vcmp.le.s32.totalorder %v238, %v235
    %vm246 = vcmp.le.s32.totalorder %v238, %v236
    %v247 = vsel %vm239, 0.0, -1e+30
    %v248 = vsel %vm240, 0.0, -1e+30
    %v249 = vsel %vm241, 0.0, -1e+30
    %v250 = vsel %vm242, 0.0, -1e+30
    %v251 = vsel %vm243, 0.0, -1e+30
    %v252 = vsel %vm244, 0.0, -1e+30
    %v253 = vsel %vm245, 0.0, -1e+30
    %v254 = vsel %vm246, 0.0, -1e+30
    %v255 = vld [vmem:[#allocation3] sm:$0xff]
    %v256 = vld [vmem:[#allocation3 + $0x8] sm:$0xff]
    %v257 = vld [vmem:[#allocation3 + $0x10] sm:$0xff]
    %v258 = vld [vmem:[#allocation3 + $0x18] sm:$0xff]
    %v259 = vld [vmem:[#allocation6] sm:$0xf]
    %v260 = vld [vmem:[#allocation6 + $0x4] sm:$0xf]
    %v261 = vld [vmem:[#allocation6 + $0x8] sm:$0xf]
    %v262 = vld [vmem:[#allocation6 + $0xc] sm:$0xf]
    %v263 = vld [vmem:[#allocation6 + $0x10] sm:$0xf]
    %v264 = vld [vmem:[#allocation6 + $0x14] sm:$0xf]
    %v265 = vld [vmem:[#allocation6 + $0x18] sm:$0xf]
    %v266 = vld [vmem:[#allocation6 + $0x1c] sm:$0xf]
    %v267 = vld [vmem:[#allocation6 + $0x20] sm:$0xf]
    %v268 = vld [vmem:[#allocation6 + $0x24] sm:$0xf]
    %v269 = vld [vmem:[#allocation6 + $0x28] sm:$0xf]
    %v270 = vld [vmem:[#allocation6 + $0x2c] sm:$0xf]
    %v271 = vld [vmem:[#allocation6 + $0x30] sm:$0xf]
    %v272 = vld [vmem:[#allocation6 + $0x34] sm:$0xf]
    %v273 = vld [vmem:[#allocation6 + $0x38] sm:$0xf]
    %v274 = vld [vmem:[#allocation6 + $0x3c] sm:$0xf]
    %v275 = vld [vmem:[#allocation6 + $0x40] sm:$0xf]
    %v276 = vld [vmem:[#allocation6 + $0x44] sm:$0xf]
    %v277 = vld [vmem:[#allocation6 + $0x48] sm:$0xf]
    %v278 = vld [vmem:[#allocation6 + $0x4c] sm:$0xf]
    %v279 = vld [vmem:[#allocation6 + $0x50] sm:$0xf]
    %v280 = vld [vmem:[#allocation6 + $0x54] sm:$0xf]
    %v281 = vld [vmem:[#allocation6 + $0x58] sm:$0xf]
    %v282 = vld [vmem:[#allocation6 + $0x5c] sm:$0xf]
    %v283 = vld [vmem:[#allocation6 + $0x60] sm:$0xf]
    %v284 = vld [vmem:[#allocation6 + $0x64] sm:$0xf]
    %v285 = vld [vmem:[#allocation6 + $0x68] sm:$0xf]
    %v286 = vld [vmem:[#allocation6 + $0x6c] sm:$0xf]
    %v287 = vld [vmem:[#allocation6 + $0x70] sm:$0xf]
    %v288 = vld [vmem:[#allocation6 + $0x74] sm:$0xf]
    %v289 = vld [vmem:[#allocation6 + $0x78] sm:$0xf]
    %v290 = vld [vmem:[#allocation6 + $0x7c] sm:$0xf]
    %v291 = vpack.c.bf16 %v257, %v255
    %v292 = vpack.c.bf16 %v258, %v256
    %v325 = vunpack.c.l.b16 %v259
    %v326 = vunpack.c.l.b16 %v260
    %v327 = vunpack.c.l.b16 %v261
    %v328 = vunpack.c.l.b16 %v262
    %v329 = vunpack.c.l.b16 %v263
    %v330 = vunpack.c.l.b16 %v264
    %v331 = vunpack.c.l.b16 %v265
    %v332 = vunpack.c.l.b16 %v266
    %v333 = vunpack.c.l.b16 %v267
    %v334 = vunpack.c.l.b16 %v268
    %v335 = vunpack.c.l.b16 %v269
    %v336 = vunpack.c.l.b16 %v270
    %v337 = vunpack.c.l.b16 %v271
    %v338 = vunpack.c.l.b16 %v272
    %v339 = vunpack.c.l.b16 %v273
    %v340 = vunpack.c.l.b16 %v274
    %v341 = vunpack.c.l.b16 %v275
    %v342 = vunpack.c.l.b16 %v276
    %v343 = vunpack.c.l.b16 %v277
    %v344 = vunpack.c.l.b16 %v278
    %v345 = vunpack.c.l.b16 %v279
    %v346 = vunpack.c.l.b16 %v280
    %v347 = vunpack.c.l.b16 %v281
    %v348 = vunpack.c.l.b16 %v282
    %v349 = vunpack.c.l.b16 %v283
    %v350 = vunpack.c.l.b16 %v284
    %v351 = vunpack.c.l.b16 %v285
    %v352 = vunpack.c.l.b16 %v286
    %v353 = vunpack.c.l.b16 %v287
    %v354 = vunpack.c.l.b16 %v288
    %v355 = vunpack.c.l.b16 %v289
    %v356 = vunpack.c.l.b16 %v290
    %v357 = vpack.c.b16 %v326, %v325
    %v358 = vpack.c.b16 %v328, %v327
    %v359 = vpack.c.b16 %v330, %v329
    %v360 = vpack.c.b16 %v332, %v331
    %v361 = vpack.c.b16 %v334, %v333
    %v362 = vpack.c.b16 %v336, %v335
    %v363 = vpack.c.b16 %v338, %v337
    %v364 = vpack.c.b16 %v340, %v339
    %v365 = vpack.c.b16 %v342, %v341
    %v366 = vpack.c.b16 %v344, %v343
    %v367 = vpack.c.b16 %v346, %v345
    %v368 = vpack.c.b16 %v348, %v347
    %v369 = vpack.c.b16 %v350, %v349
    %v370 = vpack.c.b16 %v352, %v351
    %v371 = vpack.c.b16 %v354, %v353
    %v372 = vpack.c.b16 %v356, %v355
    %389 = vmatprep.subr.bf16.mxu0 0
    %390 = vmatpush1.bf16.msra.mxu0 %v357
    %391 = vmatprep.subr.bf16.mxu0 0
    %392 = vmatpush1.bf16.msra.mxu0 %v358
    %393 = vmatprep.subr.bf16.mxu0 0
    %394 = vmatpush1.bf16.msra.mxu0 %v359
    %395 = vmatprep.subr.bf16.mxu0 0
    %396 = vmatpush1.bf16.msra.mxu0 %v360
    %397 = vmatprep.subr.bf16.mxu0 0
    %398 = vmatpush1.bf16.msra.mxu0 %v361
    %399 = vmatprep.subr.bf16.mxu0 0
    %400 = vmatpush1.bf16.msra.mxu0 %v362
    %401 = vmatprep.subr.bf16.mxu0 0
    %402 = vmatpush1.bf16.msra.mxu0 %v363
    %403 = vmatprep.subr.bf16.mxu0 0
    %404 = vmatpush1.bf16.msra.mxu0 %v364
    %405 = vmatprep.subr.bf16.mxu0 0
    %406 = vmatpush1.bf16.msra.mxu0 %v365
    %407 = vmatprep.subr.bf16.mxu0 0
    %408 = vmatpush1.bf16.msra.mxu0 %v366
    %409 = vmatprep.subr.bf16.mxu0 0
    %410 = vmatpush1.bf16.msra.mxu0 %v367
    %411 = vmatprep.subr.bf16.mxu0 0
    %412 = vmatpush1.bf16.msra.mxu0 %v368
    %413 = vmatprep.subr.bf16.mxu0 0
    %414 = vmatpush1.bf16.msra.mxu0 %v369
    %415 = vmatprep.subr.bf16.mxu0 0
    %416 = vmatpush1.bf16.msra.mxu0 %v370
    %417 = vmatprep.subr.bf16.mxu0 0
    %418 = vmatpush1.bf16.msra.mxu0 %v371
    %419 = vmatprep.subr.bf16.mxu0 0
    %420 = vmatpush1.bf16.msra.mxu0 %v372
    %421 = vmatprep.mubr.bf16.mxu0 %v292
    %422 = vmatmul.mubr.bf16.gmra.mrb[0].mxu0 %v291
    %v423 = vpop.f32.mrb[0].mxu0
    %v424 = vadd.f32 0.0, %v423
    %v425 = vpop.f32.mrb[0].mxu0
    %v426 = vpop.f32.mrb[0].mxu0
    %v427 = vadd.f32 0.0, %v426
    %v428 = vpop.f32.mrb[0].mxu0
    %429 = vdwg.mxu0
    %v430 = vld [vmem:[%s4] sm:$0x1]
    %v431 = vmul.f32 %v424, %v424
    %v432 = vmul.f32 %v427, %v427
    %433 = vadd.xlane.f32.xlu0 %v431
    %v434 = vpop.xlane.xlu0 %433
    %435 = vadd.xlane.f32.xlu0 %v432
    %v436 = vpop.xlane.xlu0 %435
    %v437 = vrcp.pop 128.0
    %v438 = vmul.f32 %v434, %v437
    %v439 = vmul.f32 %v436, %v437
    %v440 = vadd.f32 %v438, 1e-06
    %v441 = vadd.f32 %v439, 1e-06
    %v442 = vrsqrt.pop %v440
    %v443 = vrsqrt.pop %v441
    %v444 = vmul.f32 %v424, %v442
    %v445 = vmul.f32 %v427, %v443
    %v447 = vlaneseq
    %v448 = vshrl.u32 %v447, 7
    %v449 = vsub.s32 0, %v448
    %v450 = vrot.slane %v430, %v449
    %v452 = vmul.f32 %v444, %v450
    %v453 = vmul.f32 %v445, %v450
    %v454 = vld [vmem:[#allocation9] sm:$0xff]
    %v455 = vld [vmem:[#allocation9 + $0x8] sm:$0xff]
    %v456 = vld [vmem:[#allocation9 + $0x10] sm:$0xff]
    %v457 = vld [vmem:[#allocation9 + $0x18] sm:$0xff]
    %v458 = vld [vmem:[#allocation9 + $0x20] sm:$0xff]
    %v459 = vld [vmem:[#allocation9 + $0x28] sm:$0xff]
    %v460 = vld [vmem:[#allocation9 + $0x30] sm:$0xff]
    %v461 = vld [vmem:[#allocation9 + $0x38] sm:$0xff]
    %v462 = vld [vmem:[#allocation9 + $0x40] sm:$0xff]
    %v463 = vld [vmem:[#allocation9 + $0x48] sm:$0xff]
    %v464 = vld [vmem:[#allocation9 + $0x50] sm:$0xff]
    %v465 = vld [vmem:[#allocation9 + $0x58] sm:$0xff]
    %v466 = vld [vmem:[#allocation9 + $0x60] sm:$0xff]
    %v467 = vld [vmem:[#allocation9 + $0x68] sm:$0xff]
    %v468 = vld [vmem:[#allocation9 + $0x70] sm:$0xff]
    %v469 = vld [vmem:[#allocation9 + $0x78] sm:$0xff]
    %v470 = vpack.c.bf16 %v453, %v452
    %v487 = vunpack.c.l.b16 %v454
    %v488 = vunpack.c.h.b16 %v454
    %v489 = vunpack.c.l.b16 %v455
    %v490 = vunpack.c.h.b16 %v455
    %v491 = vunpack.c.l.b16 %v456
    %v492 = vunpack.c.h.b16 %v456
    %v493 = vunpack.c.l.b16 %v457
    %v494 = vunpack.c.h.b16 %v457
    %v495 = vunpack.c.l.b16 %v458
    %v496 = vunpack.c.h.b16 %v458
    %v497 = vunpack.c.l.b16 %v459
    %v498 = vunpack.c.h.b16 %v459
    %v499 = vunpack.c.l.b16 %v460
    %v500 = vunpack.c.h.b16 %v460
    %v501 = vunpack.c.l.b16 %v461
    %v502 = vunpack.c.h.b16 %v461
    %v503 = vunpack.c.l.b16 %v462
    %v504 = vunpack.c.h.b16 %v462
    %v505 = vunpack.c.l.b16 %v463
    %v506 = vunpack.c.h.b16 %v463
    %v507 = vunpack.c.l.b16 %v464
    %v508 = vunpack.c.h.b16 %v464
    %v509 = vunpack.c.l.b16 %v465
    %v510 = vunpack.c.h.b16 %v465
    %v511 = vunpack.c.l.b16 %v466
    %v512 = vunpack.c.h.b16 %v466
    %v513 = vunpack.c.l.b16 %v467
    %v514 = vunpack.c.h.b16 %v467
    %v515 = vunpack.c.l.b16 %v468
    %v516 = vunpack.c.h.b16 %v468
    %v517 = vunpack.c.l.b16 %v469
    %v518 = vunpack.c.h.b16 %v469
    %v519 = vpack.c.b16 %v489, %v487
    %v520 = vpack.c.b16 %v490, %v488
    %v521 = vpack.c.b16 %v493, %v491
    %v522 = vpack.c.b16 %v494, %v492
    %v523 = vpack.c.b16 %v497, %v495
    %v524 = vpack.c.b16 %v498, %v496
    %v525 = vpack.c.b16 %v501, %v499
    %v526 = vpack.c.b16 %v502, %v500
    %v527 = vpack.c.b16 %v505, %v503
    %v528 = vpack.c.b16 %v506, %v504
    %v529 = vpack.c.b16 %v509, %v507
    %v530 = vpack.c.b16 %v510, %v508
    %v531 = vpack.c.b16 %v513, %v511
    %v532 = vpack.c.b16 %v514, %v512
    %v533 = vpack.c.b16 %v517, %v515
    %v534 = vpack.c.b16 %v518, %v516
    %551 = vmatprep.subr.bf16.mxu0 %v520
    %552 = vmatpush1.bf16.msra.mxu0 %v519
    %553 = vmatprep.subr.bf16.mxu0 %v522
    %554 = vmatpush1.bf16.msra.mxu0 %v521
    %555 = vmatprep.subr.bf16.mxu0 %v524
    %556 = vmatpush1.bf16.msra.mxu0 %v523
    %557 = vmatprep.subr.bf16.mxu0 %v526
    %558 = vmatpush1.bf16.msra.mxu0 %v525
    %559 = vmatprep.subr.bf16.mxu0 %v528
    %560 = vmatpush1.bf16.msra.mxu0 %v527
    %561 = vmatprep.subr.bf16.mxu0 %v530
    %562 = vmatpush1.bf16.msra.mxu0 %v529
    %563 = vmatprep.subr.bf16.mxu0 %v532
    %564 = vmatpush1.bf16.msra.mxu0 %v531
    %565 = vmatprep.subr.bf16.mxu0 %v534
    %566 = vmatpush1.bf16.msra.mxu0 %v533
    %567 = vmatprep.subr.bf16.mxu0 0
    %568 = vmatpush1.bf16.msra.mxu0 0
    %569 = vmatprep.subr.bf16.mxu0 0
    %570 = vmatpush1.bf16.msra.mxu0 0
    %571 = vmatprep.subr.bf16.mxu0 0
    %572 = vmatpush1.bf16.msra.mxu0 0
    %573 = vmatprep.subr.bf16.mxu0 0
    %574 = vmatpush1.bf16.msra.mxu0 0
    %575 = vmatprep.subr.bf16.mxu0 0
    %576 = vmatpush1.bf16.msra.mxu0 0
    %577 = vmatprep.subr.bf16.mxu0 0
    %578 = vmatpush1.bf16.msra.mxu0 0
    %579 = vmatprep.subr.bf16.mxu0 0
    %580 = vmatpush1.bf16.msra.mxu0 0
    %581 = vmatprep.subr.bf16.mxu0 0
    %582 = vmatpush1.bf16.msra.mxu0 0
    %583 = vmatprep.mubr.bf16.mxu0 0
    %584 = vmatmul.mubr.bf16.gmra.mrb[0].mxu0 %v470
    %v585 = vpop.f32.mrb[0].mxu0
    %v586 = vadd.f32 0.0, %v585
    %v587 = vpop.f32.mrb[0].mxu0
    %v588 = vadd.f32 0.0, %v587
    %v589 = vpop.f32.mrb[0].mxu0
    %v590 = vadd.f32 0.0, %v589
    %v591 = vpop.f32.mrb[0].mxu0
    %v592 = vadd.f32 0.0, %v591
    %593 = vdwg.mxu0
    %595 = vrot.lane.b32.xlu0 %v586, 96
    %v596 = vpop.permute.xlu0 %595
    %v598 = vpack.c.bf16 %v596, %v586
    %v599 = vpack.c.bf16 %v588, %v588
    %vm600 = vcmask 261120
    %v602 = vsel %vm600, %v598, 0
    %v605 = vsel %vm600, %v599, 0
    %607 = vmatprep.subr.bf16.mxu0 0
    %608 = vmatpush1.bf16.xpose.msra.mxu0 %v605
    %609 = vmatprep.subr.bf16.mxu0 0
    %610 = vmatpush1.bf16.xpose.msra.mxu0 0
    %611 = vmatprep.subr.bf16.mxu0 0
    %612 = vmatpush1.bf16.xpose.msra.mxu0 0
    %613 = vmatprep.subr.bf16.mxu0 0
    %614 = vmatpush1.bf16.xpose.msra.mxu0 0
    %615 = vmatprep.subr.bf16.mxu0 0
    %616 = vmatpush1.bf16.xpose.msra.mxu0 0
    %617 = vmatprep.subr.bf16.mxu0 0
    %618 = vmatpush1.bf16.xpose.msra.mxu0 0
    %619 = vmatprep.subr.bf16.mxu0 0
    %620 = vmatpush1.bf16.xpose.msra.mxu0 0
    %621 = vmatprep.subr.bf16.mxu0 0
    %622 = vmatpush1.bf16.xpose.msra.mxu0 0
    %623 = vmatprep.subr.bf16.mxu0 0
    %624 = vmatpush1.bf16.xpose.msra.mxu0 0
    %625 = vmatprep.subr.bf16.mxu0 0
    %626 = vmatpush1.bf16.xpose.msra.mxu0 0
    %627 = vmatprep.subr.bf16.mxu0 0
    %628 = vmatpush1.bf16.xpose.msra.mxu0 0
    %629 = vmatprep.subr.bf16.mxu0 0
    %630 = vmatpush1.bf16.xpose.msra.mxu0 0
    %631 = vmatprep.subr.bf16.mxu0 0
    %632 = vmatpush1.bf16.xpose.msra.mxu0 0
    %633 = vmatprep.subr.bf16.mxu0 0
    %634 = vmatpush1.bf16.xpose.msra.mxu0 0
    %635 = vmatprep.subr.bf16.mxu0 0
    %636 = vmatpush1.bf16.xpose.msra.mxu0 0
    %637 = vmatprep.subr.bf16.mxu0 0
    %638 = vmatpush1.bf16.xpose.msra.mxu0 0
    %639 = vmatprep.mubr.bf16.mxu0 0
    %640 = vmatmul.mubr.bf16.gmra.mrb[0].mxu0 %v602
    %v641 = vpop.f32.mrb[0].mxu0
    %v642 = vadd.f32 0.0, %v641
    %v643 = vpop.f32.mrb[0].mxu0
    %v644 = vpop.f32.mrb[0].mxu0
    %v645 = vadd.f32 0.0, %v644
    %v646 = vpop.f32.mrb[0].mxu0
    %647 = vdwg.mxu0
    %649 = vrot.lane.b32.xlu0 %v598, 64
    %v650 = vpop.permute.xlu0 %649
    %652 = vrot.lane.b32.xlu0 %v599, 96
    %v653 = vpop.permute.xlu0 %652
    %v655 = vsel %vm600, %v650, 0
    %v658 = vsel %vm600, %v653, 0
    %660 = vmatprep.subr.bf16.mxu0 0
    %661 = vmatpush1.bf16.xpose.msra.mxu0 %v658
    %662 = vmatprep.subr.bf16.mxu0 0
    %663 = vmatpush1.bf16.xpose.msra.mxu0 0
    %664 = vmatprep.subr.bf16.mxu0 0
    %665 = vmatpush1.bf16.xpose.msra.mxu0 0
    %666 = vmatprep.subr.bf16.mxu0 0
    %667 = vmatpush1.bf16.xpose.msra.mxu0 0
    %668 = vmatprep.subr.bf16.mxu0 0
    %669 = vmatpush1.bf16.xpose.msra.mxu0 0
    %670 = vmatprep.subr.bf16.mxu0 0
    %671 = vmatpush1.bf16.xpose.msra.mxu0 0
    %672 = vmatprep.subr.bf16.mxu0 0
    %673 = vmatpush1.bf16.xpose.msra.mxu0 0
    %674 = vmatprep.subr.bf16.mxu0 0
    %675 = vmatpush1.bf16.xpose.msra.mxu0 0
    %676 = vmatprep.subr.bf16.mxu0 0
    %677 = vmatpush1.bf16.xpose.msra.mxu0 0
    %678 = vmatprep.subr.bf16.mxu0 0
    %679 = vmatpush1.bf16.xpose.msra.mxu0 0
    %680 = vmatprep.subr.bf16.mxu0 0
    %681 = vmatpush1.bf16.xpose.msra.mxu0 0
    %682 = vmatprep.subr.bf16.mxu0 0
    %683 = vmatpush1.bf16.xpose.msra.mxu0 0
    %684 = vmatprep.subr.bf16.mxu0 0
    %685 = vmatpush1.bf16.xpose.msra.mxu0 0
    %686 = vmatprep.subr.bf16.mxu0 0
    %687 = vmatpush1.bf16.xpose.msra.mxu0 0
    %688 = vmatprep.subr.bf16.mxu0 0
    %689 = vmatpush1.bf16.xpose.msra.mxu0 0
    %690 = vmatprep.subr.bf16.mxu0 0
    %691 = vmatpush1.bf16.xpose.msra.mxu0 0
    %692 = vmatprep.mubr.bf16.mxu0 0
    %693 = vmatmul.mubr.bf16.gmra.mrb[0].mxu0 %v655
    %v694 = vpop.f32.mrb[0].mxu0
    %v695 = vadd.f32 0.0, %v694
    %v696 = vpop.f32.mrb[0].mxu0
    %v697 = vpop.f32.mrb[0].mxu0
    %v698 = vadd.f32 0.0, %v697
    %v699 = vpop.f32.mrb[0].mxu0
    %700 = vdwg.mxu0
    %702 = vrot.lane.b32.xlu0 %v590, 96
    %v703 = vpop.permute.xlu0 %702
    %v705 = vpack.c.bf16 %v703, %v590
    %v706 = vpack.c.bf16 %v592, %v592
    %v708 = vsel %vm600, %v705, 0
    %v711 = vsel %vm600, %v706, 0
    %713 = vmatprep.subr.bf16.mxu0 0
    %714 = vmatpush1.bf16.xpose.msra.mxu0 %v711
    %715 = vmatprep.subr.bf16.mxu0 0
    %716 = vmatpush1.bf16.xpose.msra.mxu0 0
    %717 = vmatprep.subr.bf16.mxu0 0
    %718 = vmatpush1.bf16.xpose.msra.mxu0 0
    %719 = vmatprep.subr.bf16.mxu0 0
    %720 = vmatpush1.bf16.xpose.msra.mxu0 0
    %721 = vmatprep.subr.bf16.mxu0 0
    %722 = vmatpush1.bf16.xpose.msra.mxu0 0
    %723 = vmatprep.subr.bf16.mxu0 0
    %724 = vmatpush1.bf16.xpose.msra.mxu0 0
    %725 = vmatprep.subr.bf16.mxu0 0
    %726 = vmatpush1.bf16.xpose.msra.mxu0 0
    %727 = vmatprep.subr.bf16.mxu0 0
    %728 = vmatpush1.bf16.xpose.msra.mxu0 0
    %729 = vmatprep.subr.bf16.mxu0 0
    %730 = vmatpush1.bf16.xpose.msra.mxu0 0
    %731 = vmatprep.subr.bf16.mxu0 0
    %732 = vmatpush1.bf16.xpose.msra.mxu0 0
    %733 = vmatprep.subr.bf16.mxu0 0
    %734 = vmatpush1.bf16.xpose.msra.mxu0 0
    %735 = vmatprep.subr.bf16.mxu0 0
    %736 = vmatpush1.bf16.xpose.msra.mxu0 0
    %737 = vmatprep.subr.bf16.mxu0 0
    %738 = vmatpush1.bf16.xpose.msra.mxu0 0
    %739 = vmatprep.subr.bf16.mxu0 0
    %740 = vmatpush1.bf16.xpose.msra.mxu0 0
    %741 = vmatprep.subr.bf16.mxu0 0
    %742 = vmatpush1.bf16.xpose.msra.mxu0 0
    %743 = vmatprep.subr.bf16.mxu0 0
    %744 = vmatpush1.bf16.xpose.msra.mxu0 0
    %745 = vmatprep.mubr.bf16.mxu0 0
    %746 = vmatmul.mubr.bf16.gmra.mrb[0].mxu0 %v708
    %v747 = vpop.f32.mrb[0].mxu0
    %v748 = vadd.f32 0.0, %v747
    %v749 = vpop.f32.mrb[0].mxu0
    %v750 = vpop.f32.mrb[0].mxu0
    %v751 = vadd.f32 0.0, %v750
    %v752 = vpop.f32.mrb[0].mxu0
    %753 = vdwg.mxu0
    %755 = vrot.lane.b32.xlu0 %v705, 64
    %v756 = vpop.permute.xlu0 %755
    %758 = vrot.lane.b32.xlu0 %v706, 96
    %v759 = vpop.permute.xlu0 %758
    %v761 = vsel %vm600, %v756, 0
    %v764 = vsel %vm600, %v759, 0
    %766 = vmatprep.subr.bf16.mxu0 0
    %767 = vmatpush1.bf16.xpose.msra.mxu0 %v764
    %768 = vmatprep.subr.bf16.mxu0 0
    %769 = vmatpush1.bf16.xpose.msra.mxu0 0
    %770 = vmatprep.subr.bf16.mxu0 0
    %771 = vmatpush1.bf16.xpose.msra.mxu0 0
    %772 = vmatprep.subr.bf16.mxu0 0
    %773 = vmatpush1.bf16.xpose.msra.mxu0 0
    %774 = vmatprep.subr.bf16.mxu0 0
    %775 = vmatpush1.bf16.xpose.msra.mxu0 0
    %776 = vmatprep.subr.bf16.mxu0 0
    %777 = vmatpush1.bf16.xpose.msra.mxu0 0
    %778 = vmatprep.subr.bf16.mxu0 0
    %779 = vmatpush1.bf16.xpose.msra.mxu0 0
    %780 = vmatprep.subr.bf16.mxu0 0
    %781 = vmatpush1.bf16.xpose.msra.mxu0 0
    %782 = vmatprep.subr.bf16.mxu0 0
    %783 = vmatpush1.bf16.xpose.msra.mxu0 0
    %784 = vmatprep.subr.bf16.mxu0 0
    %785 = vmatpush1.bf16.xpose.msra.mxu0 0
    %786 = vmatprep.subr.bf16.mxu0 0
    %787 = vmatpush1.bf16.xpose.msra.mxu0 0
    %788 = vmatprep.subr.bf16.mxu0 0
    %789 = vmatpush1.bf16.xpose.msra.mxu0 0
    %790 = vmatprep.subr.bf16.mxu0 0
    %791 = vmatpush1.bf16.xpose.msra.mxu0 0
    %792 = vmatprep.subr.bf16.mxu0 0
    %793 = vmatpush1.bf16.xpose.msra.mxu0 0
    %794 = vmatprep.subr.bf16.mxu0 0
    %795 = vmatpush1.bf16.xpose.msra.mxu0 0
    %796 = vmatprep.subr.bf16.mxu0 0
    %797 = vmatpush1.bf16.xpose.msra.mxu0 0
    %798 = vmatprep.mubr.bf16.mxu0 0
    %799 = vmatmul.mubr.bf16.gmra.mrb[0].mxu0 %v761
    %v800 = vpop.f32.mrb[0].mxu0
    %v801 = vadd.f32 0.0, %v800
    %v802 = vpop.f32.mrb[0].mxu0
    %v803 = vpop.f32.mrb[0].mxu0
    %v804 = vadd.f32 0.0, %v803
    %v805 = vpop.f32.mrb[0].mxu0
    %806 = vdwg.mxu0
    %v807 = vadd.f32 %v642, %v247
    %v808 = vadd.f32 %v645, %v248
    %v809 = vadd.f32 %v695, %v249
    %v810 = vadd.f32 %v698, %v250
    %v811 = vadd.f32 %v748, %v251
    %v812 = vadd.f32 %v751, %v252
    %v813 = vadd.f32 %v801, %v253
    %v814 = vadd.f32 %v804, %v254
    %vm815 = vcmask 64512
    %v816 = vsel %vm815, %v807, -inf
    %817 = vmax.xlane.f32.xlu0 %v816
    %v818 = vpop.xlane.xlu0 %817
    %v819 = vsel %vm815, %v808, -inf
    %820 = vmax.xlane.f32.xlu0 %v819
    %v821 = vpop.xlane.xlu0 %820
    %v822 = vsel %vm815, %v809, -inf
    %823 = vmax.xlane.f32.xlu0 %v822
    %v824 = vpop.xlane.xlu0 %823
    %v825 = vsel %vm815, %v810, -inf
    %826 = vmax.xlane.f32.xlu0 %v825
    %v827 = vpop.xlane.xlu0 %826
    %v828 = vsel %vm815, %v811, -inf
    %829 = vmax.xlane.f32.xlu0 %v828
    %v830 = vpop.xlane.xlu0 %829
    %v831 = vsel %vm815, %v812, -inf
    %832 = vmax.xlane.f32.xlu0 %v831
    %v833 = vpop.xlane.xlu0 %832
    %v834 = vsel %vm815, %v813, -inf
    %835 = vmax.xlane.f32.xlu0 %v834
    %v836 = vpop.xlane.xlu0 %835
    %v837 = vsel %vm815, %v814, -inf
    %838 = vmax.xlane.f32.xlu0 %v837
    %v839 = vpop.xlane.xlu0 %838
    %v840 = vsub.f32 %v807, %v818
    %v841 = vsub.f32 %v808, %v821
    %v842 = vsub.f32 %v809, %v824
    %v843 = vsub.f32 %v810, %v827
    %v844 = vsub.f32 %v811, %v830
    %v845 = vsub.f32 %v812, %v833
    %v846 = vsub.f32 %v813, %v836
    %v847 = vsub.f32 %v814, %v839
    %v848 = vmul.f32 %v840, 1.442695
    %v849 = vpow.pop %v848
    %v850 = vmul.f32 %v841, 1.442695
    %v851 = vpow.pop %v850
    %v852 = vmul.f32 %v842, 1.442695
    %v853 = vpow.pop %v852
    %v854 = vmul.f32 %v843, 1.442695
    %v855 = vpow.pop %v854
    %v856 = vmul.f32 %v844, 1.442695
    %v857 = vpow.pop %v856
    %v858 = vmul.f32 %v845, 1.442695
    %v859 = vpow.pop %v858
    %v860 = vmul.f32 %v846, 1.442695
    %v861 = vpow.pop %v860
    %v862 = vmul.f32 %v847, 1.442695
    %v863 = vpow.pop %v862
    %v864 = vsel %vm815, %v849, 0.0
    %865 = vadd.xlane.f32.xlu0 %v864
    %v866 = vpop.xlane.xlu0 %865
    %v867 = vsel %vm815, %v851, 0.0
    %868 = vadd.xlane.f32.xlu0 %v867
    %v869 = vpop.xlane.xlu0 %868
    %v870 = vsel %vm815, %v853, 0.0
    %871 = vadd.xlane.f32.xlu0 %v870
    %v872 = vpop.xlane.xlu0 %871
    %v873 = vsel %vm815, %v855, 0.0
    %874 = vadd.xlane.f32.xlu0 %v873
    %v875 = vpop.xlane.xlu0 %874
    %v876 = vsel %vm815, %v857, 0.0
    %877 = vadd.xlane.f32.xlu0 %v876
    %v878 = vpop.xlane.xlu0 %877
    %v879 = vsel %vm815, %v859, 0.0
    %880 = vadd.xlane.f32.xlu0 %v879
    %v881 = vpop.xlane.xlu0 %880
    %v882 = vsel %vm815, %v861, 0.0
    %883 = vadd.xlane.f32.xlu0 %v882
    %v884 = vpop.xlane.xlu0 %883
    %v885 = vsel %vm815, %v863, 0.0
    %886 = vadd.xlane.f32.xlu0 %v885
    %v887 = vpop.xlane.xlu0 %886
    %v888 = vrcp.pop %v866
    %v889 = vrcp.pop %v869
    %v890 = vrcp.pop %v872
    %v891 = vrcp.pop %v875
    %v892 = vrcp.pop %v878
    %v893 = vrcp.pop %v881
    %v894 = vrcp.pop %v884
    %v895 = vrcp.pop %v887
    %v896 = vmul.f32 %v849, %v888
    %v897 = vmul.f32 %v851, %v889
    %v898 = vmul.f32 %v853, %v890
    %v899 = vmul.f32 %v855, %v891
    %v900 = vmul.f32 %v857, %v892
    %v901 = vmul.f32 %v859, %v893
    %v902 = vmul.f32 %v861, %v894
    %v903 = vmul.f32 %v863, %v895
    %v904 = vpack.c.bf16 %v897, %v896
    %v905 = vpack.c.bf16 %v899, %v898
    %v906 = vpack.c.bf16 %v901, %v900
    %v907 = vpack.c.bf16 %v903, %v902
    %908 = vrot.lane.b32.xlu0 %v599, 64
    %v909 = vpop.permute.xlu0 %908
    %v911 = vsel %vm815, %v904, 0
    %vm913 = vcmask 1043456
    %v915 = vsel %vm913, %v909, 0
    %917 = vmatprep.subr.bf16.mxu0 0
    %918 = vmatpush1.bf16.msra.mxu0 %v915
    %919 = vmatprep.subr.bf16.mxu0 0
    %920 = vmatpush1.bf16.msra.mxu0 0
    %921 = vmatprep.subr.bf16.mxu0 0
    %922 = vmatpush1.bf16.msra.mxu0 0
    %923 = vmatprep.subr.bf16.mxu0 0
    %924 = vmatpush1.bf16.msra.mxu0 0
    %925 = vmatprep.subr.bf16.mxu0 0
    %926 = vmatpush1.bf16.msra.mxu0 0
    %927 = vmatprep.subr.bf16.mxu0 0
    %928 = vmatpush1.bf16.msra.mxu0 0
    %929 = vmatprep.subr.bf16.mxu0 0
    %930 = vmatpush1.bf16.msra.mxu0 0
    %931 = vmatprep.subr.bf16.mxu0 0
    %932 = vmatpush1.bf16.msra.mxu0 0
    %933 = vmatprep.subr.bf16.mxu0 0
    %934 = vmatpush1.bf16.msra.mxu0 0
    %935 = vmatprep.subr.bf16.mxu0 0
    %936 = vmatpush1.bf16.msra.mxu0 0
    %937 = vmatprep.subr.bf16.mxu0 0
    %938 = vmatpush1.bf16.msra.mxu0 0
    %939 = vmatprep.subr.bf16.mxu0 0
    %940 = vmatpush1.bf16.msra.mxu0 0
    %941 = vmatprep.subr.bf16.mxu0 0
    %942 = vmatpush1.bf16.msra.mxu0 0
    %943 = vmatprep.subr.bf16.mxu0 0
    %944 = vmatpush1.bf16.msra.mxu0 0
    %945 = vmatprep.subr.bf16.mxu0 0
    %946 = vmatpush1.bf16.msra.mxu0 0
    %947 = vmatprep.subr.bf16.mxu0 0
    %948 = vmatpush1.bf16.msra.mxu0 0
    %949 = vmatprep.mubr.bf16.mxu0 0
    %950 = vmatmul.mubr.bf16.gmra.mrb[0].mxu0 %v911
    %v951 = vpop.f32.mrb[0].mxu0
    %v952 = vadd.f32 0.0, %v951
    %v953 = vpop.f32.mrb[0].mxu0
    %v954 = vpop.f32.mrb[0].mxu0
    %v955 = vadd.f32 0.0, %v954
    %v956 = vpop.f32.mrb[0].mxu0
    %957 = vdwg.mxu0
    %958 = vst.msk [vmem:[#allocation2] sm:$0xff] %vm600, %v952
    %960 = vrot.lane.b32.xlu0 %v955, 32
    %v961 = vpop.permute.xlu0 %960
    %vm963 = vcmask 523520
    %964 = vst.msk [vmem:[#allocation2] sm:$0xff] %vm963, %v961
    %965 = vrot.lane.b32.xlu0 %v599, 32
    %v966 = vpop.permute.xlu0 %965
    %v968 = vsel %vm815, %v905, 0
    %v971 = vsel %vm913, %v966, 0
    %973 = vmatprep.subr.bf16.mxu0 0
    %974 = vmatpush1.bf16.msra.mxu0 %v971
    %975 = vmatprep.subr.bf16.mxu0 0
    %976 = vmatpush1.bf16.msra.mxu0 0
    %977 = vmatprep.subr.bf16.mxu0 0
    %978 = vmatpush1.bf16.msra.mxu0 0
    %979 = vmatprep.subr.bf16.mxu0 0
    %980 = vmatpush1.bf16.msra.mxu0 0
    %981 = vmatprep.subr.bf16.mxu0 0
    %982 = vmatpush1.bf16.msra.mxu0 0
    %983 = vmatprep.subr.bf16.mxu0 0
    %984 = vmatpush1.bf16.msra.mxu0 0
    %985 = vmatprep.subr.bf16.mxu0 0
    %986 = vmatpush1.bf16.msra.mxu0 0
    %987 = vmatprep.subr.bf16.mxu0 0
    %988 = vmatpush1.bf16.msra.mxu0 0
    %989 = vmatprep.subr.bf16.mxu0 0
    %990 = vmatpush1.bf16.msra.mxu0 0
    %991 = vmatprep.subr.bf16.mxu0 0
    %992 = vmatpush1.bf16.msra.mxu0 0
    %993 = vmatprep.subr.bf16.mxu0 0
    %994 = vmatpush1.bf16.msra.mxu0 0
    %995 = vmatprep.subr.bf16.mxu0 0
    %996 = vmatpush1.bf16.msra.mxu0 0
    %997 = vmatprep.subr.bf16.mxu0 0
    %998 = vmatpush1.bf16.msra.mxu0 0
    %999 = vmatprep.subr.bf16.mxu0 0
    %1000 = vmatpush1.bf16.msra.mxu0 0
    %1001 = vmatprep.subr.bf16.mxu0 0
    %1002 = vmatpush1.bf16.msra.mxu0 0
    %1003 = vmatprep.subr.bf16.mxu0 0
    %1004 = vmatpush1.bf16.msra.mxu0 0
    %1005 = vmatprep.mubr.bf16.mxu0 0
    %1006 = vmatmul.mubr.bf16.gmra.mrb[0].mxu0 %v968
    %v1007 = vpop.f32.mrb[0].mxu0
    %v1008 = vadd.f32 0.0, %v1007
    %v1009 = vpop.f32.mrb[0].mxu0
    %v1010 = vpop.f32.mrb[0].mxu0
    %v1011 = vadd.f32 0.0, %v1010
    %v1012 = vpop.f32.mrb[0].mxu0
    %1013 = vdwg.mxu0
    %1015 = vrot.lane.b32.xlu0 %v1008, 64
    %v1016 = vpop.permute.xlu0 %1015
    %vm1018 = vcmask 785920
    %1019 = vst.msk [vmem:[#allocation2] sm:$0xff] %vm1018, %v1016
    %1021 = vrot.lane.b32.xlu0 %v1011, 96
    %v1022 = vpop.permute.xlu0 %1021
    %vm1024 = vcmask 1048320
    %1025 = vst.msk [vmem:[#allocation2] sm:$0xff] %vm1024, %v1022
    %1026 = vrot.lane.b32.xlu0 %v706, 64
    %v1027 = vpop.permute.xlu0 %1026
    %v1029 = vsel %vm815, %v906, 0
    %v1032 = vsel %vm913, %v1027, 0
    %1034 = vmatprep.subr.bf16.mxu0 0
    %1035 = vmatpush1.bf16.msra.mxu0 %v1032
    %1036 = vmatprep.subr.bf16.mxu0 0
    %1037 = vmatpush1.bf16.msra.mxu0 0
    %1038 = vmatprep.subr.bf16.mxu0 0
    %1039 = vmatpush1.bf16.msra.mxu0 0
    %1040 = vmatprep.subr.bf16.mxu0 0
    %1041 = vmatpush1.bf16.msra.mxu0 0
    %1042 = vmatprep.subr.bf16.mxu0 0
    %1043 = vmatpush1.bf16.msra.mxu0 0
    %1044 = vmatprep.subr.bf16.mxu0 0
    %1045 = vmatpush1.bf16.msra.mxu0 0
    %1046 = vmatprep.subr.bf16.mxu0 0
    %1047 = vmatpush1.bf16.msra.mxu0 0
    %1048 = vmatprep.subr.bf16.mxu0 0
    %1049 = vmatpush1.bf16.msra.mxu0 0
    %1050 = vmatprep.subr.bf16.mxu0 0
    %1051 = vmatpush1.bf16.msra.mxu0 0
    %1052 = vmatprep.subr.bf16.mxu0 0
    %1053 = vmatpush1.bf16.msra.mxu0 0
    %1054 = vmatprep.subr.bf16.mxu0 0
    %1055 = vmatpush1.bf16.msra.mxu0 0
    %1056 = vmatprep.subr.bf16.mxu0 0
    %1057 = vmatpush1.bf16.msra.mxu0 0
    %1058 = vmatprep.subr.bf16.mxu0 0
    %1059 = vmatpush1.bf16.msra.mxu0 0
    %1060 = vmatprep.subr.bf16.mxu0 0
    %1061 = vmatpush1.bf16.msra.mxu0 0
    %1062 = vmatprep.subr.bf16.mxu0 0
    %1063 = vmatpush1.bf16.msra.mxu0 0
    %1064 = vmatprep.subr.bf16.mxu0 0
    %1065 = vmatpush1.bf16.msra.mxu0 0
    %1066 = vmatprep.mubr.bf16.mxu0 0
    %1067 = vmatmul.mubr.bf16.gmra.mrb[0].mxu0 %v1029
    %v1068 = vpop.f32.mrb[0].mxu0
    %v1069 = vadd.f32 0.0, %v1068
    %v1070 = vpop.f32.mrb[0].mxu0
    %v1071 = vpop.f32.mrb[0].mxu0
    %v1072 = vadd.f32 0.0, %v1071
    %v1073 = vpop.f32.mrb[0].mxu0
    %1074 = vdwg.mxu0
    %1075 = vst.msk [vmem:[#allocation2 + $0x8] sm:$0xff] %vm600, %v1069
    %1077 = vrot.lane.b32.xlu0 %v1072, 32
    %v1078 = vpop.permute.xlu0 %1077
    %1080 = vst.msk [vmem:[#allocation2 + $0x8] sm:$0xff] %vm963, %v1078
    %1081 = vrot.lane.b32.xlu0 %v706, 32
    %v1082 = vpop.permute.xlu0 %1081
    %v1084 = vsel %vm815, %v907, 0
    %v1087 = vsel %vm913, %v1082, 0
    %1089 = vmatprep.subr.bf16.mxu0 0
    %1090 = vmatpush1.bf16.msra.mxu0 %v1087
    %1091 = vmatprep.subr.bf16.mxu0 0
    %1092 = vmatpush1.bf16.msra.mxu0 0
    %1093 = vmatprep.subr.bf16.mxu0 0
    %1094 = vmatpush1.bf16.msra.mxu0 0
    %1095 = vmatprep.subr.bf16.mxu0 0
    %1096 = vmatpush1.bf16.msra.mxu0 0
    %1097 = vmatprep.subr.bf16.mxu0 0
    %1098 = vmatpush1.bf16.msra.mxu0 0
    %1099 = vmatprep.subr.bf16.mxu0 0
    %1100 = vmatpush1.bf16.msra.mxu0 0
    %1101 = vmatprep.subr.bf16.mxu0 0
    %1102 = vmatpush1.bf16.msra.mxu0 0
    %1103 = vmatprep.subr.bf16.mxu0 0
    %1104 = vmatpush1.bf16.msra.mxu0 0
    %1105 = vmatprep.subr.bf16.mxu0 0
    %1106 = vmatpush1.bf16.msra.mxu0 0
    %1107 = vmatprep.subr.bf16.mxu0 0
    %1108 = vmatpush1.bf16.msra.mxu0 0
    %1109 = vmatprep.subr.bf16.mxu0 0
    %1110 = vmatpush1.bf16.msra.mxu0 0
    %1111 = vmatprep.subr.bf16.mxu0 0
    %1112 = vmatpush1.bf16.msra.mxu0 0
    %1113 = vmatprep.subr.bf16.mxu0 0
    %1114 = vmatpush1.bf16.msra.mxu0 0
    %1115 = vmatprep.subr.bf16.mxu0 0
    %1116 = vmatpush1.bf16.msra.mxu0 0
    %1117 = vmatprep.subr.bf16.mxu0 0
    %1118 = vmatpush1.bf16.msra.mxu0 0
    %1119 = vmatprep.subr.bf16.mxu0 0
    %1120 = vmatpush1.bf16.msra.mxu0 0
    %1121 = vmatprep.mubr.bf16.mxu0 0
    %1122 = vmatmul.mubr.bf16.gmra.mrb[0].mxu0 %v1084
    %v1123 = vpop.f32.mrb[0].mxu0
    %v1124 = vadd.f32 0.0, %v1123
    %v1125 = vpop.f32.mrb[0].mxu0
    %v1126 = vpop.f32.mrb[0].mxu0
    %v1127 = vadd.f32 0.0, %v1126
    %v1128 = vpop.f32.mrb[0].mxu0
    %1129 = vdwg.mxu0
    %1131 = vrot.lane.b32.xlu0 %v1124, 64
    %v1132 = vpop.permute.xlu0 %1131
    %1134 = vst.msk [vmem:[#allocation2 + $0x8] sm:$0xff] %vm1018, %v1132
    %1136 = vrot.lane.b32.xlu0 %v1127, 96
    %v1137 = vpop.permute.xlu0 %1136
    %1139 = vst.msk [vmem:[#allocation2 + $0x8] sm:$0xff] %vm1024, %v1137
    %v1140 = vld [vmem:[#allocation2] sm:$0xff]
    %v1141 = vld [vmem:[#allocation2 + $0x8] sm:$0xff]
    %v1142 = vld [vmem:[#allocation11] sm:$0xf]
    %v1143 = vld [vmem:[#allocation11 + $0x4] sm:$0xf]
    %v1144 = vld [vmem:[#allocation11 + $0x8] sm:$0xf]
    %v1145 = vld [vmem:[#allocation11 + $0xc] sm:$0xf]
    %v1146 = vld [vmem:[#allocation11 + $0x10] sm:$0xf]
    %v1147 = vld [vmem:[#allocation11 + $0x14] sm:$0xf]
    %v1148 = vld [vmem:[#allocation11 + $0x18] sm:$0xf]
    %v1149 = vld [vmem:[#allocation11 + $0x1c] sm:$0xf]
    %v1150 = vld [vmem:[#allocation11 + $0x20] sm:$0xf]
    %v1151 = vld [vmem:[#allocation11 + $0x24] sm:$0xf]
    %v1152 = vld [vmem:[#allocation11 + $0x28] sm:$0xf]
    %v1153 = vld [vmem:[#allocation11 + $0x2c] sm:$0xf]
    %v1154 = vld [vmem:[#allocation11 + $0x30] sm:$0xf]
    %v1155 = vld [vmem:[#allocation11 + $0x34] sm:$0xf]
    %v1156 = vld [vmem:[#allocation11 + $0x38] sm:$0xf]
    %v1157 = vld [vmem:[#allocation11 + $0x3c] sm:$0xf]
    %v1158 = vpack.c.bf16 %v1141, %v1140
    %v1175 = vunpack.c.l.b16 %v1142
    %v1176 = vunpack.c.l.b16 %v1143
    %v1177 = vunpack.c.l.b16 %v1144
    %v1178 = vunpack.c.l.b16 %v1145
    %v1179 = vunpack.c.l.b16 %v1146
    %v1180 = vunpack.c.l.b16 %v1147
    %v1181 = vunpack.c.l.b16 %v1148
    %v1182 = vunpack.c.l.b16 %v1149
    %v1183 = vunpack.c.l.b16 %v1150
    %v1184 = vunpack.c.l.b16 %v1151
    %v1185 = vunpack.c.l.b16 %v1152
    %v1186 = vunpack.c.l.b16 %v1153
    %v1187 = vunpack.c.l.b16 %v1154
    %v1188 = vunpack.c.l.b16 %v1155
    %v1189 = vunpack.c.l.b16 %v1156
    %v1190 = vunpack.c.l.b16 %v1157
    %v1191 = vpack.c.b16 %v1176, %v1175
    %v1192 = vpack.c.b16 %v1178, %v1177
    %v1193 = vpack.c.b16 %v1180, %v1179
    %v1194 = vpack.c.b16 %v1182, %v1181
    %v1195 = vpack.c.b16 %v1184, %v1183
    %v1196 = vpack.c.b16 %v1186, %v1185
    %v1197 = vpack.c.b16 %v1188, %v1187
    %v1198 = vpack.c.b16 %v1190, %v1189
    %1207 = vmatprep.subr.bf16.mxu0 0
    %1208 = vmatpush1.bf16.msra.mxu0 %v1191
    %1209 = vmatprep.subr.bf16.mxu0 0
    %1210 = vmatpush1.bf16.msra.mxu0 %v1192
    %1211 = vmatprep.subr.bf16.mxu0 0
    %1212 = vmatpush1.bf16.msra.mxu0 %v1193
    %1213 = vmatprep.subr.bf16.mxu0 0
    %1214 = vmatpush1.bf16.msra.mxu0 %v1194
    %1215 = vmatprep.subr.bf16.mxu0 0
    %1216 = vmatpush1.bf16.msra.mxu0 %v1195
    %1217 = vmatprep.subr.bf16.mxu0 0
    %1218 = vmatpush1.bf16.msra.mxu0 %v1196
    %1219 = vmatprep.subr.bf16.mxu0 0
    %1220 = vmatpush1.bf16.msra.mxu0 %v1197
    %1221 = vmatprep.subr.bf16.mxu0 0
    %1222 = vmatpush1.bf16.msra.mxu0 %v1198
    %1223 = vmatprep.subr.bf16.mxu0 0
    %1224 = vmatpush1.bf16.msra.mxu0 0
    %1225 = vmatprep.subr.bf16.mxu0 0
    %1226 = vmatpush1.bf16.msra.mxu0 0
    %1227 = vmatprep.subr.bf16.mxu0 0
    %1228 = vmatpush1.bf16.msra.mxu0 0
    %1229 = vmatprep.subr.bf16.mxu0 0
    %1230 = vmatpush1.bf16.msra.mxu0 0
    %1231 = vmatprep.subr.bf16.mxu0 0
    %1232 = vmatpush1.bf16.msra.mxu0 0
    %1233 = vmatprep.subr.bf16.mxu0 0
    %1234 = vmatpush1.bf16.msra.mxu0 0
    %1235 = vmatprep.subr.bf16.mxu0 0
    %1236 = vmatpush1.bf16.msra.mxu0 0
    %1237 = vmatprep.subr.bf16.mxu0 0
    %1238 = vmatpush1.bf16.msra.mxu0 0
    %1239 = vmatprep.mubr.bf16.mxu0 0
    %1240 = vmatmul.mubr.bf16.gmra.mrb[0].mxu0 %v1158
    %v1241 = vpop.f32.mrb[0].mxu0
    %v1242 = vadd.f32 0.0, %v1241
    %v1243 = vpop.f32.mrb[0].mxu0
    %v1244 = vpop.f32.mrb[0].mxu0
    %v1245 = vadd.f32 0.0, %v1244
    %v1246 = vpop.f32.mrb[0].mxu0
    %1247 = vdwg.mxu0
    %v1248 = vadd.f32 %v424, %v1242
    %v1249 = vadd.f32 %v427, %v1245
    %v1250 = vld [vmem:[%s7] sm:$0x1]
    %v1251 = vmul.f32 %v1248, %v1248
    %v1252 = vmul.f32 %v1249, %v1249
    %1253 = vadd.xlane.f32.xlu0 %v1251
    %v1254 = vpop.xlane.xlu0 %1253
    %1255 = vadd.xlane.f32.xlu0 %v1252
    %v1256 = vpop.xlane.xlu0 %1255
    %v1257 = vmul.f32 %v1254, %v437
    %v1258 = vmul.f32 %v1256, %v437
    %v1259 = vadd.f32 %v1257, 1e-06
    %v1260 = vadd.f32 %v1258, 1e-06
    %v1261 = vrsqrt.pop %v1259
    %v1262 = vrsqrt.pop %v1260
    %v1263 = vmul.f32 %v1248, %v1261
    %v1264 = vmul.f32 %v1249, %v1262
    %v1266 = vlaneseq
    %v1267 = vshrl.u32 %v1266, 7
    %v1268 = vsub.s32 0, %v1267
    %v1269 = vrot.slane %v1250, %v1268
    %v1271 = vmul.f32 %v1263, %v1269
    %v1272 = vmul.f32 %v1264, %v1269
    %v1273 = vld [vmem:[#allocation12] sm:$0xff]
    %v1274 = vld [vmem:[#allocation12 + $0x8] sm:$0xff]
    %v1275 = vld [vmem:[#allocation12 + $0x10] sm:$0xff]
    %v1276 = vld [vmem:[#allocation12 + $0x18] sm:$0xff]
    %v1277 = vld [vmem:[#allocation12 + $0x20] sm:$0xff]
    %v1278 = vld [vmem:[#allocation12 + $0x28] sm:$0xff]
    %v1279 = vld [vmem:[#allocation12 + $0x30] sm:$0xff]
    %v1280 = vld [vmem:[#allocation12 + $0x38] sm:$0xff]
    %v1281 = vld [vmem:[#allocation12 + $0x40] sm:$0xff]
    %v1282 = vld [vmem:[#allocation12 + $0x48] sm:$0xff]
    %v1283 = vld [vmem:[#allocation12 + $0x50] sm:$0xff]
    %v1284 = vld [vmem:[#allocation12 + $0x58] sm:$0xff]
    %v1285 = vld [vmem:[#allocation12 + $0x60] sm:$0xff]
    %v1286 = vld [vmem:[#allocation12 + $0x68] sm:$0xff]
    %v1287 = vld [vmem:[#allocation12 + $0x70] sm:$0xff]
    %v1288 = vld [vmem:[#allocation12 + $0x78] sm:$0xff]
    %v1289 = vpack.c.bf16 %v1272, %v1271
    %v1306 = vunpack.c.l.b16 %v1273
    %v1307 = vunpack.c.h.b16 %v1273
    %v1308 = vunpack.c.l.b16 %v1274
    %v1309 = vunpack.c.h.b16 %v1274
    %v1310 = vunpack.c.l.b16 %v1275
    %v1311 = vunpack.c.h.b16 %v1275
    %v1312 = vunpack.c.l.b16 %v1276
    %v1313 = vunpack.c.h.b16 %v1276
    %v1314 = vunpack.c.l.b16 %v1277
    %v1315 = vunpack.c.h.b16 %v1277
    %v1316 = vunpack.c.l.b16 %v1278
    %v1317 = vunpack.c.h.b16 %v1278
    %v1318 = vunpack.c.l.b16 %v1279
    %v1319 = vunpack.c.h.b16 %v1279
    %v1320 = vunpack.c.l.b16 %v1280
    %v1321 = vunpack.c.h.b16 %v1280
    %v1322 = vunpack.c.l.b16 %v1281
    %v1323 = vunpack.c.h.b16 %v1281
    %v1324 = vunpack.c.l.b16 %v1282
    %v1325 = vunpack.c.h.b16 %v1282
    %v1326 = vunpack.c.l.b16 %v1283
    %v1327 = vunpack.c.h.b16 %v1283
    %v1328 = vunpack.c.l.b16 %v1284
    %v1329 = vunpack.c.h.b16 %v1284
    %v1330 = vunpack.c.l.b16 %v1285
    %v1331 = vunpack.c.h.b16 %v1285
    %v1332 = vunpack.c.l.b16 %v1286
    %v1333 = vunpack.c.h.b16 %v1286
    %v1334 = vunpack.c.l.b16 %v1287
    %v1335 = vunpack.c.h.b16 %v1287
    %v1336 = vunpack.c.l.b16 %v1288
    %v1337 = vunpack.c.h.b16 %v1288
    %v1338 = vpack.c.b16 %v1308, %v1306
    %v1339 = vpack.c.b16 %v1309, %v1307
    %v1340 = vpack.c.b16 %v1312, %v1310
    %v1341 = vpack.c.b16 %v1313, %v1311
    %v1342 = vpack.c.b16 %v1316, %v1314
    %v1343 = vpack.c.b16 %v1317, %v1315
    %v1344 = vpack.c.b16 %v1320, %v1318
    %v1345 = vpack.c.b16 %v1321, %v1319
    %v1346 = vpack.c.b16 %v1324, %v1322
    %v1347 = vpack.c.b16 %v1325, %v1323
    %v1348 = vpack.c.b16 %v1328, %v1326
    %v1349 = vpack.c.b16 %v1329, %v1327
    %v1350 = vpack.c.b16 %v1332, %v1330
    %v1351 = vpack.c.b16 %v1333, %v1331
    %v1352 = vpack.c.b16 %v1336, %v1334
    %v1353 = vpack.c.b16 %v1337, %v1335
    %1370 = vmatprep.subr.bf16.mxu0 %v1339
    %1371 = vmatpush1.bf16.msra.mxu0 %v1338
    %1372 = vmatprep.subr.bf16.mxu0 %v1341
    %1373 = vmatpush1.bf16.msra.mxu0 %v1340
    %1374 = vmatprep.subr.bf16.mxu0 %v1343
    %1375 = vmatpush1.bf16.msra.mxu0 %v1342
    %1376 = vmatprep.subr.bf16.mxu0 %v1345
    %1377 = vmatpush1.bf16.msra.mxu0 %v1344
    %1378 = vmatprep.subr.bf16.mxu0 %v1347
    %1379 = vmatpush1.bf16.msra.mxu0 %v1346
    %1380 = vmatprep.subr.bf16.mxu0 %v1349
    %1381 = vmatpush1.bf16.msra.mxu0 %v1348
    %1382 = vmatprep.subr.bf16.mxu0 %v1351
    %1383 = vmatpush1.bf16.msra.mxu0 %v1350
    %1384 = vmatprep.subr.bf16.mxu0 %v1353
    %1385 = vmatpush1.bf16.msra.mxu0 %v1352
    %1386 = vmatprep.subr.bf16.mxu0 0
    %1387 = vmatpush1.bf16.msra.mxu0 0
    %1388 = vmatprep.subr.bf16.mxu0 0
    %1389 = vmatpush1.bf16.msra.mxu0 0
    %1390 = vmatprep.subr.bf16.mxu0 0
    %1391 = vmatpush1.bf16.msra.mxu0 0
    %1392 = vmatprep.subr.bf16.mxu0 0
    %1393 = vmatpush1.bf16.msra.mxu0 0
    %1394 = vmatprep.subr.bf16.mxu0 0
    %1395 = vmatpush1.bf16.msra.mxu0 0
    %1396 = vmatprep.subr.bf16.mxu0 0
    %1397 = vmatpush1.bf16.msra.mxu0 0
    %1398 = vmatprep.subr.bf16.mxu0 0
    %1399 = vmatpush1.bf16.msra.mxu0 0
    %1400 = vmatprep.subr.bf16.mxu0 0
    %1401 = vmatpush1.bf16.msra.mxu0 0
    %1402 = vmatprep.mubr.bf16.mxu0 0
    %1403 = vmatmul.mubr.bf16.gmra.mrb[0].mxu0 %v1289
    %v1404 = vpop.f32.mrb[0].mxu0
    %v1405 = vadd.f32 0.0, %v1404
    %v1406 = vpop.f32.mrb[0].mxu0
    %v1407 = vadd.f32 0.0, %v1406
    %v1408 = vpop.f32.mrb[0].mxu0
    %v1409 = vadd.f32 0.0, %v1408
    %v1410 = vpop.f32.mrb[0].mxu0
    %v1411 = vadd.f32 0.0, %v1410
    %1412 = vdwg.mxu0
    %v1413 = vxor.u32 %v1405, 2147483648
    %v1414 = vxor.u32 %v1407, 2147483648
    %v1415 = vxor.u32 %v1409, 2147483648
    %v1416 = vxor.u32 %v1411, 2147483648
    %v1417 = vmul.f32 %v1413, 1.442695
    %v1418 = vpow.pop %v1417
    %v1419 = vmul.f32 %v1414, 1.442695
    %v1420 = vpow.pop %v1419
    %v1421 = vmul.f32 %v1415, 1.442695
    %v1422 = vpow.pop %v1421
    %v1423 = vmul.f32 %v1416, 1.442695
    %v1424 = vpow.pop %v1423
    %v1425 = vadd.f32 %v1418, 1.0
    %v1426 = vadd.f32 %v1420, 1.0
    %v1427 = vadd.f32 %v1422, 1.0
    %v1428 = vadd.f32 %v1424, 1.0
    %v1429 = vrcp.pop %v1425
    %v1430 = vmul.f32 1.0, %v1429
    %v1431 = vrcp.pop %v1426
    %v1432 = vmul.f32 1.0, %v1431
    %v1433 = vrcp.pop %v1427
    %v1434 = vmul.f32 1.0, %v1433
    %v1435 = vrcp.pop %v1428
    %v1436 = vmul.f32 1.0, %v1435
    %v1437 = vmul.f32 %v1405, %v1430
    %v1438 = vmul.f32 %v1407, %v1432
    %v1439 = vmul.f32 %v1409, %v1434
    %v1440 = vmul.f32 %v1411, %v1436
    %v1441 = vld [vmem:[#allocation14] sm:$0xf]
    %v1442 = vld [vmem:[#allocation14 + $0x4] sm:$0xf]
    %v1443 = vld [vmem:[#allocation14 + $0x8] sm:$0xf]
    %v1444 = vld [vmem:[#allocation14 + $0xc] sm:$0xf]
    %v1445 = vld [vmem:[#allocation14 + $0x10] sm:$0xf]
    %v1446 = vld [vmem:[#allocation14 + $0x14] sm:$0xf]
    %v1447 = vld [vmem:[#allocation14 + $0x18] sm:$0xf]
    %v1448 = vld [vmem:[#allocation14 + $0x1c] sm:$0xf]
    %v1449 = vld [vmem:[#allocation14 + $0x20] sm:$0xf]
    %v1450 = vld [vmem:[#allocation14 + $0x24] sm:$0xf]
    %v1451 = vld [vmem:[#allocation14 + $0x28] sm:$0xf]
    %v1452 = vld [vmem:[#allocation14 + $0x2c] sm:$0xf]
    %v1453 = vld [vmem:[#allocation14 + $0x30] sm:$0xf]
    %v1454 = vld [vmem:[#allocation14 + $0x34] sm:$0xf]
    %v1455 = vld [vmem:[#allocation14 + $0x38] sm:$0xf]
    %v1456 = vld [vmem:[#allocation14 + $0x3c] sm:$0xf]
    %v1457 = vld [vmem:[#allocation14 + $0x40] sm:$0xf]
    %v1458 = vld [vmem:[#allocation14 + $0x44] sm:$0xf]
    %v1459 = vld [vmem:[#allocation14 + $0x48] sm:$0xf]
    %v1460 = vld [vmem:[#allocation14 + $0x4c] sm:$0xf]
    %v1461 = vld [vmem:[#allocation14 + $0x50] sm:$0xf]
    %v1462 = vld [vmem:[#allocation14 + $0x54] sm:$0xf]
    %v1463 = vld [vmem:[#allocation14 + $0x58] sm:$0xf]
    %v1464 = vld [vmem:[#allocation14 + $0x5c] sm:$0xf]
    %v1465 = vld [vmem:[#allocation14 + $0x60] sm:$0xf]
    %v1466 = vld [vmem:[#allocation14 + $0x64] sm:$0xf]
    %v1467 = vld [vmem:[#allocation14 + $0x68] sm:$0xf]
    %v1468 = vld [vmem:[#allocation14 + $0x6c] sm:$0xf]
    %v1469 = vld [vmem:[#allocation14 + $0x70] sm:$0xf]
    %v1470 = vld [vmem:[#allocation14 + $0x74] sm:$0xf]
    %v1471 = vld [vmem:[#allocation14 + $0x78] sm:$0xf]
    %v1472 = vld [vmem:[#allocation14 + $0x7c] sm:$0xf]
    %v1473 = vpack.c.bf16 %v1439, %v1437
    %v1474 = vpack.c.bf16 %v1440, %v1438
    %v1507 = vunpack.c.l.b16 %v1441
    %v1508 = vunpack.c.l.b16 %v1442
    %v1509 = vunpack.c.l.b16 %v1443
    %v1510 = vunpack.c.l.b16 %v1444
    %v1511 = vunpack.c.l.b16 %v1445
    %v1512 = vunpack.c.l.b16 %v1446
    %v1513 = vunpack.c.l.b16 %v1447
    %v1514 = vunpack.c.l.b16 %v1448
    %v1515 = vunpack.c.l.b16 %v1449
    %v1516 = vunpack.c.l.b16 %v1450
    %v1517 = vunpack.c.l.b16 %v1451
    %v1518 = vunpack.c.l.b16 %v1452
    %v1519 = vunpack.c.l.b16 %v1453
    %v1520 = vunpack.c.l.b16 %v1454
    %v1521 = vunpack.c.l.b16 %v1455
    %v1522 = vunpack.c.l.b16 %v1456
    %v1523 = vunpack.c.l.b16 %v1457
    %v1524 = vunpack.c.l.b16 %v1458
    %v1525 = vunpack.c.l.b16 %v1459
    %v1526 = vunpack.c.l.b16 %v1460
    %v1527 = vunpack.c.l.b16 %v1461
    %v1528 = vunpack.c.l.b16 %v1462
    %v1529 = vunpack.c.l.b16 %v1463
    %v1530 = vunpack.c.l.b16 %v1464
    %v1531 = vunpack.c.l.b16 %v1465
    %v1532 = vunpack.c.l.b16 %v1466
    %v1533 = vunpack.c.l.b16 %v1467
    %v1534 = vunpack.c.l.b16 %v1468
    %v1535 = vunpack.c.l.b16 %v1469
    %v1536 = vunpack.c.l.b16 %v1470
    %v1537 = vunpack.c.l.b16 %v1471
    %v1538 = vunpack.c.l.b16 %v1472
    %v1539 = vpack.c.b16 %v1508, %v1507
    %v1540 = vpack.c.b16 %v1510, %v1509
    %v1541 = vpack.c.b16 %v1512, %v1511
    %v1542 = vpack.c.b16 %v1514, %v1513
    %v1543 = vpack.c.b16 %v1516, %v1515
    %v1544 = vpack.c.b16 %v1518, %v1517
    %v1545 = vpack.c.b16 %v1520, %v1519
    %v1546 = vpack.c.b16 %v1522, %v1521
    %v1547 = vpack.c.b16 %v1524, %v1523
    %v1548 = vpack.c.b16 %v1526, %v1525
    %v1549 = vpack.c.b16 %v1528, %v1527
    %v1550 = vpack.c.b16 %v1530, %v1529
    %v1551 = vpack.c.b16 %v1532, %v1531
    %v1552 = vpack.c.b16 %v1534, %v1533
    %v1553 = vpack.c.b16 %v1536, %v1535
    %v1554 = vpack.c.b16 %v1538, %v1537
    %1571 = vmatprep.subr.bf16.mxu0 0
    %1572 = vmatpush1.bf16.msra.mxu0 %v1539
    %1573 = vmatprep.subr.bf16.mxu0 0
    %1574 = vmatpush1.bf16.msra.mxu0 %v1540
    %1575 = vmatprep.subr.bf16.mxu0 0
    %1576 = vmatpush1.bf16.msra.mxu0 %v1541
    %1577 = vmatprep.subr.bf16.mxu0 0
    %1578 = vmatpush1.bf16.msra.mxu0 %v1542
    %1579 = vmatprep.subr.bf16.mxu0 0
    %1580 = vmatpush1.bf16.msra.mxu0 %v1543
    %1581 = vmatprep.subr.bf16.mxu0 0
    %1582 = vmatpush1.bf16.msra.mxu0 %v1544
    %1583 = vmatprep.subr.bf16.mxu0 0
    %1584 = vmatpush1.bf16.msra.mxu0 %v1545
    %1585 = vmatprep.subr.bf16.mxu0 0
    %1586 = vmatpush1.bf16.msra.mxu0 %v1546
    %1587 = vmatprep.subr.bf16.mxu0 0
    %1588 = vmatpush1.bf16.msra.mxu0 %v1547
    %1589 = vmatprep.subr.bf16.mxu0 0
    %1590 = vmatpush1.bf16.msra.mxu0 %v1548
    %1591 = vmatprep.subr.bf16.mxu0 0
    %1592 = vmatpush1.bf16.msra.mxu0 %v1549
    %1593 = vmatprep.subr.bf16.mxu0 0
    %1594 = vmatpush1.bf16.msra.mxu0 %v1550
    %1595 = vmatprep.subr.bf16.mxu0 0
    %1596 = vmatpush1.bf16.msra.mxu0 %v1551
    %1597 = vmatprep.subr.bf16.mxu0 0
    %1598 = vmatpush1.bf16.msra.mxu0 %v1552
    %1599 = vmatprep.subr.bf16.mxu0 0
    %1600 = vmatpush1.bf16.msra.mxu0 %v1553
    %1601 = vmatprep.subr.bf16.mxu0 0
    %1602 = vmatpush1.bf16.msra.mxu0 %v1554
    %1603 = vmatprep.mubr.bf16.mxu0 %v1474
    %1604 = vmatmul.mubr.bf16.gmra.mrb[0].mxu0 %v1473
    %v1605 = vpop.f32.mrb[0].mxu0
    %v1606 = vadd.f32 0.0, %v1605
    %v1607 = vpop.f32.mrb[0].mxu0
    %v1608 = vpop.f32.mrb[0].mxu0
    %v1609 = vadd.f32 0.0, %v1608
    %v1610 = vpop.f32.mrb[0].mxu0
    %1611 = vdwg.mxu0
    %v1612 = vadd.f32 %v1248, %v1606
    %v1613 = vadd.f32 %v1249, %v1609
    %s1614 = scalar_lea.vmem %s4, 1
    %v1615 = vld [vmem:[%s1614] sm:$0x1]
    %v1616 = vmul.f32 %v1612, %v1612
    %v1617 = vmul.f32 %v1613, %v1613
    %1618 = vadd.xlane.f32.xlu0 %v1616
    %v1619 = vpop.xlane.xlu0 %1618
    %1620 = vadd.xlane.f32.xlu0 %v1617
    %v1621 = vpop.xlane.xlu0 %1620
    %v1622 = vmul.f32 %v1619, %v437
    %v1623 = vmul.f32 %v1621, %v437
    %v1624 = vadd.f32 %v1622, 1e-06
    %v1625 = vadd.f32 %v1623, 1e-06
    %v1626 = vrsqrt.pop %v1624
    %v1627 = vrsqrt.pop %v1625
    %v1628 = vmul.f32 %v1612, %v1626
    %v1629 = vmul.f32 %v1613, %v1627
    %v1631 = vlaneseq
    %v1632 = vshrl.u32 %v1631, 7
    %v1633 = vsub.s32 0, %v1632
    %v1634 = vrot.slane %v1615, %v1633
    %v1636 = vmul.f32 %v1628, %v1634
    %v1637 = vmul.f32 %v1629, %v1634
    %s1638 = scalar_lea.vmem [#allocation9], 128
    %v1639 = vld [vmem:[%s1638] sm:$0xff]
    %v1640 = vld [vmem:[%s1638 + $0x8] sm:$0xff]
    %v1641 = vld [vmem:[%s1638 + $0x10] sm:$0xff]
    %v1642 = vld [vmem:[%s1638 + $0x18] sm:$0xff]
    %v1643 = vld [vmem:[%s1638 + $0x20] sm:$0xff]
    %v1644 = vld [vmem:[%s1638 + $0x28] sm:$0xff]
    %v1645 = vld [vmem:[%s1638 + $0x30] sm:$0xff]
    %v1646 = vld [vmem:[%s1638 + $0x38] sm:$0xff]
    %v1647 = vld [vmem:[%s1638 + $0x40] sm:$0xff]
    %v1648 = vld [vmem:[%s1638 + $0x48] sm:$0xff]
    %v1649 = vld [vmem:[%s1638 + $0x50] sm:$0xff]
    %v1650 = vld [vmem:[%s1638 + $0x58] sm:$0xff]
    %v1651 = vld [vmem:[%s1638 + $0x60] sm:$0xff]
    %v1652 = vld [vmem:[%s1638 + $0x68] sm:$0xff]
    %v1653 = vld [vmem:[%s1638 + $0x70] sm:$0xff]
    %v1654 = vld [vmem:[%s1638 + $0x78] sm:$0xff]
    %v1655 = vpack.c.bf16 %v1637, %v1636
    %v1672 = vunpack.c.l.b16 %v1639
    %v1673 = vunpack.c.h.b16 %v1639
    %v1674 = vunpack.c.l.b16 %v1640
    %v1675 = vunpack.c.h.b16 %v1640
    %v1676 = vunpack.c.l.b16 %v1641
    %v1677 = vunpack.c.h.b16 %v1641
    %v1678 = vunpack.c.l.b16 %v1642
    %v1679 = vunpack.c.h.b16 %v1642
    %v1680 = vunpack.c.l.b16 %v1643
    %v1681 = vunpack.c.h.b16 %v1643
    %v1682 = vunpack.c.l.b16 %v1644
    %v1683 = vunpack.c.h.b16 %v1644
    %v1684 = vunpack.c.l.b16 %v1645
    %v1685 = vunpack.c.h.b16 %v1645
    %v1686 = vunpack.c.l.b16 %v1646
    %v1687 = vunpack.c.h.b16 %v1646
    %v1688 = vunpack.c.l.b16 %v1647
    %v1689 = vunpack.c.h.b16 %v1647
    %v1690 = vunpack.c.l.b16 %v1648
    %v1691 = vunpack.c.h.b16 %v1648
    %v1692 = vunpack.c.l.b16 %v1649
    %v1693 = vunpack.c.h.b16 %v1649
    %v1694 = vunpack.c.l.b16 %v1650
    %v1695 = vunpack.c.h.b16 %v1650
    %v1696 = vunpack.c.l.b16 %v1651
    %v1697 = vunpack.c.h.b16 %v1651
    %v1698 = vunpack.c.l.b16 %v1652
    %v1699 = vunpack.c.h.b16 %v1652
    %v1700 = vunpack.c.l.b16 %v1653
    %v1701 = vunpack.c.h.b16 %v1653
    %v1702 = vunpack.c.l.b16 %v1654
    %v1703 = vunpack.c.h.b16 %v1654
    %v1704 = vpack.c.b16 %v1674, %v1672
    %v1705 = vpack.c.b16 %v1675, %v1673
    %v1706 = vpack.c.b16 %v1678, %v1676
    %v1707 = vpack.c.b16 %v1679, %v1677
    %v1708 = vpack.c.b16 %v1682, %v1680
    %v1709 = vpack.c.b16 %v1683, %v1681
    %v1710 = vpack.c.b16 %v1686, %v1684
    %v1711 = vpack.c.b16 %v1687, %v1685
    %v1712 = vpack.c.b16 %v1690, %v1688
    %v1713 = vpack.c.b16 %v1691, %v1689
    %v1714 = vpack.c.b16 %v1694, %v1692
    %v1715 = vpack.c.b16 %v1695, %v1693
    %v1716 = vpack.c.b16 %v1698, %v1696
    %v1717 = vpack.c.b16 %v1699, %v1697
    %v1718 = vpack.c.b16 %v1702, %v1700
    %v1719 = vpack.c.b16 %v1703, %v1701
    %1736 = vmatprep.subr.bf16.mxu0 %v1705
    %1737 = vmatpush1.bf16.msra.mxu0 %v1704
    %1738 = vmatprep.subr.bf16.mxu0 %v1707
    %1739 = vmatpush1.bf16.msra.mxu0 %v1706
    %1740 = vmatprep.subr.bf16.mxu0 %v1709
    %1741 = vmatpush1.bf16.msra.mxu0 %v1708
    %1742 = vmatprep.subr.bf16.mxu0 %v1711
    %1743 = vmatpush1.bf16.msra.mxu0 %v1710
    %1744 = vmatprep.subr.bf16.mxu0 %v1713
    %1745 = vmatpush1.bf16.msra.mxu0 %v1712
    %1746 = vmatprep.subr.bf16.mxu0 %v1715
    %1747 = vmatpush1.bf16.msra.mxu0 %v1714
    %1748 = vmatprep.subr.bf16.mxu0 %v1717
    %1749 = vmatpush1.bf16.msra.mxu0 %v1716
    %1750 = vmatprep.subr.bf16.mxu0 %v1719
    %1751 = vmatpush1.bf16.msra.mxu0 %v1718
    %1752 = vmatprep.subr.bf16.mxu0 0
    %1753 = vmatpush1.bf16.msra.mxu0 0
    %1754 = vmatprep.subr.bf16.mxu0 0
    %1755 = vmatpush1.bf16.msra.mxu0 0
    %1756 = vmatprep.subr.bf16.mxu0 0
    %1757 = vmatpush1.bf16.msra.mxu0 0
    %1758 = vmatprep.subr.bf16.mxu0 0
    %1759 = vmatpush1.bf16.msra.mxu0 0
    %1760 = vmatprep.subr.bf16.mxu0 0
    %1761 = vmatpush1.bf16.msra.mxu0 0
    %1762 = vmatprep.subr.bf16.mxu0 0
    %1763 = vmatpush1.bf16.msra.mxu0 0
    %1764 = vmatprep.subr.bf16.mxu0 0
    %1765 = vmatpush1.bf16.msra.mxu0 0
    %1766 = vmatprep.subr.bf16.mxu0 0
    %1767 = vmatpush1.bf16.msra.mxu0 0
    %1768 = vmatprep.mubr.bf16.mxu0 0
    %1769 = vmatmul.mubr.bf16.gmra.mrb[0].mxu0 %v1655
    %v1770 = vpop.f32.mrb[0].mxu0
    %v1771 = vadd.f32 0.0, %v1770
    %v1772 = vpop.f32.mrb[0].mxu0
    %v1773 = vadd.f32 0.0, %v1772
    %v1774 = vpop.f32.mrb[0].mxu0
    %v1775 = vadd.f32 0.0, %v1774
    %v1776 = vpop.f32.mrb[0].mxu0
    %v1777 = vadd.f32 0.0, %v1776
    %1778 = vdwg.mxu0
    %1780 = vrot.lane.b32.xlu0 %v1771, 96
    %v1781 = vpop.permute.xlu0 %1780
    %v1783 = vpack.c.bf16 %v1781, %v1771
    %v1784 = vpack.c.bf16 %v1773, %v1773
    %v1786 = vsel %vm600, %v1783, 0
    %v1789 = vsel %vm600, %v1784, 0
    %1791 = vmatprep.subr.bf16.mxu0 0
    %1792 = vmatpush1.bf16.xpose.msra.mxu0 %v1789
    %1793 = vmatprep.subr.bf16.mxu0 0
    %1794 = vmatpush1.bf16.xpose.msra.mxu0 0
    %1795 = vmatprep.subr.bf16.mxu0 0
    %1796 = vmatpush1.bf16.xpose.msra.mxu0 0
    %1797 = vmatprep.subr.bf16.mxu0 0
    %1798 = vmatpush1.bf16.xpose.msra.mxu0 0
    %1799 = vmatprep.subr.bf16.mxu0 0
    %1800 = vmatpush1.bf16.xpose.msra.mxu0 0
    %1801 = vmatprep.subr.bf16.mxu0 0
    %1802 = vmatpush1.bf16.xpose.msra.mxu0 0
    %1803 = vmatprep.subr.bf16.mxu0 0
    %1804 = vmatpush1.bf16.xpose.msra.mxu0 0
    %1805 = vmatprep.subr.bf16.mxu0 0
    %1806 = vmatpush1.bf16.xpose.msra.mxu0 0
    %1807 = vmatprep.subr.bf16.mxu0 0
    %1808 = vmatpush1.bf16.xpose.msra.mxu0 0
    %1809 = vmatprep.subr.bf16.mxu0 0
    %1810 = vmatpush1.bf16.xpose.msra.mxu0 0
    %1811 = vmatprep.subr.bf16.mxu0 0
    %1812 = vmatpush1.bf16.xpose.msra.mxu0 0
    %1813 = vmatprep.subr.bf16.mxu0 0
    %1814 = vmatpush1.bf16.xpose.msra.mxu0 0
    %1815 = vmatprep.subr.bf16.mxu0 0
    %1816 = vmatpush1.bf16.xpose.msra.mxu0 0
    %1817 = vmatprep.subr.bf16.mxu0 0
    %1818 = vmatpush1.bf16.xpose.msra.mxu0 0
    %1819 = vmatprep.subr.bf16.mxu0 0
    %1820 = vmatpush1.bf16.xpose.msra.mxu0 0
    %1821 = vmatprep.subr.bf16.mxu0 0
    %1822 = vmatpush1.bf16.xpose.msra.mxu0 0
    %1823 = vmatprep.mubr.bf16.mxu0 0
    %1824 = vmatmul.mubr.bf16.gmra.mrb[0].mxu0 %v1786
    %v1825 = vpop.f32.mrb[0].mxu0
    %v1826 = vadd.f32 0.0, %v1825
    %v1827 = vpop.f32.mrb[0].mxu0
    %v1828 = vpop.f32.mrb[0].mxu0
    %v1829 = vadd.f32 0.0, %v1828
    %v1830 = vpop.f32.mrb[0].mxu0
    %1831 = vdwg.mxu0
    %1833 = vrot.lane.b32.xlu0 %v1783, 64
    %v1834 = vpop.permute.xlu0 %1833
    %1836 = vrot.lane.b32.xlu0 %v1784, 96
    %v1837 = vpop.permute.xlu0 %1836
    %v1839 = vsel %vm600, %v1834, 0
    %v1842 = vsel %vm600, %v1837, 0
    %1844 = vmatprep.subr.bf16.mxu0 0
    %1845 = vmatpush1.bf16.xpose.msra.mxu0 %v1842
    %1846 = vmatprep.subr.bf16.mxu0 0
    %1847 = vmatpush1.bf16.xpose.msra.mxu0 0
    %1848 = vmatprep.subr.bf16.mxu0 0
    %1849 = vmatpush1.bf16.xpose.msra.mxu0 0
    %1850 = vmatprep.subr.bf16.mxu0 0
    %1851 = vmatpush1.bf16.xpose.msra.mxu0 0
    %1852 = vmatprep.subr.bf16.mxu0 0
    %1853 = vmatpush1.bf16.xpose.msra.mxu0 0
    %1854 = vmatprep.subr.bf16.mxu0 0
    %1855 = vmatpush1.bf16.xpose.msra.mxu0 0
    %1856 = vmatprep.subr.bf16.mxu0 0
    %1857 = vmatpush1.bf16.xpose.msra.mxu0 0
    %1858 = vmatprep.subr.bf16.mxu0 0
    %1859 = vmatpush1.bf16.xpose.msra.mxu0 0
    %1860 = vmatprep.subr.bf16.mxu0 0
    %1861 = vmatpush1.bf16.xpose.msra.mxu0 0
    %1862 = vmatprep.subr.bf16.mxu0 0
    %1863 = vmatpush1.bf16.xpose.msra.mxu0 0
    %1864 = vmatprep.subr.bf16.mxu0 0
    %1865 = vmatpush1.bf16.xpose.msra.mxu0 0
    %1866 = vmatprep.subr.bf16.mxu0 0
    %1867 = vmatpush1.bf16.xpose.msra.mxu0 0
    %1868 = vmatprep.subr.bf16.mxu0 0
    %1869 = vmatpush1.bf16.xpose.msra.mxu0 0
    %1870 = vmatprep.subr.bf16.mxu0 0
    %1871 = vmatpush1.bf16.xpose.msra.mxu0 0
    %1872 = vmatprep.subr.bf16.mxu0 0
    %1873 = vmatpush1.bf16.xpose.msra.mxu0 0
    %1874 = vmatprep.subr.bf16.mxu0 0
    %1875 = vmatpush1.bf16.xpose.msra.mxu0 0
    %1876 = vmatprep.mubr.bf16.mxu0 0
    %1877 = vmatmul.mubr.bf16.gmra.mrb[0].mxu0 %v1839
    %v1878 = vpop.f32.mrb[0].mxu0
    %v1879 = vadd.f32 0.0, %v1878
    %v1880 = vpop.f32.mrb[0].mxu0
    %v1881 = vpop.f32.mrb[0].mxu0
    %v1882 = vadd.f32 0.0, %v1881
    %v1883 = vpop.f32.mrb[0].mxu0
    %1884 = vdwg.mxu0
    %1886 = vrot.lane.b32.xlu0 %v1775, 96
    %v1887 = vpop.permute.xlu0 %1886
    %v1889 = vpack.c.bf16 %v1887, %v1775
    %v1890 = vpack.c.bf16 %v1777, %v1777
    %v1892 = vsel %vm600, %v1889, 0
    %v1895 = vsel %vm600, %v1890, 0
    %1897 = vmatprep.subr.bf16.mxu0 0
    %1898 = vmatpush1.bf16.xpose.msra.mxu0 %v1895
    %1899 = vmatprep.subr.bf16.mxu0 0
    %1900 = vmatpush1.bf16.xpose.msra.mxu0 0
    %1901 = vmatprep.subr.bf16.mxu0 0
    %1902 = vmatpush1.bf16.xpose.msra.mxu0 0
    %1903 = vmatprep.subr.bf16.mxu0 0
    %1904 = vmatpush1.bf16.xpose.msra.mxu0 0
    %1905 = vmatprep.subr.bf16.mxu0 0
    %1906 = vmatpush1.bf16.xpose.msra.mxu0 0
    %1907 = vmatprep.subr.bf16.mxu0 0
    %1908 = vmatpush1.bf16.xpose.msra.mxu0 0
    %1909 = vmatprep.subr.bf16.mxu0 0
    %1910 = vmatpush1.bf16.xpose.msra.mxu0 0
    %1911 = vmatprep.subr.bf16.mxu0 0
    %1912 = vmatpush1.bf16.xpose.msra.mxu0 0
    %1913 = vmatprep.subr.bf16.mxu0 0
    %1914 = vmatpush1.bf16.xpose.msra.mxu0 0
    %1915 = vmatprep.subr.bf16.mxu0 0
    %1916 = vmatpush1.bf16.xpose.msra.mxu0 0
    %1917 = vmatprep.subr.bf16.mxu0 0
    %1918 = vmatpush1.bf16.xpose.msra.mxu0 0
    %1919 = vmatprep.subr.bf16.mxu0 0
    %1920 = vmatpush1.bf16.xpose.msra.mxu0 0
    %1921 = vmatprep.subr.bf16.mxu0 0
    %1922 = vmatpush1.bf16.xpose.msra.mxu0 0
    %1923 = vmatprep.subr.bf16.mxu0 0
    %1924 = vmatpush1.bf16.xpose.msra.mxu0 0
    %1925 = vmatprep.subr.bf16.mxu0 0
    %1926 = vmatpush1.bf16.xpose.msra.mxu0 0
    %1927 = vmatprep.subr.bf16.mxu0 0
    %1928 = vmatpush1.bf16.xpose.msra.mxu0 0
    %1929 = vmatprep.mubr.bf16.mxu0 0
    %1930 = vmatmul.mubr.bf16.gmra.mrb[0].mxu0 %v1892
    %v1931 = vpop.f32.mrb[0].mxu0
    %v1932 = vadd.f32 0.0, %v1931
    %v1933 = vpop.f32.mrb[0].mxu0
    %v1934 = vpop.f32.mrb[0].mxu0
    %v1935 = vadd.f32 0.0, %v1934
    %v1936 = vpop.f32.mrb[0].mxu0
    %1937 = vdwg.mxu0
    %1939 = vrot.lane.b32.xlu0 %v1889, 64
    %v1940 = vpop.permute.xlu0 %1939
    %1942 = vrot.lane.b32.xlu0 %v1890, 96
    %v1943 = vpop.permute.xlu0 %1942
    %v1945 = vsel %vm600, %v1940, 0
    %v1948 = vsel %vm600, %v1943, 0
    %1950 = vmatprep.subr.bf16.mxu0 0
    %1951 = vmatpush1.bf16.xpose.msra.mxu0 %v1948
    %1952 = vmatprep.subr.bf16.mxu0 0
    %1953 = vmatpush1.bf16.xpose.msra.mxu0 0
    %1954 = vmatprep.subr.bf16.mxu0 0
    %1955 = vmatpush1.bf16.xpose.msra.mxu0 0
    %1956 = vmatprep.subr.bf16.mxu0 0
    %1957 = vmatpush1.bf16.xpose.msra.mxu0 0
    %1958 = vmatprep.subr.bf16.mxu0 0
    %1959 = vmatpush1.bf16.xpose.msra.mxu0 0
    %1960 = vmatprep.subr.bf16.mxu0 0
    %1961 = vmatpush1.bf16.xpose.msra.mxu0 0
    %1962 = vmatprep.subr.bf16.mxu0 0
    %1963 = vmatpush1.bf16.xpose.msra.mxu0 0
    %1964 = vmatprep.subr.bf16.mxu0 0
    %1965 = vmatpush1.bf16.xpose.msra.mxu0 0
    %1966 = vmatprep.subr.bf16.mxu0 0
    %1967 = vmatpush1.bf16.xpose.msra.mxu0 0
    %1968 = vmatprep.subr.bf16.mxu0 0
    %1969 = vmatpush1.bf16.xpose.msra.mxu0 0
    %1970 = vmatprep.subr.bf16.mxu0 0
    %1971 = vmatpush1.bf16.xpose.msra.mxu0 0
    %1972 = vmatprep.subr.bf16.mxu0 0
    %1973 = vmatpush1.bf16.xpose.msra.mxu0 0
    %1974 = vmatprep.subr.bf16.mxu0 0
    %1975 = vmatpush1.bf16.xpose.msra.mxu0 0
    %1976 = vmatprep.subr.bf16.mxu0 0
    %1977 = vmatpush1.bf16.xpose.msra.mxu0 0
    %1978 = vmatprep.subr.bf16.mxu0 0
    %1979 = vmatpush1.bf16.xpose.msra.mxu0 0
    %1980 = vmatprep.subr.bf16.mxu0 0
    %1981 = vmatpush1.bf16.xpose.msra.mxu0 0
    %1982 = vmatprep.mubr.bf16.mxu0 0
    %1983 = vmatmul.mubr.bf16.gmra.mrb[0].mxu0 %v1945
    %v1984 = vpop.f32.mrb[0].mxu0
    %v1985 = vadd.f32 0.0, %v1984
    %v1986 = vpop.f32.mrb[0].mxu0
    %v1987 = vpop.f32.mrb[0].mxu0
    %v1988 = vadd.f32 0.0, %v1987
    %v1989 = vpop.f32.mrb[0].mxu0
    %1990 = vdwg.mxu0
    %v1991 = vadd.f32 %v1826, %v247
    %v1992 = vadd.f32 %v1829, %v248
    %v1993 = vadd.f32 %v1879, %v249
    %v1994 = vadd.f32 %v1882, %v250
    %v1995 = vadd.f32 %v1932, %v251
    %v1996 = vadd.f32 %v1935, %v252
    %v1997 = vadd.f32 %v1985, %v253
    %v1998 = vadd.f32 %v1988, %v254
    %v1999 = vsel %vm815, %v1991, -inf
    %2000 = vmax.xlane.f32.xlu0 %v1999
    %v2001 = vpop.xlane.xlu0 %2000
    %v2002 = vsel %vm815, %v1992, -inf
    %2003 = vmax.xlane.f32.xlu0 %v2002
    %v2004 = vpop.xlane.xlu0 %2003
    %v2005 = vsel %vm815, %v1993, -inf
    %2006 = vmax.xlane.f32.xlu0 %v2005
    %v2007 = vpop.xlane.xlu0 %2006
    %v2008 = vsel %vm815, %v1994, -inf
    %2009 = vmax.xlane.f32.xlu0 %v2008
    %v2010 = vpop.xlane.xlu0 %2009
    %v2011 = vsel %vm815, %v1995, -inf
    %2012 = vmax.xlane.f32.xlu0 %v2011
    %v2013 = vpop.xlane.xlu0 %2012
    %v2014 = vsel %vm815, %v1996, -inf
    %2015 = vmax.xlane.f32.xlu0 %v2014
    %v2016 = vpop.xlane.xlu0 %2015
    %v2017 = vsel %vm815, %v1997, -inf
    %2018 = vmax.xlane.f32.xlu0 %v2017
    %v2019 = vpop.xlane.xlu0 %2018
    %v2020 = vsel %vm815, %v1998, -inf
    %2021 = vmax.xlane.f32.xlu0 %v2020
    %v2022 = vpop.xlane.xlu0 %2021
    %v2023 = vsub.f32 %v1991, %v2001
    %v2024 = vsub.f32 %v1992, %v2004
    %v2025 = vsub.f32 %v1993, %v2007
    %v2026 = vsub.f32 %v1994, %v2010
    %v2027 = vsub.f32 %v1995, %v2013
    %v2028 = vsub.f32 %v1996, %v2016
    %v2029 = vsub.f32 %v1997, %v2019
    %v2030 = vsub.f32 %v1998, %v2022
    %v2031 = vmul.f32 %v2023, 1.442695
    %v2032 = vpow.pop %v2031
    %v2033 = vmul.f32 %v2024, 1.442695
    %v2034 = vpow.pop %v2033
    %v2035 = vmul.f32 %v2025, 1.442695
    %v2036 = vpow.pop %v2035
    %v2037 = vmul.f32 %v2026, 1.442695
    %v2038 = vpow.pop %v2037
    %v2039 = vmul.f32 %v2027, 1.442695
    %v2040 = vpow.pop %v2039
    %v2041 = vmul.f32 %v2028, 1.442695
    %v2042 = vpow.pop %v2041
    %v2043 = vmul.f32 %v2029, 1.442695
    %v2044 = vpow.pop %v2043
    %v2045 = vmul.f32 %v2030, 1.442695
    %v2046 = vpow.pop %v2045
    %v2047 = vsel %vm815, %v2032, 0.0
    %2048 = vadd.xlane.f32.xlu0 %v2047
    %v2049 = vpop.xlane.xlu0 %2048
    %v2050 = vsel %vm815, %v2034, 0.0
    %2051 = vadd.xlane.f32.xlu0 %v2050
    %v2052 = vpop.xlane.xlu0 %2051
    %v2053 = vsel %vm815, %v2036, 0.0
    %2054 = vadd.xlane.f32.xlu0 %v2053
    %v2055 = vpop.xlane.xlu0 %2054
    %v2056 = vsel %vm815, %v2038, 0.0
    %2057 = vadd.xlane.f32.xlu0 %v2056
    %v2058 = vpop.xlane.xlu0 %2057
    %v2059 = vsel %vm815, %v2040, 0.0
    %2060 = vadd.xlane.f32.xlu0 %v2059
    %v2061 = vpop.xlane.xlu0 %2060
    %v2062 = vsel %vm815, %v2042, 0.0
    %2063 = vadd.xlane.f32.xlu0 %v2062
    %v2064 = vpop.xlane.xlu0 %2063
    %v2065 = vsel %vm815, %v2044, 0.0
    %2066 = vadd.xlane.f32.xlu0 %v2065
    %v2067 = vpop.xlane.xlu0 %2066
    %v2068 = vsel %vm815, %v2046, 0.0
    %2069 = vadd.xlane.f32.xlu0 %v2068
    %v2070 = vpop.xlane.xlu0 %2069
    %v2071 = vrcp.pop %v2049
    %v2072 = vrcp.pop %v2052
    %v2073 = vrcp.pop %v2055
    %v2074 = vrcp.pop %v2058
    %v2075 = vrcp.pop %v2061
    %v2076 = vrcp.pop %v2064
    %v2077 = vrcp.pop %v2067
    %v2078 = vrcp.pop %v2070
    %v2079 = vmul.f32 %v2032, %v2071
    %v2080 = vmul.f32 %v2034, %v2072
    %v2081 = vmul.f32 %v2036, %v2073
    %v2082 = vmul.f32 %v2038, %v2074
    %v2083 = vmul.f32 %v2040, %v2075
    %v2084 = vmul.f32 %v2042, %v2076
    %v2085 = vmul.f32 %v2044, %v2077
    %v2086 = vmul.f32 %v2046, %v2078
    %v2087 = vpack.c.bf16 %v2080, %v2079
    %v2088 = vpack.c.bf16 %v2082, %v2081
    %v2089 = vpack.c.bf16 %v2084, %v2083
    %v2090 = vpack.c.bf16 %v2086, %v2085
    %2091 = vrot.lane.b32.xlu0 %v1784, 64
    %v2092 = vpop.permute.xlu0 %2091
    %v2094 = vsel %vm815, %v2087, 0
    %v2097 = vsel %vm913, %v2092, 0
    %2099 = vmatprep.subr.bf16.mxu0 0
    %2100 = vmatpush1.bf16.msra.mxu0 %v2097
    %2101 = vmatprep.subr.bf16.mxu0 0
    %2102 = vmatpush1.bf16.msra.mxu0 0
    %2103 = vmatprep.subr.bf16.mxu0 0
    %2104 = vmatpush1.bf16.msra.mxu0 0
    %2105 = vmatprep.subr.bf16.mxu0 0
    %2106 = vmatpush1.bf16.msra.mxu0 0
    %2107 = vmatprep.subr.bf16.mxu0 0
    %2108 = vmatpush1.bf16.msra.mxu0 0
    %2109 = vmatprep.subr.bf16.mxu0 0
    %2110 = vmatpush1.bf16.msra.mxu0 0
    %2111 = vmatprep.subr.bf16.mxu0 0
    %2112 = vmatpush1.bf16.msra.mxu0 0
    %2113 = vmatprep.subr.bf16.mxu0 0
    %2114 = vmatpush1.bf16.msra.mxu0 0
    %2115 = vmatprep.subr.bf16.mxu0 0
    %2116 = vmatpush1.bf16.msra.mxu0 0
    %2117 = vmatprep.subr.bf16.mxu0 0
    %2118 = vmatpush1.bf16.msra.mxu0 0
    %2119 = vmatprep.subr.bf16.mxu0 0
    %2120 = vmatpush1.bf16.msra.mxu0 0
    %2121 = vmatprep.subr.bf16.mxu0 0
    %2122 = vmatpush1.bf16.msra.mxu0 0
    %2123 = vmatprep.subr.bf16.mxu0 0
    %2124 = vmatpush1.bf16.msra.mxu0 0
    %2125 = vmatprep.subr.bf16.mxu0 0
    %2126 = vmatpush1.bf16.msra.mxu0 0
    %2127 = vmatprep.subr.bf16.mxu0 0
    %2128 = vmatpush1.bf16.msra.mxu0 0
    %2129 = vmatprep.subr.bf16.mxu0 0
    %2130 = vmatpush1.bf16.msra.mxu0 0
    %2131 = vmatprep.mubr.bf16.mxu0 0
    %2132 = vmatmul.mubr.bf16.gmra.mrb[0].mxu0 %v2094
    %v2133 = vpop.f32.mrb[0].mxu0
    %v2134 = vadd.f32 0.0, %v2133
    %v2135 = vpop.f32.mrb[0].mxu0
    %v2136 = vpop.f32.mrb[0].mxu0
    %v2137 = vadd.f32 0.0, %v2136
    %v2138 = vpop.f32.mrb[0].mxu0
    %2139 = vdwg.mxu0
    %2140 = vst.msk [vmem:[#allocation2] sm:$0xff] %vm600, %v2134
    %2142 = vrot.lane.b32.xlu0 %v2137, 32
    %v2143 = vpop.permute.xlu0 %2142
    %2145 = vst.msk [vmem:[#allocation2] sm:$0xff] %vm963, %v2143
    %2146 = vrot.lane.b32.xlu0 %v1784, 32
    %v2147 = vpop.permute.xlu0 %2146
    %v2149 = vsel %vm815, %v2088, 0
    %v2152 = vsel %vm913, %v2147, 0
    %2154 = vmatprep.subr.bf16.mxu0 0
    %2155 = vmatpush1.bf16.msra.mxu0 %v2152
    %2156 = vmatprep.subr.bf16.mxu0 0
    %2157 = vmatpush1.bf16.msra.mxu0 0
    %2158 = vmatprep.subr.bf16.mxu0 0
    %2159 = vmatpush1.bf16.msra.mxu0 0
    %2160 = vmatprep.subr.bf16.mxu0 0
    %2161 = vmatpush1.bf16.msra.mxu0 0
    %2162 = vmatprep.subr.bf16.mxu0 0
    %2163 = vmatpush1.bf16.msra.mxu0 0
    %2164 = vmatprep.subr.bf16.mxu0 0
    %2165 = vmatpush1.bf16.msra.mxu0 0
    %2166 = vmatprep.subr.bf16.mxu0 0
    %2167 = vmatpush1.bf16.msra.mxu0 0
    %2168 = vmatprep.subr.bf16.mxu0 0
    %2169 = vmatpush1.bf16.msra.mxu0 0
    %2170 = vmatprep.subr.bf16.mxu0 0
    %2171 = vmatpush1.bf16.msra.mxu0 0
    %2172 = vmatprep.subr.bf16.mxu0 0
    %2173 = vmatpush1.bf16.msra.mxu0 0
    %2174 = vmatprep.subr.bf16.mxu0 0
    %2175 = vmatpush1.bf16.msra.mxu0 0
    %2176 = vmatprep.subr.bf16.mxu0 0
    %2177 = vmatpush1.bf16.msra.mxu0 0
    %2178 = vmatprep.subr.bf16.mxu0 0
    %2179 = vmatpush1.bf16.msra.mxu0 0
    %2180 = vmatprep.subr.bf16.mxu0 0
    %2181 = vmatpush1.bf16.msra.mxu0 0
    %2182 = vmatprep.subr.bf16.mxu0 0
    %2183 = vmatpush1.bf16.msra.mxu0 0
    %2184 = vmatprep.subr.bf16.mxu0 0
    %2185 = vmatpush1.bf16.msra.mxu0 0
    %2186 = vmatprep.mubr.bf16.mxu0 0
    %2187 = vmatmul.mubr.bf16.gmra.mrb[0].mxu0 %v2149
    %v2188 = vpop.f32.mrb[0].mxu0
    %v2189 = vadd.f32 0.0, %v2188
    %v2190 = vpop.f32.mrb[0].mxu0
    %v2191 = vpop.f32.mrb[0].mxu0
    %v2192 = vadd.f32 0.0, %v2191
    %v2193 = vpop.f32.mrb[0].mxu0
    %2194 = vdwg.mxu0
    %2196 = vrot.lane.b32.xlu0 %v2189, 64
    %v2197 = vpop.permute.xlu0 %2196
    %2199 = vst.msk [vmem:[#allocation2] sm:$0xff] %vm1018, %v2197
    %2201 = vrot.lane.b32.xlu0 %v2192, 96
    %v2202 = vpop.permute.xlu0 %2201
    %2204 = vst.msk [vmem:[#allocation2] sm:$0xff] %vm1024, %v2202
    %2205 = vrot.lane.b32.xlu0 %v1890, 64
    %v2206 = vpop.permute.xlu0 %2205
    %v2208 = vsel %vm815, %v2089, 0
    %v2211 = vsel %vm913, %v2206, 0
    %2213 = vmatprep.subr.bf16.mxu0 0
    %2214 = vmatpush1.bf16.msra.mxu0 %v2211
    %2215 = vmatprep.subr.bf16.mxu0 0
    %2216 = vmatpush1.bf16.msra.mxu0 0
    %2217 = vmatprep.subr.bf16.mxu0 0
    %2218 = vmatpush1.bf16.msra.mxu0 0
    %2219 = vmatprep.subr.bf16.mxu0 0
    %2220 = vmatpush1.bf16.msra.mxu0 0
    %2221 = vmatprep.subr.bf16.mxu0 0
    %2222 = vmatpush1.bf16.msra.mxu0 0
    %2223 = vmatprep.subr.bf16.mxu0 0
    %2224 = vmatpush1.bf16.msra.mxu0 0
    %2225 = vmatprep.subr.bf16.mxu0 0
    %2226 = vmatpush1.bf16.msra.mxu0 0
    %2227 = vmatprep.subr.bf16.mxu0 0
    %2228 = vmatpush1.bf16.msra.mxu0 0
    %2229 = vmatprep.subr.bf16.mxu0 0
    %2230 = vmatpush1.bf16.msra.mxu0 0
    %2231 = vmatprep.subr.bf16.mxu0 0
    %2232 = vmatpush1.bf16.msra.mxu0 0
    %2233 = vmatprep.subr.bf16.mxu0 0
    %2234 = vmatpush1.bf16.msra.mxu0 0
    %2235 = vmatprep.subr.bf16.mxu0 0
    %2236 = vmatpush1.bf16.msra.mxu0 0
    %2237 = vmatprep.subr.bf16.mxu0 0
    %2238 = vmatpush1.bf16.msra.mxu0 0
    %2239 = vmatprep.subr.bf16.mxu0 0
    %2240 = vmatpush1.bf16.msra.mxu0 0
    %2241 = vmatprep.subr.bf16.mxu0 0
    %2242 = vmatpush1.bf16.msra.mxu0 0
    %2243 = vmatprep.subr.bf16.mxu0 0
    %2244 = vmatpush1.bf16.msra.mxu0 0
    %2245 = vmatprep.mubr.bf16.mxu0 0
    %2246 = vmatmul.mubr.bf16.gmra.mrb[0].mxu0 %v2208
    %v2247 = vpop.f32.mrb[0].mxu0
    %v2248 = vadd.f32 0.0, %v2247
    %v2249 = vpop.f32.mrb[0].mxu0
    %v2250 = vpop.f32.mrb[0].mxu0
    %v2251 = vadd.f32 0.0, %v2250
    %v2252 = vpop.f32.mrb[0].mxu0
    %2253 = vdwg.mxu0
    %2254 = vst.msk [vmem:[#allocation2 + $0x8] sm:$0xff] %vm600, %v2248
    %2256 = vrot.lane.b32.xlu0 %v2251, 32
    %v2257 = vpop.permute.xlu0 %2256
    %2259 = vst.msk [vmem:[#allocation2 + $0x8] sm:$0xff] %vm963, %v2257
    %2260 = vrot.lane.b32.xlu0 %v1890, 32
    %v2261 = vpop.permute.xlu0 %2260
    %v2263 = vsel %vm815, %v2090, 0
    %v2266 = vsel %vm913, %v2261, 0
    %2268 = vmatprep.subr.bf16.mxu0 0
    %2269 = vmatpush1.bf16.msra.mxu0 %v2266
    %2270 = vmatprep.subr.bf16.mxu0 0
    %2271 = vmatpush1.bf16.msra.mxu0 0
    %2272 = vmatprep.subr.bf16.mxu0 0
    %2273 = vmatpush1.bf16.msra.mxu0 0
    %2274 = vmatprep.subr.bf16.mxu0 0
    %2275 = vmatpush1.bf16.msra.mxu0 0
    %2276 = vmatprep.subr.bf16.mxu0 0
    %2277 = vmatpush1.bf16.msra.mxu0 0
    %2278 = vmatprep.subr.bf16.mxu0 0
    %2279 = vmatpush1.bf16.msra.mxu0 0
    %2280 = vmatprep.subr.bf16.mxu0 0
    %2281 = vmatpush1.bf16.msra.mxu0 0
    %2282 = vmatprep.subr.bf16.mxu0 0
    %2283 = vmatpush1.bf16.msra.mxu0 0
    %2284 = vmatprep.subr.bf16.mxu0 0
    %2285 = vmatpush1.bf16.msra.mxu0 0
    %2286 = vmatprep.subr.bf16.mxu0 0
    %2287 = vmatpush1.bf16.msra.mxu0 0
    %2288 = vmatprep.subr.bf16.mxu0 0
    %2289 = vmatpush1.bf16.msra.mxu0 0
    %2290 = vmatprep.subr.bf16.mxu0 0
    %2291 = vmatpush1.bf16.msra.mxu0 0
    %2292 = vmatprep.subr.bf16.mxu0 0
    %2293 = vmatpush1.bf16.msra.mxu0 0
    %2294 = vmatprep.subr.bf16.mxu0 0
    %2295 = vmatpush1.bf16.msra.mxu0 0
    %2296 = vmatprep.subr.bf16.mxu0 0
    %2297 = vmatpush1.bf16.msra.mxu0 0
    %2298 = vmatprep.subr.bf16.mxu0 0
    %2299 = vmatpush1.bf16.msra.mxu0 0
    %2300 = vmatprep.mubr.bf16.mxu0 0
    %2301 = vmatmul.mubr.bf16.gmra.mrb[0].mxu0 %v2263
    %v2302 = vpop.f32.mrb[0].mxu0
    %v2303 = vadd.f32 0.0, %v2302
    %v2304 = vpop.f32.mrb[0].mxu0
    %v2305 = vpop.f32.mrb[0].mxu0
    %v2306 = vadd.f32 0.0, %v2305
    %v2307 = vpop.f32.mrb[0].mxu0
    %2308 = vdwg.mxu0
    %2310 = vrot.lane.b32.xlu0 %v2303, 64
    %v2311 = vpop.permute.xlu0 %2310
    %2313 = vst.msk [vmem:[#allocation2 + $0x8] sm:$0xff] %vm1018, %v2311
    %2315 = vrot.lane.b32.xlu0 %v2306, 96
    %v2316 = vpop.permute.xlu0 %2315
    %2318 = vst.msk [vmem:[#allocation2 + $0x8] sm:$0xff] %vm1024, %v2316
    %v2319 = vld [vmem:[#allocation2] sm:$0xff]
    %v2320 = vld [vmem:[#allocation2 + $0x8] sm:$0xff]
    %s2321 = scalar_lea.vmem [#allocation11], 64
    %v2322 = vld [vmem:[%s2321] sm:$0xf]
    %v2323 = vld [vmem:[%s2321 + $0x4] sm:$0xf]
    %v2324 = vld [vmem:[%s2321 + $0x8] sm:$0xf]
    %v2325 = vld [vmem:[%s2321 + $0xc] sm:$0xf]
    %v2326 = vld [vmem:[%s2321 + $0x10] sm:$0xf]
    %v2327 = vld [vmem:[%s2321 + $0x14] sm:$0xf]
    %v2328 = vld [vmem:[%s2321 + $0x18] sm:$0xf]
    %v2329 = vld [vmem:[%s2321 + $0x1c] sm:$0xf]
    %v2330 = vld [vmem:[%s2321 + $0x20] sm:$0xf]
    %v2331 = vld [vmem:[%s2321 + $0x24] sm:$0xf]
    %v2332 = vld [vmem:[%s2321 + $0x28] sm:$0xf]
    %v2333 = vld [vmem:[%s2321 + $0x2c] sm:$0xf]
    %v2334 = vld [vmem:[%s2321 + $0x30] sm:$0xf]
    %v2335 = vld [vmem:[%s2321 + $0x34] sm:$0xf]
    %v2336 = vld [vmem:[%s2321 + $0x38] sm:$0xf]
    %v2337 = vld [vmem:[%s2321 + $0x3c] sm:$0xf]
    %v2338 = vpack.c.bf16 %v2320, %v2319
    %v2355 = vunpack.c.l.b16 %v2322
    %v2356 = vunpack.c.l.b16 %v2323
    %v2357 = vunpack.c.l.b16 %v2324
    %v2358 = vunpack.c.l.b16 %v2325
    %v2359 = vunpack.c.l.b16 %v2326
    %v2360 = vunpack.c.l.b16 %v2327
    %v2361 = vunpack.c.l.b16 %v2328
    %v2362 = vunpack.c.l.b16 %v2329
    %v2363 = vunpack.c.l.b16 %v2330
    %v2364 = vunpack.c.l.b16 %v2331
    %v2365 = vunpack.c.l.b16 %v2332
    %v2366 = vunpack.c.l.b16 %v2333
    %v2367 = vunpack.c.l.b16 %v2334
    %v2368 = vunpack.c.l.b16 %v2335
    %v2369 = vunpack.c.l.b16 %v2336
    %v2370 = vunpack.c.l.b16 %v2337
    %v2371 = vpack.c.b16 %v2356, %v2355
    %v2372 = vpack.c.b16 %v2358, %v2357
    %v2373 = vpack.c.b16 %v2360, %v2359
    %v2374 = vpack.c.b16 %v2362, %v2361
    %v2375 = vpack.c.b16 %v2364, %v2363
    %v2376 = vpack.c.b16 %v2366, %v2365
    %v2377 = vpack.c.b16 %v2368, %v2367
    %v2378 = vpack.c.b16 %v2370, %v2369
    %2387 = vmatprep.subr.bf16.mxu0 0
    %2388 = vmatpush1.bf16.msra.mxu0 %v2371
    %2389 = vmatprep.subr.bf16.mxu0 0
    %2390 = vmatpush1.bf16.msra.mxu0 %v2372
    %2391 = vmatprep.subr.bf16.mxu0 0
    %2392 = vmatpush1.bf16.msra.mxu0 %v2373
    %2393 = vmatprep.subr.bf16.mxu0 0
    %2394 = vmatpush1.bf16.msra.mxu0 %v2374
    %2395 = vmatprep.subr.bf16.mxu0 0
    %2396 = vmatpush1.bf16.msra.mxu0 %v2375
    %2397 = vmatprep.subr.bf16.mxu0 0
    %2398 = vmatpush1.bf16.msra.mxu0 %v2376
    %2399 = vmatprep.subr.bf16.mxu0 0
    %2400 = vmatpush1.bf16.msra.mxu0 %v2377
    %2401 = vmatprep.subr.bf16.mxu0 0
    %2402 = vmatpush1.bf16.msra.mxu0 %v2378
    %2403 = vmatprep.subr.bf16.mxu0 0
    %2404 = vmatpush1.bf16.msra.mxu0 0
    %2405 = vmatprep.subr.bf16.mxu0 0
    %2406 = vmatpush1.bf16.msra.mxu0 0
    %2407 = vmatprep.subr.bf16.mxu0 0
    %2408 = vmatpush1.bf16.msra.mxu0 0
    %2409 = vmatprep.subr.bf16.mxu0 0
    %2410 = vmatpush1.bf16.msra.mxu0 0
    %2411 = vmatprep.subr.bf16.mxu0 0
    %2412 = vmatpush1.bf16.msra.mxu0 0
    %2413 = vmatprep.subr.bf16.mxu0 0
    %2414 = vmatpush1.bf16.msra.mxu0 0
    %2415 = vmatprep.subr.bf16.mxu0 0
    %2416 = vmatpush1.bf16.msra.mxu0 0
    %2417 = vmatprep.subr.bf16.mxu0 0
    %2418 = vmatpush1.bf16.msra.mxu0 0
    %2419 = vmatprep.mubr.bf16.mxu0 0
    %2420 = vmatmul.mubr.bf16.gmra.mrb[0].mxu0 %v2338
    %v2421 = vpop.f32.mrb[0].mxu0
    %v2422 = vadd.f32 0.0, %v2421
    %v2423 = vpop.f32.mrb[0].mxu0
    %v2424 = vpop.f32.mrb[0].mxu0
    %v2425 = vadd.f32 0.0, %v2424
    %v2426 = vpop.f32.mrb[0].mxu0
    %2427 = vdwg.mxu0
    %v2428 = vadd.f32 %v1612, %v2422
    %v2429 = vadd.f32 %v1613, %v2425
    %s2430 = scalar_lea.vmem %s7, 1
    %v2431 = vld [vmem:[%s2430] sm:$0x1]
    %v2432 = vmul.f32 %v2428, %v2428
    %v2433 = vmul.f32 %v2429, %v2429
    %2434 = vadd.xlane.f32.xlu0 %v2432
    %v2435 = vpop.xlane.xlu0 %2434
    %2436 = vadd.xlane.f32.xlu0 %v2433
    %v2437 = vpop.xlane.xlu0 %2436
    %v2438 = vmul.f32 %v2435, %v437
    %v2439 = vmul.f32 %v2437, %v437
    %v2440 = vadd.f32 %v2438, 1e-06
    %v2441 = vadd.f32 %v2439, 1e-06
    %v2442 = vrsqrt.pop %v2440
    %v2443 = vrsqrt.pop %v2441
    %v2444 = vmul.f32 %v2428, %v2442
    %v2445 = vmul.f32 %v2429, %v2443
    %v2447 = vlaneseq
    %v2448 = vshrl.u32 %v2447, 7
    %v2449 = vsub.s32 0, %v2448
    %v2450 = vrot.slane %v2431, %v2449
    %v2452 = vmul.f32 %v2444, %v2450
    %v2453 = vmul.f32 %v2445, %v2450
    %s2454 = scalar_lea.vmem [#allocation12], 128
    %v2455 = vld [vmem:[%s2454] sm:$0xff]
    %v2456 = vld [vmem:[%s2454 + $0x8] sm:$0xff]
    %v2457 = vld [vmem:[%s2454 + $0x10] sm:$0xff]
    %v2458 = vld [vmem:[%s2454 + $0x18] sm:$0xff]
    %v2459 = vld [vmem:[%s2454 + $0x20] sm:$0xff]
    %v2460 = vld [vmem:[%s2454 + $0x28] sm:$0xff]
    %v2461 = vld [vmem:[%s2454 + $0x30] sm:$0xff]
    %v2462 = vld [vmem:[%s2454 + $0x38] sm:$0xff]
    %v2463 = vld [vmem:[%s2454 + $0x40] sm:$0xff]
    %v2464 = vld [vmem:[%s2454 + $0x48] sm:$0xff]
    %v2465 = vld [vmem:[%s2454 + $0x50] sm:$0xff]
    %v2466 = vld [vmem:[%s2454 + $0x58] sm:$0xff]
    %v2467 = vld [vmem:[%s2454 + $0x60] sm:$0xff]
    %v2468 = vld [vmem:[%s2454 + $0x68] sm:$0xff]
    %v2469 = vld [vmem:[%s2454 + $0x70] sm:$0xff]
    %v2470 = vld [vmem:[%s2454 + $0x78] sm:$0xff]
    %v2471 = vpack.c.bf16 %v2453, %v2452
    %v2488 = vunpack.c.l.b16 %v2455
    %v2489 = vunpack.c.h.b16 %v2455
    %v2490 = vunpack.c.l.b16 %v2456
    %v2491 = vunpack.c.h.b16 %v2456
    %v2492 = vunpack.c.l.b16 %v2457
    %v2493 = vunpack.c.h.b16 %v2457
    %v2494 = vunpack.c.l.b16 %v2458
    %v2495 = vunpack.c.h.b16 %v2458
    %v2496 = vunpack.c.l.b16 %v2459
    %v2497 = vunpack.c.h.b16 %v2459
    %v2498 = vunpack.c.l.b16 %v2460
    %v2499 = vunpack.c.h.b16 %v2460
    %v2500 = vunpack.c.l.b16 %v2461
    %v2501 = vunpack.c.h.b16 %v2461
    %v2502 = vunpack.c.l.b16 %v2462
    %v2503 = vunpack.c.h.b16 %v2462
    %v2504 = vunpack.c.l.b16 %v2463
    %v2505 = vunpack.c.h.b16 %v2463
    %v2506 = vunpack.c.l.b16 %v2464
    %v2507 = vunpack.c.h.b16 %v2464
    %v2508 = vunpack.c.l.b16 %v2465
    %v2509 = vunpack.c.h.b16 %v2465
    %v2510 = vunpack.c.l.b16 %v2466
    %v2511 = vunpack.c.h.b16 %v2466
    %v2512 = vunpack.c.l.b16 %v2467
    %v2513 = vunpack.c.h.b16 %v2467
    %v2514 = vunpack.c.l.b16 %v2468
    %v2515 = vunpack.c.h.b16 %v2468
    %v2516 = vunpack.c.l.b16 %v2469
    %v2517 = vunpack.c.h.b16 %v2469
    %v2518 = vunpack.c.l.b16 %v2470
    %v2519 = vunpack.c.h.b16 %v2470
    %v2520 = vpack.c.b16 %v2490, %v2488
    %v2521 = vpack.c.b16 %v2491, %v2489
    %v2522 = vpack.c.b16 %v2494, %v2492
    %v2523 = vpack.c.b16 %v2495, %v2493
    %v2524 = vpack.c.b16 %v2498, %v2496
    %v2525 = vpack.c.b16 %v2499, %v2497
    %v2526 = vpack.c.b16 %v2502, %v2500
    %v2527 = vpack.c.b16 %v2503, %v2501
    %v2528 = vpack.c.b16 %v2506, %v2504
    %v2529 = vpack.c.b16 %v2507, %v2505
    %v2530 = vpack.c.b16 %v2510, %v2508
    %v2531 = vpack.c.b16 %v2511, %v2509
    %v2532 = vpack.c.b16 %v2514, %v2512
    %v2533 = vpack.c.b16 %v2515, %v2513
    %v2534 = vpack.c.b16 %v2518, %v2516
    %v2535 = vpack.c.b16 %v2519, %v2517
    %2552 = vmatprep.subr.bf16.mxu0 %v2521
    %2553 = vmatpush1.bf16.msra.mxu0 %v2520
    %2554 = vmatprep.subr.bf16.mxu0 %v2523
    %2555 = vmatpush1.bf16.msra.mxu0 %v2522
    %2556 = vmatprep.subr.bf16.mxu0 %v2525
    %2557 = vmatpush1.bf16.msra.mxu0 %v2524
    %2558 = vmatprep.subr.bf16.mxu0 %v2527
    %2559 = vmatpush1.bf16.msra.mxu0 %v2526
    %2560 = vmatprep.subr.bf16.mxu0 %v2529
    %2561 = vmatpush1.bf16.msra.mxu0 %v2528
    %2562 = vmatprep.subr.bf16.mxu0 %v2531
    %2563 = vmatpush1.bf16.msra.mxu0 %v2530
    %2564 = vmatprep.subr.bf16.mxu0 %v2533
    %2565 = vmatpush1.bf16.msra.mxu0 %v2532
    %2566 = vmatprep.subr.bf16.mxu0 %v2535
    %2567 = vmatpush1.bf16.msra.mxu0 %v2534
    %2568 = vmatprep.subr.bf16.mxu0 0
    %2569 = vmatpush1.bf16.msra.mxu0 0
    %2570 = vmatprep.subr.bf16.mxu0 0
    %2571 = vmatpush1.bf16.msra.mxu0 0
    %2572 = vmatprep.subr.bf16.mxu0 0
    %2573 = vmatpush1.bf16.msra.mxu0 0
    %2574 = vmatprep.subr.bf16.mxu0 0
    %2575 = vmatpush1.bf16.msra.mxu0 0
    %2576 = vmatprep.subr.bf16.mxu0 0
    %2577 = vmatpush1.bf16.msra.mxu0 0
    %2578 = vmatprep.subr.bf16.mxu0 0
    %2579 = vmatpush1.bf16.msra.mxu0 0
    %2580 = vmatprep.subr.bf16.mxu0 0
    %2581 = vmatpush1.bf16.msra.mxu0 0
    %2582 = vmatprep.subr.bf16.mxu0 0
    %2583 = vmatpush1.bf16.msra.mxu0 0
    %2584 = vmatprep.mubr.bf16.mxu0 0
    %2585 = vmatmul.mubr.bf16.gmra.mrb[0].mxu0 %v2471
    %v2586 = vpop.f32.mrb[0].mxu0
    %v2587 = vadd.f32 0.0, %v2586
    %v2588 = vpop.f32.mrb[0].mxu0
    %v2589 = vadd.f32 0.0, %v2588
    %v2590 = vpop.f32.mrb[0].mxu0
    %v2591 = vadd.f32 0.0, %v2590
    %v2592 = vpop.f32.mrb[0].mxu0
    %v2593 = vadd.f32 0.0, %v2592
    %2594 = vdwg.mxu0
    %v2595 = vxor.u32 %v2587, 2147483648
    %v2596 = vxor.u32 %v2589, 2147483648
    %v2597 = vxor.u32 %v2591, 2147483648
    %v2598 = vxor.u32 %v2593, 2147483648
    %v2599 = vmul.f32 %v2595, 1.442695
    %v2600 = vpow.pop %v2599
    %v2601 = vmul.f32 %v2596, 1.442695
    %v2602 = vpow.pop %v2601
    %v2603 = vmul.f32 %v2597, 1.442695
    %v2604 = vpow.pop %v2603
    %v2605 = vmul.f32 %v2598, 1.442695
    %v2606 = vpow.pop %v2605
    %v2607 = vadd.f32 %v2600, 1.0
    %v2608 = vadd.f32 %v2602, 1.0
    %v2609 = vadd.f32 %v2604, 1.0
    %v2610 = vadd.f32 %v2606, 1.0
    %v2611 = vrcp.pop %v2607
    %v2612 = vmul.f32 1.0, %v2611
    %v2613 = vrcp.pop %v2608
    %v2614 = vmul.f32 1.0, %v2613
    %v2615 = vrcp.pop %v2609
    %v2616 = vmul.f32 1.0, %v2615
    %v2617 = vrcp.pop %v2610
    %v2618 = vmul.f32 1.0, %v2617
    %v2619 = vmul.f32 %v2587, %v2612
    %v2620 = vmul.f32 %v2589, %v2614
    %v2621 = vmul.f32 %v2591, %v2616
    %v2622 = vmul.f32 %v2593, %v2618
    %s2623 = scalar_lea.vmem [#allocation14], 128
    %v2624 = vld [vmem:[%s2623] sm:$0xf]
    %v2625 = vld [vmem:[%s2623 + $0x4] sm:$0xf]
    %v2626 = vld [vmem:[%s2623 + $0x8] sm:$0xf]
    %v2627 = vld [vmem:[%s2623 + $0xc] sm:$0xf]
    %v2628 = vld [vmem:[%s2623 + $0x10] sm:$0xf]
    %v2629 = vld [vmem:[%s2623 + $0x14] sm:$0xf]
    %v2630 = vld [vmem:[%s2623 + $0x18] sm:$0xf]
    %v2631 = vld [vmem:[%s2623 + $0x1c] sm:$0xf]
    %v2632 = vld [vmem:[%s2623 + $0x20] sm:$0xf]
    %v2633 = vld [vmem:[%s2623 + $0x24] sm:$0xf]
    %v2634 = vld [vmem:[%s2623 + $0x28] sm:$0xf]
    %v2635 = vld [vmem:[%s2623 + $0x2c] sm:$0xf]
    %v2636 = vld [vmem:[%s2623 + $0x30] sm:$0xf]
    %v2637 = vld [vmem:[%s2623 + $0x34] sm:$0xf]
    %v2638 = vld [vmem:[%s2623 + $0x38] sm:$0xf]
    %v2639 = vld [vmem:[%s2623 + $0x3c] sm:$0xf]
    %v2640 = vld [vmem:[%s2623 + $0x40] sm:$0xf]
    %v2641 = vld [vmem:[%s2623 + $0x44] sm:$0xf]
    %v2642 = vld [vmem:[%s2623 + $0x48] sm:$0xf]
    %v2643 = vld [vmem:[%s2623 + $0x4c] sm:$0xf]
    %v2644 = vld [vmem:[%s2623 + $0x50] sm:$0xf]
    %v2645 = vld [vmem:[%s2623 + $0x54] sm:$0xf]
    %v2646 = vld [vmem:[%s2623 + $0x58] sm:$0xf]
    %v2647 = vld [vmem:[%s2623 + $0x5c] sm:$0xf]
    %v2648 = vld [vmem:[%s2623 + $0x60] sm:$0xf]
    %v2649 = vld [vmem:[%s2623 + $0x64] sm:$0xf]
    %v2650 = vld [vmem:[%s2623 + $0x68] sm:$0xf]
    %v2651 = vld [vmem:[%s2623 + $0x6c] sm:$0xf]
    %v2652 = vld [vmem:[%s2623 + $0x70] sm:$0xf]
    %v2653 = vld [vmem:[%s2623 + $0x74] sm:$0xf]
    %v2654 = vld [vmem:[%s2623 + $0x78] sm:$0xf]
    %v2655 = vld [vmem:[%s2623 + $0x7c] sm:$0xf]
    %v2656 = vpack.c.bf16 %v2621, %v2619
    %v2657 = vpack.c.bf16 %v2622, %v2620
    %v2690 = vunpack.c.l.b16 %v2624
    %v2691 = vunpack.c.l.b16 %v2625
    %v2692 = vunpack.c.l.b16 %v2626
    %v2693 = vunpack.c.l.b16 %v2627
    %v2694 = vunpack.c.l.b16 %v2628
    %v2695 = vunpack.c.l.b16 %v2629
    %v2696 = vunpack.c.l.b16 %v2630
    %v2697 = vunpack.c.l.b16 %v2631
    %v2698 = vunpack.c.l.b16 %v2632
    %v2699 = vunpack.c.l.b16 %v2633
    %v2700 = vunpack.c.l.b16 %v2634
    %v2701 = vunpack.c.l.b16 %v2635
    %v2702 = vunpack.c.l.b16 %v2636
    %v2703 = vunpack.c.l.b16 %v2637
    %v2704 = vunpack.c.l.b16 %v2638
    %v2705 = vunpack.c.l.b16 %v2639
    %v2706 = vunpack.c.l.b16 %v2640
    %v2707 = vunpack.c.l.b16 %v2641
    %v2708 = vunpack.c.l.b16 %v2642
    %v2709 = vunpack.c.l.b16 %v2643
    %v2710 = vunpack.c.l.b16 %v2644
    %v2711 = vunpack.c.l.b16 %v2645
    %v2712 = vunpack.c.l.b16 %v2646
    %v2713 = vunpack.c.l.b16 %v2647
    %v2714 = vunpack.c.l.b16 %v2648
    %v2715 = vunpack.c.l.b16 %v2649
    %v2716 = vunpack.c.l.b16 %v2650
    %v2717 = vunpack.c.l.b16 %v2651
    %v2718 = vunpack.c.l.b16 %v2652
    %v2719 = vunpack.c.l.b16 %v2653
    %v2720 = vunpack.c.l.b16 %v2654
    %v2721 = vunpack.c.l.b16 %v2655
    %v2722 = vpack.c.b16 %v2691, %v2690
    %v2723 = vpack.c.b16 %v2693, %v2692
    %v2724 = vpack.c.b16 %v2695, %v2694
    %v2725 = vpack.c.b16 %v2697, %v2696
    %v2726 = vpack.c.b16 %v2699, %v2698
    %v2727 = vpack.c.b16 %v2701, %v2700
    %v2728 = vpack.c.b16 %v2703, %v2702
    %v2729 = vpack.c.b16 %v2705, %v2704
    %v2730 = vpack.c.b16 %v2707, %v2706
    %v2731 = vpack.c.b16 %v2709, %v2708
    %v2732 = vpack.c.b16 %v2711, %v2710
    %v2733 = vpack.c.b16 %v2713, %v2712
    %v2734 = vpack.c.b16 %v2715, %v2714
    %v2735 = vpack.c.b16 %v2717, %v2716
    %v2736 = vpack.c.b16 %v2719, %v2718
    %v2737 = vpack.c.b16 %v2721, %v2720
    %2754 = vmatprep.subr.bf16.mxu0 0
    %2755 = vmatpush1.bf16.msra.mxu0 %v2722
    %2756 = vmatprep.subr.bf16.mxu0 0
    %2757 = vmatpush1.bf16.msra.mxu0 %v2723
    %2758 = vmatprep.subr.bf16.mxu0 0
    %2759 = vmatpush1.bf16.msra.mxu0 %v2724
    %2760 = vmatprep.subr.bf16.mxu0 0
    %2761 = vmatpush1.bf16.msra.mxu0 %v2725
    %2762 = vmatprep.subr.bf16.mxu0 0
    %2763 = vmatpush1.bf16.msra.mxu0 %v2726
    %2764 = vmatprep.subr.bf16.mxu0 0
    %2765 = vmatpush1.bf16.msra.mxu0 %v2727
    %2766 = vmatprep.subr.bf16.mxu0 0
    %2767 = vmatpush1.bf16.msra.mxu0 %v2728
    %2768 = vmatprep.subr.bf16.mxu0 0
    %2769 = vmatpush1.bf16.msra.mxu0 %v2729
    %2770 = vmatprep.subr.bf16.mxu0 0
    %2771 = vmatpush1.bf16.msra.mxu0 %v2730
    %2772 = vmatprep.subr.bf16.mxu0 0
    %2773 = vmatpush1.bf16.msra.mxu0 %v2731
    %2774 = vmatprep.subr.bf16.mxu0 0
    %2775 = vmatpush1.bf16.msra.mxu0 %v2732
    %2776 = vmatprep.subr.bf16.mxu0 0
    %2777 = vmatpush1.bf16.msra.mxu0 %v2733
    %2778 = vmatprep.subr.bf16.mxu0 0
    %2779 = vmatpush1.bf16.msra.mxu0 %v2734
    %2780 = vmatprep.subr.bf16.mxu0 0
    %2781 = vmatpush1.bf16.msra.mxu0 %v2735
    %2782 = vmatprep.subr.bf16.mxu0 0
    %2783 = vmatpush1.bf16.msra.mxu0 %v2736
    %2784 = vmatprep.subr.bf16.mxu0 0
    %2785 = vmatpush1.bf16.msra.mxu0 %v2737
    %2786 = vmatprep.mubr.bf16.mxu0 %v2657
    %2787 = vmatmul.mubr.bf16.gmra.mrb[0].mxu0 %v2656
    %v2788 = vpop.f32.mrb[0].mxu0
    %v2789 = vadd.f32 0.0, %v2788
    %v2790 = vpop.f32.mrb[0].mxu0
    %v2791 = vpop.f32.mrb[0].mxu0
    %v2792 = vadd.f32 0.0, %v2791
    %v2793 = vpop.f32.mrb[0].mxu0
    %2794 = vdwg.mxu0
    %v2795 = vadd.f32 %v2428, %v2789
    %v2796 = vadd.f32 %v2429, %v2792
    %v2797 = vld [vmem:[%s3] sm:$0x1]
    %v2798 = vmul.f32 %v2795, %v2795
    %v2799 = vmul.f32 %v2796, %v2796
    %2800 = vadd.xlane.f32.xlu0 %v2798
    %v2801 = vpop.xlane.xlu0 %2800
    %2802 = vadd.xlane.f32.xlu0 %v2799
    %v2803 = vpop.xlane.xlu0 %2802
    %v2804 = vmul.f32 %v2801, %v437
    %v2805 = vmul.f32 %v2803, %v437
    %v2806 = vadd.f32 %v2804, 1e-06
    %v2807 = vadd.f32 %v2805, 1e-06
    %v2808 = vrsqrt.pop %v2806
    %v2809 = vrsqrt.pop %v2807
    %v2810 = vmul.f32 %v2795, %v2808
    %v2811 = vmul.f32 %v2796, %v2809
    %v2813 = vlaneseq
    %v2814 = vshrl.u32 %v2813, 7
    %v2815 = vsub.s32 0, %v2814
    %v2816 = vrot.slane %v2797, %v2815
    %v2818 = vmul.f32 %v2810, %v2816
    %v2819 = vmul.f32 %v2811, %v2816
    %v2820 = vld [vmem:[#allocation8] sm:$0xff]
    %v2821 = vld [vmem:[#allocation8 + $0x8] sm:$0xff]
    %v2822 = vld [vmem:[#allocation8 + $0x10] sm:$0xff]
    %v2823 = vld [vmem:[#allocation8 + $0x18] sm:$0xff]
    %v2824 = vld [vmem:[#allocation8 + $0x20] sm:$0xff]
    %v2825 = vld [vmem:[#allocation8 + $0x28] sm:$0xff]
    %v2826 = vld [vmem:[#allocation8 + $0x30] sm:$0xff]
    %v2827 = vld [vmem:[#allocation8 + $0x38] sm:$0xff]
    %v2828 = vld [vmem:[#allocation8 + $0x40] sm:$0xff]
    %v2829 = vld [vmem:[#allocation8 + $0x48] sm:$0xff]
    %v2830 = vld [vmem:[#allocation8 + $0x50] sm:$0xff]
    %v2831 = vld [vmem:[#allocation8 + $0x58] sm:$0xff]
    %v2832 = vld [vmem:[#allocation8 + $0x60] sm:$0xff]
    %v2833 = vld [vmem:[#allocation8 + $0x68] sm:$0xff]
    %v2834 = vld [vmem:[#allocation8 + $0x70] sm:$0xff]
    %v2835 = vld [vmem:[#allocation8 + $0x78] sm:$0xff]
    %v2836 = vpack.c.bf16 %v2819, %v2818
    %v2853 = vunpack.c.l.b16 %v2820
    %v2854 = vunpack.c.h.b16 %v2820
    %v2855 = vunpack.c.l.b16 %v2821
    %v2856 = vunpack.c.h.b16 %v2821
    %v2857 = vunpack.c.l.b16 %v2822
    %v2858 = vunpack.c.h.b16 %v2822
    %v2859 = vunpack.c.l.b16 %v2823
    %v2860 = vunpack.c.h.b16 %v2823
    %v2861 = vunpack.c.l.b16 %v2824
    %v2862 = vunpack.c.h.b16 %v2824
    %v2863 = vunpack.c.l.b16 %v2825
    %v2864 = vunpack.c.h.b16 %v2825
    %v2865 = vunpack.c.l.b16 %v2826
    %v2866 = vunpack.c.h.b16 %v2826
    %v2867 = vunpack.c.l.b16 %v2827
    %v2868 = vunpack.c.h.b16 %v2827
    %v2869 = vunpack.c.l.b16 %v2828
    %v2870 = vunpack.c.h.b16 %v2828
    %v2871 = vunpack.c.l.b16 %v2829
    %v2872 = vunpack.c.h.b16 %v2829
    %v2873 = vunpack.c.l.b16 %v2830
    %v2874 = vunpack.c.h.b16 %v2830
    %v2875 = vunpack.c.l.b16 %v2831
    %v2876 = vunpack.c.h.b16 %v2831
    %v2877 = vunpack.c.l.b16 %v2832
    %v2878 = vunpack.c.h.b16 %v2832
    %v2879 = vunpack.c.l.b16 %v2833
    %v2880 = vunpack.c.h.b16 %v2833
    %v2881 = vunpack.c.l.b16 %v2834
    %v2882 = vunpack.c.h.b16 %v2834
    %v2883 = vunpack.c.l.b16 %v2835
    %v2884 = vunpack.c.h.b16 %v2835
    %v2885 = vpack.c.b16 %v2855, %v2853
    %v2886 = vpack.c.b16 %v2856, %v2854
    %v2887 = vpack.c.b16 %v2859, %v2857
    %v2888 = vpack.c.b16 %v2860, %v2858
    %v2889 = vpack.c.b16 %v2863, %v2861
    %v2890 = vpack.c.b16 %v2864, %v2862
    %v2891 = vpack.c.b16 %v2867, %v2865
    %v2892 = vpack.c.b16 %v2868, %v2866
    %v2893 = vpack.c.b16 %v2871, %v2869
    %v2894 = vpack.c.b16 %v2872, %v2870
    %v2895 = vpack.c.b16 %v2875, %v2873
    %v2896 = vpack.c.b16 %v2876, %v2874
    %v2897 = vpack.c.b16 %v2879, %v2877
    %v2898 = vpack.c.b16 %v2880, %v2878
    %v2899 = vpack.c.b16 %v2883, %v2881
    %v2900 = vpack.c.b16 %v2884, %v2882
    %2917 = vmatprep.subr.bf16.mxu0 %v2886
    %2918 = vmatpush1.bf16.msra.mxu0 %v2885
    %2919 = vmatprep.subr.bf16.mxu0 %v2888
    %2920 = vmatpush1.bf16.msra.mxu0 %v2887
    %2921 = vmatprep.subr.bf16.mxu0 %v2890
    %2922 = vmatpush1.bf16.msra.mxu0 %v2889
    %2923 = vmatprep.subr.bf16.mxu0 %v2892
    %2924 = vmatpush1.bf16.msra.mxu0 %v2891
    %2925 = vmatprep.subr.bf16.mxu0 %v2894
    %2926 = vmatpush1.bf16.msra.mxu0 %v2893
    %2927 = vmatprep.subr.bf16.mxu0 %v2896
    %2928 = vmatpush1.bf16.msra.mxu0 %v2895
    %2929 = vmatprep.subr.bf16.mxu0 %v2898
    %2930 = vmatpush1.bf16.msra.mxu0 %v2897
    %2931 = vmatprep.subr.bf16.mxu0 %v2900
    %2932 = vmatpush1.bf16.msra.mxu0 %v2899
    %2933 = vmatprep.subr.bf16.mxu0 0
    %2934 = vmatpush1.bf16.msra.mxu0 0
    %2935 = vmatprep.subr.bf16.mxu0 0
    %2936 = vmatpush1.bf16.msra.mxu0 0
    %2937 = vmatprep.subr.bf16.mxu0 0
    %2938 = vmatpush1.bf16.msra.mxu0 0
    %2939 = vmatprep.subr.bf16.mxu0 0
    %2940 = vmatpush1.bf16.msra.mxu0 0
    %2941 = vmatprep.subr.bf16.mxu0 0
    %2942 = vmatpush1.bf16.msra.mxu0 0
    %2943 = vmatprep.subr.bf16.mxu0 0
    %2944 = vmatpush1.bf16.msra.mxu0 0
    %2945 = vmatprep.subr.bf16.mxu0 0
    %2946 = vmatpush1.bf16.msra.mxu0 0
    %2947 = vmatprep.subr.bf16.mxu0 0
    %2948 = vmatpush1.bf16.msra.mxu0 0
    %2949 = vmatprep.mubr.bf16.mxu0 0
    %2950 = vmatmul.mubr.bf16.gmra.mrb[0].mxu0 %v2836
    %v2951 = vpop.f32.mrb[0].mxu0
    %v2952 = vadd.f32 0.0, %v2951
    %v2953 = vpop.f32.mrb[0].mxu0
    %v2954 = vadd.f32 0.0, %v2953
    %v2955 = vpop.f32.mrb[0].mxu0
    %v2956 = vadd.f32 0.0, %v2955
    %v2957 = vpop.f32.mrb[0].mxu0
    %v2958 = vadd.f32 0.0, %v2957
    %2959 = vdwg.mxu0
    %2960 = vst [vmem:[#allocation15] sm:$0xff] %v2952
    %2961 = vst [vmem:[#allocation15 + $0x8] sm:$0xff] %v2954
    %2962 = vst [vmem:[#allocation15 + $0x10] sm:$0xff] %v2956
    %2963 = vst [vmem:[#allocation15 + $0x18] sm:$0xff] %v2958
    // Predicated region
    $region70: #{transformer_forward.1} parent=1 // pred_check
      _
    $region71: #{transformer_forward.1} parent=1 // pred_check_branch
      %2965 = sbr.rel (0) target = $region73
    $region72: #{transformer_forward.1} parent=1 // pred_region
      %s2967 = ssub.s32 512, 512
      %2968 = vsyncadd [#allocation5], %s2967
      %s2969 = sshll.u32 [#allocation15], 4
      %s2970 = int_to_ptr.vmem [resolvable:$true] %s2969
      %2975 = dma.vmem_to_hbm [thread:$0]  %s2970, 512, %s10, [#allocation5], 256, 256, 16
    $region73: #{transformer_forward.1} parent=1 // pred_fallthru
      _
    // Predicated region
    $region74: #{transformer_forward.1} parent=1 // pred_check
      _
    $region75: #{transformer_forward.1} parent=1 // pred_check_branch
      %2977 = sbr.rel (0) target = $region77
    $region76: #{transformer_forward.1} parent=1 // pred_region
      %2978 = dma.done [#allocation5], 512
    $region77: #{transformer_forward.1} parent=1 // pred_fallthru
      _
    %2979 = vsyncpa [#allocation4], 1
    %2980 = vsyncpa [#allocation7], 1
    %2981 = vsyncpa [#allocation10], 1
    %2982 = vsyncpa [#allocation13], 1
    %2983 = vsyncpa [#allocation5], 1

</llo_original>
